<compile_context>
chip_gen: v6e
topology: v6e:2x2x1
jax: 0.10.0
libtpu: 0.0.40
codegen_flags: <defaults>
</compile_context>

<pallas_src>
import jax
import jax.numpy as jnp
from jax import lax
from jax.experimental import pallas as pl
from jax.experimental.pallas import tpu as pltpu

# ----- hyperparameters consistent with the module -----
B = 2            # batch
T = 8            # sequence length
WORD_DIM = 32
HIDDEN = 32
NUM_LAYERS = 1
VOCAB = 64
D = NUM_LAYERS * 2 * HIDDEN      # flattened encoder hidden size (64)
MARGIN = 0.5                     # loss_margin
GBLK = 128                       # per-direction gate block (4H LSTM exact, 3H GRU padded)
OUT_ROWS, OUT_LANES = 8, 128

assert NUM_LAYERS == 1
assert 4 * HIDDEN == GBLK and 3 * HIDDEN <= GBLK


def _vmem():
    return pl.BlockSpec(memory_space=pltpu.MemorySpace.VMEM)


# ----------------------------------------------------------------------------
# The fused forward kernel
# ----------------------------------------------------------------------------
def _vae_fwd_kernel(
    # sequences (time-major, flattened to [T*batch, feat])
    tweet_x_ref,   # [T*B, I]        bf16
    grp_x_ref,     # [T*2B, I]       bf16  (rows t*2B+b; b<B pos, b>=B neg)
    dec_x_ref,     # [(T-1)*B, I]    bf16  (teacher-forced inputs tweet[:, :-1])
    tgt_oh_ref,    # [(T-1)*B, V]    f32   masked one-hot targets (ignore_index=0)
    # tweet encoder LSTM (dense gates, directions fused along lanes)
    twih_ref,      # [I, 2*GBLK]     bf16
    twhh_ref,      # [2H, 2*GBLK]    bf16  block-diagonal
    tb_ref,        # [1, 2*GBLK]     f32   (bih + bhh)
    # group encoder LSTM
    gwih_ref, gwhh_ref, gb_ref,
    # fused mean|logv linears
    w_tmv_ref,     # [D, 2D] bf16
    b_tmv_ref,     # [1, 2D] f32
    w_gmv_ref, b_gmv_ref,
    # reparameterization noise
    noise_z_ref,   # [B, D]  f32
    noise_uv_ref,  # [2B, D] f32
    # z2hidden
    wz_ref,        # [D, D]  bf16
    bz_ref,        # [1, D]  f32
    # decoder GRU (dense gates, directions fused)
    dwih_ref,      # [I, 2*GBLK]  bf16
    dwhh_ref,      # [2H, 2*GBLK] bf16  block-diagonal
    dbih_ref,      # [1, 2*GBLK]  f32
    dbhh_ref,      # [1, 2*GBLK]  f32
    # decoder_out
    wo_ref,        # [2H, V] bf16
    bo_ref,        # [1, V]  f32
    # output
    out_ref,       # [8, 128] f32 : row 0..B-1: lane0=pos, lane1=neg, lane2=rank,
                   #                lane3=recover, lane4=kl (replicated scalars)
):
    f32 = jnp.float32
    bf16 = jnp.bfloat16
    H = HIDDEN

    # ---------------- bidirectional LSTM encoder (dense gate layout) ---------------
    def bilstm_final(x_ref, wih_ref, whh_ref, b_ref, batch):
        # Hoisted input projections (+ combined bias) for BOTH directions: one matmul.
        xp = (jnp.dot(x_ref[...], wih_ref[...], preferred_element_type=f32)
              + b_ref[...])                                   # [T*batch, 2*GBLK]
        whh = whh_ref[...]                                    # bf16, block-diagonal
        h = jnp.zeros((batch, 2 * H), f32)                    # [hf | hb]
        c_f = jnp.zeros((batch, H), f32)
        c_b = jnp.zeros((batch, H), f32)
        for t in range(T):
            # one fused matmul per step covers both directions
            gh = jnp.dot(h.astype(bf16), whh, preferred_element_type=f32)
            gf = gh[:, :GBLK] + xp[t * batch:(t + 1) * batch, :GBLK]
            gb = gh[:, GBLK:] + xp[(T - 1 - t) * batch:(T - t) * batch, GBLK:]
            # forward direction
            i_f = jax.nn.sigmoid(gf[:, 0 * H:1 * H])
            f_f = jax.nn.sigmoid(gf[:, 1 * H:2 * H])
            g_f = jnp.tanh(gf[:, 2 * H:3 * H])
            o_f = jax.nn.sigmoid(gf[:, 3 * H:4 * H])
            c_f = f_f * c_f + i_f * g_f
            h_f = o_f * jnp.tanh(c_f)
            # backward direction (reads reversed sequence)
            i_b = jax.nn.sigmoid(gb[:, 0 * H:1 * H])
            f_b = jax.nn.sigmoid(gb[:, 1 * H:2 * H])
            g_b = jnp.tanh(gb[:, 2 * H:3 * H])
            o_b = jax.nn.sigmoid(gb[:, 3 * H:4 * H])
            c_b = f_b * c_b + i_b * g_b
            h_b = o_b * jnp.tanh(c_b)
            h = jnp.concatenate([h_f, h_b], axis=-1)
        return h                                              # [batch, 2H] = [hf | hb]

    h_tweet = bilstm_final(tweet_x_ref, twih_ref, twhh_ref, tb_ref, B)
    h_group = bilstm_final(grp_x_ref, gwih_ref, gwhh_ref, gb_ref, 2 * B)

    # ---------------- VAE heads (mean | logv fused) ---------------------------------
    t_mv = (jnp.dot(h_tweet.astype(bf16), w_tmv_ref[...], preferred_element_type=f32)
            + b_tmv_ref[...])
    tweet_mean, tweet_logv = t_mv[:, :D], t_mv[:, D:]
    z = noise_z_ref[...] * jnp.exp(0.5 * tweet_logv) + tweet_mean          # [B, D]

    g_mv = (jnp.dot(h_group.astype(bf16), w_gmv_ref[...], preferred_element_type=f32)
            + b_gmv_ref[...])
    g_mean, g_logv = g_mv[:, :D], g_mv[:, D:]
    uv = noise_uv_ref[...] * jnp.exp(0.5 * g_logv) + g_mean                # [2B, D]
    u, v = uv[:B], uv[B:]
    pos_mean, pos_logv = g_mean[:B], g_logv[:B]

    # ---------------- cosine sims / ranking / KL ------------------------------------
    # torch CosineSimilarity: dot / (max(||a||,eps) * max(||b||,eps)), eps=1e-8
    def cos(a, b_):
        dd = jnp.sum(a * b_, axis=-1, keepdims=True)
        na2 = jnp.maximum(jnp.sum(a * a, axis=-1, keepdims=True), 1e-16)
        nb2 = jnp.maximum(jnp.sum(b_ * b_, axis=-1, keepdims=True), 1e-16)
        return dd * lax.rsqrt(na2 * nb2)

    pos_score = cos(z, u)                                                  # [B, 1]
    neg_score = cos(z, v)                                                  # [B, 1]
    ranking = jnp.mean(jnp.maximum(0.0, neg_score - pos_score + MARGIN))
    kl_term = (-1.0 + pos_logv - tweet_logv
               + (jnp.exp(tweet_logv) + (tweet_mean - pos_mean) ** 2)
               * jnp.exp(-pos_logv))
    kl = 0.5 * jnp.sum(kl_term) / float(B)

    # ---------------- decoder: bidirectional GRU, teacher forced --------------------
    h_cat = (jnp.dot(z.astype(bf16), wz_ref[...], preferred_element_type=f32)
             + bz_ref[...])                                    # [B, 2H] = [hf | hb]
    # hoisted input projections (+ bih), both directions read the same token
    xp_d = (jnp.dot(dec_x_ref[...], dwih_ref[...], preferred_element_type=f32)
            + dbih_ref[...])                                   # [(T-1)*B, 2*GBLK]
    dwhh = dwhh_ref[...]
    bhh = dbhh_ref[...]

    hs = []
    for s in range(T - 1):
        gh = jnp.dot(h_cat.astype(bf16), dwhh, preferred_element_type=f32) + bhh
        gi = xp_d[s * B:(s + 1) * B]                           # [B, 2*GBLK]
        gi_f, gh_f = gi[:, :GBLK], gh[:, :GBLK]
        gi_b, gh_b = gi[:, GBLK:], gh[:, GBLK:]

        r_f = jax.nn.sigmoid(gi_f[:, 0 * H:1 * H] + gh_f[:, 0 * H:1 * H])
        z_f = jax.nn.sigmoid(gi_f[:, 1 * H:2 * H] + gh_f[:, 1 * H:2 * H])
        n_f = jnp.tanh(gi_f[:, 2 * H:3 * H] + r_f * gh_f[:, 2 * H:3 * H])
        h_f = (1.0 - z_f) * n_f + z_f * h_cat[:, :H]

        r_b = jax.nn.sigmoid(gi_b[:, 0 * H:1 * H] + gh_b[:, 0 * H:1 * H])
        z_b = jax.nn.sigmoid(gi_b[:, 1 * H:2 * H] + gh_b[:, 1 * H:2 * H])
        n_b = jnp.tanh(gi_b[:, 2 * H:3 * H] + r_b * gh_b[:, 2 * H:3 * H])
        h_b = (1.0 - z_b) * n_b + z_b * h_cat[:, H:]

        h_cat = jnp.concatenate([h_f, h_b], axis=-1)
        hs.append(h_cat)

    # deferred decoder_out + log_softmax + NLL: one matmul, one reduce
    dec_h = jnp.concatenate(hs, axis=0)                        # [(T-1)*B, 2H]
    logits = (jnp.dot(dec_h.astype(bf16), wo_ref[...], preferred_element_type=f32)
              + bo_ref[...])                                   # [(T-1)*B, V]
    m = jnp.max(logits, axis=-1, keepdims=True)
    shd = logits - m
    logp = shd - jnp.log(jnp.sum(jnp.exp(shd), axis=-1, keepdims=True))
    oh = tgt_oh_ref[...]
    nll = jnp.sum(logp * oh)
    cnt = jnp.sum(oh)
    # TODO(synk): PyTorch NLLLoss returns NaN when every target is ignore_index; we clamp.
    recover = -nll / jnp.maximum(cnt, 1.0)

    # ---------------- single lane-dense output slab ---------------------------------
    def col(x):
        return jnp.broadcast_to(jnp.reshape(x, (1, 1)), (B, 1))

    row = jnp.concatenate(
        [pos_score, neg_score, col(ranking), col(recover), col(kl),
         jnp.zeros((B, OUT_LANES - 5), f32)], axis=-1)         # [B, 128]
    out_ref[...] = jnp.concatenate(
        [row, jnp.zeros((OUT_ROWS - B, OUT_LANES), f32)], axis=0)


# ----------------------------------------------------------------------------
# Weight packing: PyTorch [out, in] -> dense, direction-fused, bf16 MXU layouts
# ----------------------------------------------------------------------------
def _pack_bilstm(rp):
    wih_f, whh_f, bih_f, bhh_f = rp[(0, 0)]
    wih_b, whh_b, bih_b, bhh_b = rp[(0, 1)]
    wih = jnp.concatenate([wih_f.T, wih_b.T], axis=1)                    # [I, 2*GBLK]
    whh = jnp.zeros((2 * HIDDEN, 2 * GBLK), jnp.float32)                 # block-diagonal
    whh = whh.at[:HIDDEN, :GBLK].set(whh_f.T)
    whh = whh.at[HIDDEN:, GBLK:].set(whh_b.T)
    b = jnp.concatenate([bih_f + bhh_f, bih_b + bhh_b]).reshape(1, -1)   # [1, 2*GBLK]
    return wih.astype(jnp.bfloat16), whh.astype(jnp.bfloat16), b


def _pack_bigru(rp):
    wih_f, whh_f, bih_f, bhh_f = rp[(0, 0)]
    wih_b, whh_b, bih_b, bhh_b = rp[(0, 1)]
    g3 = 3 * HIDDEN

    def padc(w):                                       # pad gate cols 96 -> GBLK
        return jnp.pad(w, ((0, 0), (0, GBLK - g3)))

    wih = jnp.concatenate([padc(wih_f.T), padc(wih_b.T)], axis=1)        # [I, 2*GBLK]
    whh = jnp.zeros((2 * HIDDEN, 2 * GBLK), jnp.float32)
    whh = whh.at[:HIDDEN, :g3].set(whh_f.T)
    whh = whh.at[HIDDEN:, GBLK:GBLK + g3].set(whh_b.T)
    bih = jnp.concatenate([padc(bih_f.reshape(1, -1)), padc(bih_b.reshape(1, -1))], axis=1)
    bhh = jnp.concatenate([padc(bhh_f.reshape(1, -1)), padc(bhh_b.reshape(1, -1))], axis=1)
    return wih.astype(jnp.bfloat16), whh.astype(jnp.bfloat16), bih, bhh


def _pack_mv(mean_wb, logv_wb):
    wm, bm = mean_wb
    wv, bv = logv_wb
    w = jnp.concatenate([wm.T, wv.T], axis=1)                            # [D, 2D]
    b = jnp.concatenate([bm, bv]).reshape(1, -1)                         # [1, 2D]
    return w.astype(jnp.bfloat16), b


def pack_params(params):
    pk = {"embedding": params["embedding"]}
    pk["enc_tweet"] = _pack_bilstm(params["encoder_tweet"])
    pk["enc_group"] = _pack_bilstm(params["encoder_group"])
    pk["dec_gru"] = _pack_bigru(params["decoder_tweet"])
    pk["tweet_mv"] = _pack_mv(params["tweet_mean"], params["tweet_logv"])
    pk["group_mv"] = _pack_mv(params["group_mean"], params["group_logv"])
    wz, bz = params["z2hidden"]
    pk["z2hidden"] = (wz.T.astype(jnp.bfloat16), bz.reshape(1, -1))
    wo, bo = params["decoder_out"]
    pk["dec_out"] = (wo.T.astype(jnp.bfloat16), bo.reshape(1, -1))
    return pk


# ----------------------------------------------------------------------------
# Parameter init (deterministic, synthetic, PyTorch layouts)
# ----------------------------------------------------------------------------
def init_params(key):
    keys = jax.random.split(key, 128)
    ki = iter(keys)

    def nrm(shape, scale=0.1):
        return scale * jax.random.normal(next(ki), shape, jnp.float32)

    params = {}
    emb = nrm((VOCAB, WORD_DIM), 0.5)
    emb = emb.at[0].set(0.0)                      # padding_idx=0
    params["embedding"] = emb

    def rnn_params(gate_mult):
        p = {}
        for l in range(NUM_LAYERS):
            in_dim = WORD_DIM if l == 0 else 2 * HIDDEN
            for d in range(2):                    # 0 = forward, 1 = reverse
                p[(l, d)] = (nrm((gate_mult * HIDDEN, in_dim)),
                             nrm((gate_mult * HIDDEN, HIDDEN)),
                             nrm((gate_mult * HIDDEN,)),
                             nrm((gate_mult * HIDDEN,)))
        return p

    params["encoder_tweet"] = rnn_params(4)       # LSTM
    params["encoder_group"] = rnn_params(4)       # LSTM
    params["decoder_tweet"] = rnn_params(3)       # GRU
    for name in ["tweet_mean", "tweet_logv", "group_mean", "group_logv", "z2hidden"]:
        params[name] = (nrm((D, D)), nrm((D,)))
    params["decoder_out"] = (nrm((VOCAB, 2 * HIDDEN)), nrm((VOCAB,)))
    return params


# ----------------------------------------------------------------------------
# Forward pass: glue (embedding gather, one-hot build) + ONE pallas_call
# ----------------------------------------------------------------------------
def vae_forward(packed, tweet, pos_group, neg_group, noise_z, noise_u, noise_v):
    emb = packed["embedding"]
    tweet_emb = jnp.take(emb, tweet, axis=0)                       # [B, T, I]
    pos_emb = jnp.take(emb, pos_group, axis=0)
    neg_emb = jnp.take(emb, neg_group, axis=0)

    def to_tm_flat(e):                                             # [N, L, I] -> [L*N, I]
        n, l, _ = e.shape
        return jnp.transpose(e, (1, 0, 2)).reshape(l * n, WORD_DIM)

    tweet_x = to_tm_flat(tweet_emb).astype(jnp.bfloat16)                           # [T*B, I]
    grp_x = to_tm_flat(jnp.concatenate([pos_emb, neg_emb], 0)).astype(jnp.bfloat16)  # [T*2B, I]
    dec_x = to_tm_flat(tweet_emb[:, :T - 1, :]).astype(jnp.bfloat16)               # [(T-1)*B, I]

    targets = tweet[:, 1:]                                         # [B, T-1]
    onehot = jax.nn.one_hot(targets, VOCAB, dtype=jnp.float32)
    onehot = onehot * (targets != 0).astype(jnp.float32)[..., None]   # ignore_index=0
    tgt_oh = jnp.transpose(onehot, (1, 0, 2)).reshape((T - 1) * B, VOCAB)

    noise_uv = jnp.concatenate([noise_u, noise_v], axis=0)         # [2B, D]

    twih, twhh, tb = packed["enc_tweet"]
    gwih, gwhh, gb = packed["enc_group"]
    w_tmv, b_tmv = packed["tweet_mv"]
    w_gmv, b_gmv = packed["group_mv"]
    wz, bz = packed["z2hidden"]
    dwih, dwhh, dbih, dbhh = packed["dec_gru"]
    wo, bo = packed["dec_out"]

    out = pl.pallas_call(
        _vae_fwd_kernel,
        out_shape=jax.ShapeDtypeStruct((OUT_ROWS, OUT_LANES), jnp.float32),
        in_specs=[_vmem()] * 24,
        out_specs=_vmem(),
    )(tweet_x, grp_x, dec_x, tgt_oh,
      twih, twhh, tb,
      gwih, gwhh, gb,
      w_tmv, b_tmv, w_gmv, b_gmv,
      noise_z, noise_uv,
      wz, bz,
      dwih, dwhh, dbih, dbhh,
      wo, bo)

    pos_score = out[:B, 0]
    neg_score = out[:B, 1]
    rankingloss = out[0, 2]
    recoverloss = out[0, 3]
    klloss = out[0, 4]
    return pos_score, neg_score, rankingloss, recoverloss, klloss


# ----------------------------------------------------------------------------
if __name__ == "__main__":
    key = jax.random.PRNGKey(0)
    kp, kt, kpg, kng, kz, ku, kv = jax.random.split(key, 7)
    params = init_params(kp)
    packed = pack_params(params)

    # token ids in [1, VOCAB) so nothing hits padding / ignore_index
    tweet = jax.random.randint(kt, (B, T), 1, VOCAB, dtype=jnp.int32)
    pos_group = jax.random.randint(kpg, (B, T), 1, VOCAB, dtype=jnp.int32)
    neg_group = jax.random.randint(kng, (B, T), 1, VOCAB, dtype=jnp.int32)

    # deterministic stand-ins for torch.randn reparameterization noise
    noise_z = jax.random.normal(kz, (B, D), jnp.float32)
    noise_u = jax.random.normal(ku, (B, D), jnp.float32)
    noise_v = jax.random.normal(kv, (B, D), jnp.float32)

    fwd = jax.jit(vae_forward)
    outs = fwd(packed, tweet, pos_group, neg_group, noise_z, noise_u, noise_v)
    outs = jax.block_until_ready(outs)
    print("KERNEL_OK")
</pallas_src>

<mosaic_0001>
module attributes {stable_mosaic.version = 11 : i64} {
  func.func @_vae_fwd_kernel(%arg0: memref<16x32xbf16, #tpu.memory_space<vmem>>, %arg1: memref<32x32xbf16, #tpu.memory_space<vmem>>, %arg2: memref<14x32xbf16, #tpu.memory_space<vmem>>, %arg3: memref<14x64xf32, #tpu.memory_space<vmem>>, %arg4: memref<32x256xbf16, #tpu.memory_space<vmem>>, %arg5: memref<64x256xbf16, #tpu.memory_space<vmem>>, %arg6: memref<1x256xf32, #tpu.memory_space<vmem>>, %arg7: memref<32x256xbf16, #tpu.memory_space<vmem>>, %arg8: memref<64x256xbf16, #tpu.memory_space<vmem>>, %arg9: memref<1x256xf32, #tpu.memory_space<vmem>>, %arg10: memref<64x128xbf16, #tpu.memory_space<vmem>>, %arg11: memref<1x128xf32, #tpu.memory_space<vmem>>, %arg12: memref<64x128xbf16, #tpu.memory_space<vmem>>, %arg13: memref<1x128xf32, #tpu.memory_space<vmem>>, %arg14: memref<2x64xf32, #tpu.memory_space<vmem>>, %arg15: memref<4x64xf32, #tpu.memory_space<vmem>>, %arg16: memref<64x64xbf16, #tpu.memory_space<vmem>>, %arg17: memref<1x64xf32, #tpu.memory_space<vmem>>, %arg18: memref<32x256xbf16, #tpu.memory_space<vmem>>, %arg19: memref<64x256xbf16, #tpu.memory_space<vmem>>, %arg20: memref<1x256xf32, #tpu.memory_space<vmem>>, %arg21: memref<1x256xf32, #tpu.memory_space<vmem>>, %arg22: memref<64x64xbf16, #tpu.memory_space<vmem>>, %arg23: memref<1x64xf32, #tpu.memory_space<vmem>>, %arg24: memref<8x128xf32, #tpu.memory_space<vmem>>) attributes {dimension_semantics = [], scalar_prefetch = 0 : i64, scratch_operands = 0 : i64, tpu.core_type = #tpu.core_type<tc>} {
    %c0 = arith.constant 0 : index
    %c0_0 = arith.constant 0 : index
    %0 = vector.load %arg0[%c0, %c0_0] : memref<16x32xbf16, #tpu.memory_space<vmem>>, vector<16x32xbf16>
    %c0_1 = arith.constant 0 : index
    %c0_2 = arith.constant 0 : index
    %1 = vector.load %arg4[%c0_1, %c0_2] : memref<32x256xbf16, #tpu.memory_space<vmem>>, vector<32x256xbf16>
    %cst = arith.constant dense<0.000000e+00> : vector<16x256xf32>
    %2 = tpu.matmul %0, %1, %cst {dimension_numbers = #tpu.dot_dimension_numbers<[1], [0], [0], [1], [0, 0, 1, 1], [], []>} : vector<16x32xbf16>, vector<32x256xbf16>, vector<16x256xf32> -> vector<16x256xf32>
    %c0_3 = arith.constant 0 : index
    %c0_4 = arith.constant 0 : index
    %3 = vector.load %arg6[%c0_3, %c0_4] : memref<1x256xf32, #tpu.memory_space<vmem>>, vector<1x256xf32>
    %4 = vector.broadcast %3 : vector<1x256xf32> to vector<16x256xf32>
    %5 = arith.addf %2, %4 : vector<16x256xf32>
    %c0_5 = arith.constant 0 : index
    %c0_6 = arith.constant 0 : index
    %6 = vector.load %arg5[%c0_5, %c0_6] : memref<64x256xbf16, #tpu.memory_space<vmem>>, vector<64x256xbf16>
    %cst_7 = arith.constant 0.000000e+00 : f32
    %7 = vector.broadcast %cst_7 : f32 to vector<2x64xf32>
    %cst_8 = arith.constant 0.000000e+00 : f32
    %8 = vector.broadcast %cst_8 : f32 to vector<2x32xf32>
    %cst_9 = arith.constant 0.000000e+00 : f32
    %9 = vector.broadcast %cst_9 : f32 to vector<2x32xf32>
    %10 = arith.truncf %7 : vector<2x64xf32> to vector<2x64xbf16>
    %cst_10 = arith.constant dense<0.000000e+00> : vector<2x256xf32>
    %11 = tpu.matmul %10, %6, %cst_10 {dimension_numbers = #tpu.dot_dimension_numbers<[1], [0], [0], [1], [0, 0, 1, 1], [], []>} : vector<2x64xbf16>, vector<64x256xbf16>, vector<2x256xf32> -> vector<2x256xf32>
    %12 = vector.extract_strided_slice %11 {offsets = [0, 0], sizes = [2, 128], strides = [1, 1]} : vector<2x256xf32> to vector<2x128xf32>
    %13 = vector.extract_strided_slice %5 {offsets = [0, 0], sizes = [2, 128], strides = [1, 1]} : vector<16x256xf32> to vector<2x128xf32>
    %14 = arith.addf %12, %13 : vector<2x128xf32>
    %15 = vector.extract_strided_slice %11 {offsets = [0, 128], sizes = [2, 128], strides = [1, 1]} : vector<2x256xf32> to vector<2x128xf32>
    %16 = vector.extract_strided_slice %5 {offsets = [14, 128], sizes = [2, 128], strides = [1, 1]} : vector<16x256xf32> to vector<2x128xf32>
    %17 = arith.addf %15, %16 : vector<2x128xf32>
    %18 = vector.extract_strided_slice %14 {offsets = [0, 0], sizes = [2, 32], strides = [1, 1]} : vector<2x128xf32> to vector<2x32xf32>
    %19 = arith.negf %18 : vector<2x32xf32>
    %20 = math.exp %19 : vector<2x32xf32>
    %cst_11 = arith.constant 1.000000e+00 : f32
    %21 = vector.broadcast %cst_11 : f32 to vector<2x32xf32>
    %22 = arith.addf %21, %20 : vector<2x32xf32>
    %23 = arith.divf %21, %22 : vector<2x32xf32>
    %24 = vector.extract_strided_slice %14 {offsets = [0, 32], sizes = [2, 32], strides = [1, 1]} : vector<2x128xf32> to vector<2x32xf32>
    %25 = arith.negf %24 : vector<2x32xf32>
    %26 = math.exp %25 : vector<2x32xf32>
    %cst_12 = arith.constant 1.000000e+00 : f32
    %27 = vector.broadcast %cst_12 : f32 to vector<2x32xf32>
    %28 = arith.addf %27, %26 : vector<2x32xf32>
    %29 = arith.divf %27, %28 : vector<2x32xf32>
    %30 = vector.extract_strided_slice %14 {offsets = [0, 64], sizes = [2, 32], strides = [1, 1]} : vector<2x128xf32> to vector<2x32xf32>
    %31 = math.tanh %30 : vector<2x32xf32>
    %32 = vector.extract_strided_slice %14 {offsets = [0, 96], sizes = [2, 32], strides = [1, 1]} : vector<2x128xf32> to vector<2x32xf32>
    %33 = arith.negf %32 : vector<2x32xf32>
    %34 = math.exp %33 : vector<2x32xf32>
    %cst_13 = arith.constant 1.000000e+00 : f32
    %35 = vector.broadcast %cst_13 : f32 to vector<2x32xf32>
    %36 = arith.addf %35, %34 : vector<2x32xf32>
    %37 = arith.divf %35, %36 : vector<2x32xf32>
    %38 = arith.mulf %29, %8 : vector<2x32xf32>
    %39 = arith.mulf %23, %31 : vector<2x32xf32>
    %40 = arith.addf %38, %39 : vector<2x32xf32>
    %41 = math.tanh %40 : vector<2x32xf32>
    %42 = arith.mulf %37, %41 : vector<2x32xf32>
    %43 = vector.extract_strided_slice %17 {offsets = [0, 0], sizes = [2, 32], strides = [1, 1]} : vector<2x128xf32> to vector<2x32xf32>
    %44 = arith.negf %43 : vector<2x32xf32>
    %45 = math.exp %44 : vector<2x32xf32>
    %cst_14 = arith.constant 1.000000e+00 : f32
    %46 = vector.broadcast %cst_14 : f32 to vector<2x32xf32>
    %47 = arith.addf %46, %45 : vector<2x32xf32>
    %48 = arith.divf %46, %47 : vector<2x32xf32>
    %49 = vector.extract_strided_slice %17 {offsets = [0, 32], sizes = [2, 32], strides = [1, 1]} : vector<2x128xf32> to vector<2x32xf32>
    %50 = arith.negf %49 : vector<2x32xf32>
    %51 = math.exp %50 : vector<2x32xf32>
    %cst_15 = arith.constant 1.000000e+00 : f32
    %52 = vector.broadcast %cst_15 : f32 to vector<2x32xf32>
    %53 = arith.addf %52, %51 : vector<2x32xf32>
    %54 = arith.divf %52, %53 : vector<2x32xf32>
    %55 = vector.extract_strided_slice %17 {offsets = [0, 64], sizes = [2, 32], strides = [1, 1]} : vector<2x128xf32> to vector<2x32xf32>
    %56 = math.tanh %55 : vector<2x32xf32>
    %57 = vector.extract_strided_slice %17 {offsets = [0, 96], sizes = [2, 32], strides = [1, 1]} : vector<2x128xf32> to vector<2x32xf32>
    %58 = arith.negf %57 : vector<2x32xf32>
    %59 = math.exp %58 : vector<2x32xf32>
    %cst_16 = arith.constant 1.000000e+00 : f32
    %60 = vector.broadcast %cst_16 : f32 to vector<2x32xf32>
    %61 = arith.addf %60, %59 : vector<2x32xf32>
    %62 = arith.divf %60, %61 : vector<2x32xf32>
    %63 = arith.mulf %54, %9 : vector<2x32xf32>
    %64 = arith.mulf %48, %56 : vector<2x32xf32>
    %65 = arith.addf %63, %64 : vector<2x32xf32>
    %66 = math.tanh %65 : vector<2x32xf32>
    %67 = arith.mulf %62, %66 : vector<2x32xf32>
    %68 = tpu.concatenate %42, %67 in 1 : vector<2x32xf32>, vector<2x32xf32> -> vector<2x64xf32>
    %69 = arith.truncf %68 : vector<2x64xf32> to vector<2x64xbf16>
    %cst_17 = arith.constant dense<0.000000e+00> : vector<2x256xf32>
    %70 = tpu.matmul %69, %6, %cst_17 {dimension_numbers = #tpu.dot_dimension_numbers<[1], [0], [0], [1], [0, 0, 1, 1], [], []>} : vector<2x64xbf16>, vector<64x256xbf16>, vector<2x256xf32> -> vector<2x256xf32>
    %71 = vector.extract_strided_slice %70 {offsets = [0, 0], sizes = [2, 128], strides = [1, 1]} : vector<2x256xf32> to vector<2x128xf32>
    %72 = vector.extract_strided_slice %5 {offsets = [2, 0], sizes = [2, 128], strides = [1, 1]} : vector<16x256xf32> to vector<2x128xf32>
    %73 = arith.addf %71, %72 : vector<2x128xf32>
    %74 = vector.extract_strided_slice %70 {offsets = [0, 128], sizes = [2, 128], strides = [1, 1]} : vector<2x256xf32> to vector<2x128xf32>
    %75 = vector.extract_strided_slice %5 {offsets = [12, 128], sizes = [2, 128], strides = [1, 1]} : vector<16x256xf32> to vector<2x128xf32>
    %76 = arith.addf %74, %75 : vector<2x128xf32>
    %77 = vector.extract_strided_slice %73 {offsets = [0, 0], sizes = [2, 32], strides = [1, 1]} : vector<2x128xf32> to vector<2x32xf32>
    %78 = arith.negf %77 : vector<2x32xf32>
    %79 = math.exp %78 : vector<2x32xf32>
    %cst_18 = arith.constant 1.000000e+00 : f32
    %80 = vector.broadcast %cst_18 : f32 to vector<2x32xf32>
    %81 = arith.addf %80, %79 : vector<2x32xf32>
    %82 = arith.divf %80, %81 : vector<2x32xf32>
    %83 = vector.extract_strided_slice %73 {offsets = [0, 32], sizes = [2, 32], strides = [1, 1]} : vector<2x128xf32> to vector<2x32xf32>
    %84 = arith.negf %83 : vector<2x32xf32>
    %85 = math.exp %84 : vector<2x32xf32>
    %cst_19 = arith.constant 1.000000e+00 : f32
    %86 = vector.broadcast %cst_19 : f32 to vector<2x32xf32>
    %87 = arith.addf %86, %85 : vector<2x32xf32>
    %88 = arith.divf %86, %87 : vector<2x32xf32>
    %89 = vector.extract_strided_slice %73 {offsets = [0, 64], sizes = [2, 32], strides = [1, 1]} : vector<2x128xf32> to vector<2x32xf32>
    %90 = math.tanh %89 : vector<2x32xf32>
    %91 = vector.extract_strided_slice %73 {offsets = [0, 96], sizes = [2, 32], strides = [1, 1]} : vector<2x128xf32> to vector<2x32xf32>
    %92 = arith.negf %91 : vector<2x32xf32>
    %93 = math.exp %92 : vector<2x32xf32>
    %cst_20 = arith.constant 1.000000e+00 : f32
    %94 = vector.broadcast %cst_20 : f32 to vector<2x32xf32>
    %95 = arith.addf %94, %93 : vector<2x32xf32>
    %96 = arith.divf %94, %95 : vector<2x32xf32>
    %97 = arith.mulf %88, %40 : vector<2x32xf32>
    %98 = arith.mulf %82, %90 : vector<2x32xf32>
    %99 = arith.addf %97, %98 : vector<2x32xf32>
    %100 = math.tanh %99 : vector<2x32xf32>
    %101 = arith.mulf %96, %100 : vector<2x32xf32>
    %102 = vector.extract_strided_slice %76 {offsets = [0, 0], sizes = [2, 32], strides = [1, 1]} : vector<2x128xf32> to vector<2x32xf32>
    %103 = arith.negf %102 : vector<2x32xf32>
    %104 = math.exp %103 : vector<2x32xf32>
    %cst_21 = arith.constant 1.000000e+00 : f32
    %105 = vector.broadcast %cst_21 : f32 to vector<2x32xf32>
    %106 = arith.addf %105, %104 : vector<2x32xf32>
    %107 = arith.divf %105, %106 : vector<2x32xf32>
    %108 = vector.extract_strided_slice %76 {offsets = [0, 32], sizes = [2, 32], strides = [1, 1]} : vector<2x128xf32> to vector<2x32xf32>
    %109 = arith.negf %108 : vector<2x32xf32>
    %110 = math.exp %109 : vector<2x32xf32>
    %cst_22 = arith.constant 1.000000e+00 : f32
    %111 = vector.broadcast %cst_22 : f32 to vector<2x32xf32>
    %112 = arith.addf %111, %110 : vector<2x32xf32>
    %113 = arith.divf %111, %112 : vector<2x32xf32>
    %114 = vector.extract_strided_slice %76 {offsets = [0, 64], sizes = [2, 32], strides = [1, 1]} : vector<2x128xf32> to vector<2x32xf32>
    %115 = math.tanh %114 : vector<2x32xf32>
    %116 = vector.extract_strided_slice %76 {offsets = [0, 96], sizes = [2, 32], strides = [1, 1]} : vector<2x128xf32> to vector<2x32xf32>
    %117 = arith.negf %116 : vector<2x32xf32>
    %118 = math.exp %117 : vector<2x32xf32>
    %cst_23 = arith.constant 1.000000e+00 : f32
    %119 = vector.broadcast %cst_23 : f32 to vector<2x32xf32>
    %120 = arith.addf %119, %118 : vector<2x32xf32>
    %121 = arith.divf %119, %120 : vector<2x32xf32>
    %122 = arith.mulf %113, %65 : vector<2x32xf32>
    %123 = arith.mulf %107, %115 : vector<2x32xf32>
    %124 = arith.addf %122, %123 : vector<2x32xf32>
    %125 = math.tanh %124 : vector<2x32xf32>
    %126 = arith.mulf %121, %125 : vector<2x32xf32>
    %127 = tpu.concatenate %101, %126 in 1 : vector<2x32xf32>, vector<2x32xf32> -> vector<2x64xf32>
    %128 = arith.truncf %127 : vector<2x64xf32> to vector<2x64xbf16>
    %cst_24 = arith.constant dense<0.000000e+00> : vector<2x256xf32>
    %129 = tpu.matmul %128, %6, %cst_24 {dimension_numbers = #tpu.dot_dimension_numbers<[1], [0], [0], [1], [0, 0, 1, 1], [], []>} : vector<2x64xbf16>, vector<64x256xbf16>, vector<2x256xf32> -> vector<2x256xf32>
    %130 = vector.extract_strided_slice %129 {offsets = [0, 0], sizes = [2, 128], strides = [1, 1]} : vector<2x256xf32> to vector<2x128xf32>
    %131 = vector.extract_strided_slice %5 {offsets = [4, 0], sizes = [2, 128], strides = [1, 1]} : vector<16x256xf32> to vector<2x128xf32>
    %132 = arith.addf %130, %131 : vector<2x128xf32>
    %133 = vector.extract_strided_slice %129 {offsets = [0, 128], sizes = [2, 128], strides = [1, 1]} : vector<2x256xf32> to vector<2x128xf32>
    %134 = vector.extract_strided_slice %5 {offsets = [10, 128], sizes = [2, 128], strides = [1, 1]} : vector<16x256xf32> to vector<2x128xf32>
    %135 = arith.addf %133, %134 : vector<2x128xf32>
    %136 = vector.extract_strided_slice %132 {offsets = [0, 0], sizes = [2, 32], strides = [1, 1]} : vector<2x128xf32> to vector<2x32xf32>
    %137 = arith.negf %136 : vector<2x32xf32>
    %138 = math.exp %137 : vector<2x32xf32>
    %cst_25 = arith.constant 1.000000e+00 : f32
    %139 = vector.broadcast %cst_25 : f32 to vector<2x32xf32>
    %140 = arith.addf %139, %138 : vector<2x32xf32>
    %141 = arith.divf %139, %140 : vector<2x32xf32>
    %142 = vector.extract_strided_slice %132 {offsets = [0, 32], sizes = [2, 32], strides = [1, 1]} : vector<2x128xf32> to vector<2x32xf32>
    %143 = arith.negf %142 : vector<2x32xf32>
    %144 = math.exp %143 : vector<2x32xf32>
    %cst_26 = arith.constant 1.000000e+00 : f32
    %145 = vector.broadcast %cst_26 : f32 to vector<2x32xf32>
    %146 = arith.addf %145, %144 : vector<2x32xf32>
    %147 = arith.divf %145, %146 : vector<2x32xf32>
    %148 = vector.extract_strided_slice %132 {offsets = [0, 64], sizes = [2, 32], strides = [1, 1]} : vector<2x128xf32> to vector<2x32xf32>
    %149 = math.tanh %148 : vector<2x32xf32>
    %150 = vector.extract_strided_slice %132 {offsets = [0, 96], sizes = [2, 32], strides = [1, 1]} : vector<2x128xf32> to vector<2x32xf32>
    %151 = arith.negf %150 : vector<2x32xf32>
    %152 = math.exp %151 : vector<2x32xf32>
    %cst_27 = arith.constant 1.000000e+00 : f32
    %153 = vector.broadcast %cst_27 : f32 to vector<2x32xf32>
    %154 = arith.addf %153, %152 : vector<2x32xf32>
    %155 = arith.divf %153, %154 : vector<2x32xf32>
    %156 = arith.mulf %147, %99 : vector<2x32xf32>
    %157 = arith.mulf %141, %149 : vector<2x32xf32>
    %158 = arith.addf %156, %157 : vector<2x32xf32>
    %159 = math.tanh %158 : vector<2x32xf32>
    %160 = arith.mulf %155, %159 : vector<2x32xf32>
    %161 = vector.extract_strided_slice %135 {offsets = [0, 0], sizes = [2, 32], strides = [1, 1]} : vector<2x128xf32> to vector<2x32xf32>
    %162 = arith.negf %161 : vector<2x32xf32>
    %163 = math.exp %162 : vector<2x32xf32>
    %cst_28 = arith.constant 1.000000e+00 : f32
    %164 = vector.broadcast %cst_28 : f32 to vector<2x32xf32>
    %165 = arith.addf %164, %163 : vector<2x32xf32>
    %166 = arith.divf %164, %165 : vector<2x32xf32>
    %167 = vector.extract_strided_slice %135 {offsets = [0, 32], sizes = [2, 32], strides = [1, 1]} : vector<2x128xf32> to vector<2x32xf32>
    %168 = arith.negf %167 : vector<2x32xf32>
    %169 = math.exp %168 : vector<2x32xf32>
    %cst_29 = arith.constant 1.000000e+00 : f32
    %170 = vector.broadcast %cst_29 : f32 to vector<2x32xf32>
    %171 = arith.addf %170, %169 : vector<2x32xf32>
    %172 = arith.divf %170, %171 : vector<2x32xf32>
    %173 = vector.extract_strided_slice %135 {offsets = [0, 64], sizes = [2, 32], strides = [1, 1]} : vector<2x128xf32> to vector<2x32xf32>
    %174 = math.tanh %173 : vector<2x32xf32>
    %175 = vector.extract_strided_slice %135 {offsets = [0, 96], sizes = [2, 32], strides = [1, 1]} : vector<2x128xf32> to vector<2x32xf32>
    %176 = arith.negf %175 : vector<2x32xf32>
    %177 = math.exp %176 : vector<2x32xf32>
    %cst_30 = arith.constant 1.000000e+00 : f32
    %178 = vector.broadcast %cst_30 : f32 to vector<2x32xf32>
    %179 = arith.addf %178, %177 : vector<2x32xf32>
    %180 = arith.divf %178, %179 : vector<2x32xf32>
    %181 = arith.mulf %172, %124 : vector<2x32xf32>
    %182 = arith.mulf %166, %174 : vector<2x32xf32>
    %183 = arith.addf %181, %182 : vector<2x32xf32>
    %184 = math.tanh %183 : vector<2x32xf32>
    %185 = arith.mulf %180, %184 : vector<2x32xf32>
    %186 = tpu.concatenate %160, %185 in 1 : vector<2x32xf32>, vector<2x32xf32> -> vector<2x64xf32>
    %187 = arith.truncf %186 : vector<2x64xf32> to vector<2x64xbf16>
    %cst_31 = arith.constant dense<0.000000e+00> : vector<2x256xf32>
    %188 = tpu.matmul %187, %6, %cst_31 {dimension_numbers = #tpu.dot_dimension_numbers<[1], [0], [0], [1], [0, 0, 1, 1], [], []>} : vector<2x64xbf16>, vector<64x256xbf16>, vector<2x256xf32> -> vector<2x256xf32>
    %189 = vector.extract_strided_slice %188 {offsets = [0, 0], sizes = [2, 128], strides = [1, 1]} : vector<2x256xf32> to vector<2x128xf32>
    %190 = vector.extract_strided_slice %5 {offsets = [6, 0], sizes = [2, 128], strides = [1, 1]} : vector<16x256xf32> to vector<2x128xf32>
    %191 = arith.addf %189, %190 : vector<2x128xf32>
    %192 = vector.extract_strided_slice %188 {offsets = [0, 128], sizes = [2, 128], strides = [1, 1]} : vector<2x256xf32> to vector<2x128xf32>
    %193 = vector.extract_strided_slice %5 {offsets = [8, 128], sizes = [2, 128], strides = [1, 1]} : vector<16x256xf32> to vector<2x128xf32>
    %194 = arith.addf %192, %193 : vector<2x128xf32>
    %195 = vector.extract_strided_slice %191 {offsets = [0, 0], sizes = [2, 32], strides = [1, 1]} : vector<2x128xf32> to vector<2x32xf32>
    %196 = arith.negf %195 : vector<2x32xf32>
    %197 = math.exp %196 : vector<2x32xf32>
    %cst_32 = arith.constant 1.000000e+00 : f32
    %198 = vector.broadcast %cst_32 : f32 to vector<2x32xf32>
    %199 = arith.addf %198, %197 : vector<2x32xf32>
    %200 = arith.divf %198, %199 : vector<2x32xf32>
    %201 = vector.extract_strided_slice %191 {offsets = [0, 32], sizes = [2, 32], strides = [1, 1]} : vector<2x128xf32> to vector<2x32xf32>
    %202 = arith.negf %201 : vector<2x32xf32>
    %203 = math.exp %202 : vector<2x32xf32>
    %cst_33 = arith.constant 1.000000e+00 : f32
    %204 = vector.broadcast %cst_33 : f32 to vector<2x32xf32>
    %205 = arith.addf %204, %203 : vector<2x32xf32>
    %206 = arith.divf %204, %205 : vector<2x32xf32>
    %207 = vector.extract_strided_slice %191 {offsets = [0, 64], sizes = [2, 32], strides = [1, 1]} : vector<2x128xf32> to vector<2x32xf32>
    %208 = math.tanh %207 : vector<2x32xf32>
    %209 = vector.extract_strided_slice %191 {offsets = [0, 96], sizes = [2, 32], strides = [1, 1]} : vector<2x128xf32> to vector<2x32xf32>
    %210 = arith.negf %209 : vector<2x32xf32>
    %211 = math.exp %210 : vector<2x32xf32>
    %cst_34 = arith.constant 1.000000e+00 : f32
    %212 = vector.broadcast %cst_34 : f32 to vector<2x32xf32>
    %213 = arith.addf %212, %211 : vector<2x32xf32>
    %214 = arith.divf %212, %213 : vector<2x32xf32>
    %215 = arith.mulf %206, %158 : vector<2x32xf32>
    %216 = arith.mulf %200, %208 : vector<2x32xf32>
    %217 = arith.addf %215, %216 : vector<2x32xf32>
    %218 = math.tanh %217 : vector<2x32xf32>
    %219 = arith.mulf %214, %218 : vector<2x32xf32>
    %220 = vector.extract_strided_slice %194 {offsets = [0, 0], sizes = [2, 32], strides = [1, 1]} : vector<2x128xf32> to vector<2x32xf32>
    %221 = arith.negf %220 : vector<2x32xf32>
    %222 = math.exp %221 : vector<2x32xf32>
    %cst_35 = arith.constant 1.000000e+00 : f32
    %223 = vector.broadcast %cst_35 : f32 to vector<2x32xf32>
    %224 = arith.addf %223, %222 : vector<2x32xf32>
    %225 = arith.divf %223, %224 : vector<2x32xf32>
    %226 = vector.extract_strided_slice %194 {offsets = [0, 32], sizes = [2, 32], strides = [1, 1]} : vector<2x128xf32> to vector<2x32xf32>
    %227 = arith.negf %226 : vector<2x32xf32>
    %228 = math.exp %227 : vector<2x32xf32>
    %cst_36 = arith.constant 1.000000e+00 : f32
    %229 = vector.broadcast %cst_36 : f32 to vector<2x32xf32>
    %230 = arith.addf %229, %228 : vector<2x32xf32>
    %231 = arith.divf %229, %230 : vector<2x32xf32>
    %232 = vector.extract_strided_slice %194 {offsets = [0, 64], sizes = [2, 32], strides = [1, 1]} : vector<2x128xf32> to vector<2x32xf32>
    %233 = math.tanh %232 : vector<2x32xf32>
    %234 = vector.extract_strided_slice %194 {offsets = [0, 96], sizes = [2, 32], strides = [1, 1]} : vector<2x128xf32> to vector<2x32xf32>
    %235 = arith.negf %234 : vector<2x32xf32>
    %236 = math.exp %235 : vector<2x32xf32>
    %cst_37 = arith.constant 1.000000e+00 : f32
    %237 = vector.broadcast %cst_37 : f32 to vector<2x32xf32>
    %238 = arith.addf %237, %236 : vector<2x32xf32>
    %239 = arith.divf %237, %238 : vector<2x32xf32>
    %240 = arith.mulf %231, %183 : vector<2x32xf32>
    %241 = arith.mulf %225, %233 : vector<2x32xf32>
    %242 = arith.addf %240, %241 : vector<2x32xf32>
    %243 = math.tanh %242 : vector<2x32xf32>
    %244 = arith.mulf %239, %243 : vector<2x32xf32>
    %245 = tpu.concatenate %219, %244 in 1 : vector<2x32xf32>, vector<2x32xf32> -> vector<2x64xf32>
    %246 = arith.truncf %245 : vector<2x64xf32> to vector<2x64xbf16>
    %cst_38 = arith.constant dense<0.000000e+00> : vector<2x256xf32>
    %247 = tpu.matmul %246, %6, %cst_38 {dimension_numbers = #tpu.dot_dimension_numbers<[1], [0], [0], [1], [0, 0, 1, 1], [], []>} : vector<2x64xbf16>, vector<64x256xbf16>, vector<2x256xf32> -> vector<2x256xf32>
    %248 = vector.extract_strided_slice %247 {offsets = [0, 0], sizes = [2, 128], strides = [1, 1]} : vector<2x256xf32> to vector<2x128xf32>
    %249 = vector.extract_strided_slice %5 {offsets = [8, 0], sizes = [2, 128], strides = [1, 1]} : vector<16x256xf32> to vector<2x128xf32>
    %250 = arith.addf %248, %249 : vector<2x128xf32>
    %251 = vector.extract_strided_slice %247 {offsets = [0, 128], sizes = [2, 128], strides = [1, 1]} : vector<2x256xf32> to vector<2x128xf32>
    %252 = vector.extract_strided_slice %5 {offsets = [6, 128], sizes = [2, 128], strides = [1, 1]} : vector<16x256xf32> to vector<2x128xf32>
    %253 = arith.addf %251, %252 : vector<2x128xf32>
    %254 = vector.extract_strided_slice %250 {offsets = [0, 0], sizes = [2, 32], strides = [1, 1]} : vector<2x128xf32> to vector<2x32xf32>
    %255 = arith.negf %254 : vector<2x32xf32>
    %256 = math.exp %255 : vector<2x32xf32>
    %cst_39 = arith.constant 1.000000e+00 : f32
    %257 = vector.broadcast %cst_39 : f32 to vector<2x32xf32>
    %258 = arith.addf %257, %256 : vector<2x32xf32>
    %259 = arith.divf %257, %258 : vector<2x32xf32>
    %260 = vector.extract_strided_slice %250 {offsets = [0, 32], sizes = [2, 32], strides = [1, 1]} : vector<2x128xf32> to vector<2x32xf32>
    %261 = arith.negf %260 : vector<2x32xf32>
    %262 = math.exp %261 : vector<2x32xf32>
    %cst_40 = arith.constant 1.000000e+00 : f32
    %263 = vector.broadcast %cst_40 : f32 to vector<2x32xf32>
    %264 = arith.addf %263, %262 : vector<2x32xf32>
    %265 = arith.divf %263, %264 : vector<2x32xf32>
    %266 = vector.extract_strided_slice %250 {offsets = [0, 64], sizes = [2, 32], strides = [1, 1]} : vector<2x128xf32> to vector<2x32xf32>
    %267 = math.tanh %266 : vector<2x32xf32>
    %268 = vector.extract_strided_slice %250 {offsets = [0, 96], sizes = [2, 32], strides = [1, 1]} : vector<2x128xf32> to vector<2x32xf32>
    %269 = arith.negf %268 : vector<2x32xf32>
    %270 = math.exp %269 : vector<2x32xf32>
    %cst_41 = arith.constant 1.000000e+00 : f32
    %271 = vector.broadcast %cst_41 : f32 to vector<2x32xf32>
    %272 = arith.addf %271, %270 : vector<2x32xf32>
    %273 = arith.divf %271, %272 : vector<2x32xf32>
    %274 = arith.mulf %265, %217 : vector<2x32xf32>
    %275 = arith.mulf %259, %267 : vector<2x32xf32>
    %276 = arith.addf %274, %275 : vector<2x32xf32>
    %277 = math.tanh %276 : vector<2x32xf32>
    %278 = arith.mulf %273, %277 : vector<2x32xf32>
    %279 = vector.extract_strided_slice %253 {offsets = [0, 0], sizes = [2, 32], strides = [1, 1]} : vector<2x128xf32> to vector<2x32xf32>
    %280 = arith.negf %279 : vector<2x32xf32>
    %281 = math.exp %280 : vector<2x32xf32>
    %cst_42 = arith.constant 1.000000e+00 : f32
    %282 = vector.broadcast %cst_42 : f32 to vector<2x32xf32>
    %283 = arith.addf %282, %281 : vector<2x32xf32>
    %284 = arith.divf %282, %283 : vector<2x32xf32>
    %285 = vector.extract_strided_slice %253 {offsets = [0, 32], sizes = [2, 32], strides = [1, 1]} : vector<2x128xf32> to vector<2x32xf32>
    %286 = arith.negf %285 : vector<2x32xf32>
    %287 = math.exp %286 : vector<2x32xf32>
    %cst_43 = arith.constant 1.000000e+00 : f32
    %288 = vector.broadcast %cst_43 : f32 to vector<2x32xf32>
    %289 = arith.addf %288, %287 : vector<2x32xf32>
    %290 = arith.divf %288, %289 : vector<2x32xf32>
    %291 = vector.extract_strided_slice %253 {offsets = [0, 64], sizes = [2, 32], strides = [1, 1]} : vector<2x128xf32> to vector<2x32xf32>
    %292 = math.tanh %291 : vector<2x32xf32>
    %293 = vector.extract_strided_slice %253 {offsets = [0, 96], sizes = [2, 32], strides = [1, 1]} : vector<2x128xf32> to vector<2x32xf32>
    %294 = arith.negf %293 : vector<2x32xf32>
    %295 = math.exp %294 : vector<2x32xf32>
    %cst_44 = arith.constant 1.000000e+00 : f32
    %296 = vector.broadcast %cst_44 : f32 to vector<2x32xf32>
    %297 = arith.addf %296, %295 : vector<2x32xf32>
    %298 = arith.divf %296, %297 : vector<2x32xf32>
    %299 = arith.mulf %290, %242 : vector<2x32xf32>
    %300 = arith.mulf %284, %292 : vector<2x32xf32>
    %301 = arith.addf %299, %300 : vector<2x32xf32>
    %302 = math.tanh %301 : vector<2x32xf32>
    %303 = arith.mulf %298, %302 : vector<2x32xf32>
    %304 = tpu.concatenate %278, %303 in 1 : vector<2x32xf32>, vector<2x32xf32> -> vector<2x64xf32>
    %305 = arith.truncf %304 : vector<2x64xf32> to vector<2x64xbf16>
    %cst_45 = arith.constant dense<0.000000e+00> : vector<2x256xf32>
    %306 = tpu.matmul %305, %6, %cst_45 {dimension_numbers = #tpu.dot_dimension_numbers<[1], [0], [0], [1], [0, 0, 1, 1], [], []>} : vector<2x64xbf16>, vector<64x256xbf16>, vector<2x256xf32> -> vector<2x256xf32>
    %307 = vector.extract_strided_slice %306 {offsets = [0, 0], sizes = [2, 128], strides = [1, 1]} : vector<2x256xf32> to vector<2x128xf32>
    %308 = vector.extract_strided_slice %5 {offsets = [10, 0], sizes = [2, 128], strides = [1, 1]} : vector<16x256xf32> to vector<2x128xf32>
    %309 = arith.addf %307, %308 : vector<2x128xf32>
    %310 = vector.extract_strided_slice %306 {offsets = [0, 128], sizes = [2, 128], strides = [1, 1]} : vector<2x256xf32> to vector<2x128xf32>
    %311 = vector.extract_strided_slice %5 {offsets = [4, 128], sizes = [2, 128], strides = [1, 1]} : vector<16x256xf32> to vector<2x128xf32>
    %312 = arith.addf %310, %311 : vector<2x128xf32>
    %313 = vector.extract_strided_slice %309 {offsets = [0, 0], sizes = [2, 32], strides = [1, 1]} : vector<2x128xf32> to vector<2x32xf32>
    %314 = arith.negf %313 : vector<2x32xf32>
    %315 = math.exp %314 : vector<2x32xf32>
    %cst_46 = arith.constant 1.000000e+00 : f32
    %316 = vector.broadcast %cst_46 : f32 to vector<2x32xf32>
    %317 = arith.addf %316, %315 : vector<2x32xf32>
    %318 = arith.divf %316, %317 : vector<2x32xf32>
    %319 = vector.extract_strided_slice %309 {offsets = [0, 32], sizes = [2, 32], strides = [1, 1]} : vector<2x128xf32> to vector<2x32xf32>
    %320 = arith.negf %319 : vector<2x32xf32>
    %321 = math.exp %320 : vector<2x32xf32>
    %cst_47 = arith.constant 1.000000e+00 : f32
    %322 = vector.broadcast %cst_47 : f32 to vector<2x32xf32>
    %323 = arith.addf %322, %321 : vector<2x32xf32>
    %324 = arith.divf %322, %323 : vector<2x32xf32>
    %325 = vector.extract_strided_slice %309 {offsets = [0, 64], sizes = [2, 32], strides = [1, 1]} : vector<2x128xf32> to vector<2x32xf32>
    %326 = math.tanh %325 : vector<2x32xf32>
    %327 = vector.extract_strided_slice %309 {offsets = [0, 96], sizes = [2, 32], strides = [1, 1]} : vector<2x128xf32> to vector<2x32xf32>
    %328 = arith.negf %327 : vector<2x32xf32>
    %329 = math.exp %328 : vector<2x32xf32>
    %cst_48 = arith.constant 1.000000e+00 : f32
    %330 = vector.broadcast %cst_48 : f32 to vector<2x32xf32>
    %331 = arith.addf %330, %329 : vector<2x32xf32>
    %332 = arith.divf %330, %331 : vector<2x32xf32>
    %333 = arith.mulf %324, %276 : vector<2x32xf32>
    %334 = arith.mulf %318, %326 : vector<2x32xf32>
    %335 = arith.addf %333, %334 : vector<2x32xf32>
    %336 = math.tanh %335 : vector<2x32xf32>
    %337 = arith.mulf %332, %336 : vector<2x32xf32>
    %338 = vector.extract_strided_slice %312 {offsets = [0, 0], sizes = [2, 32], strides = [1, 1]} : vector<2x128xf32> to vector<2x32xf32>
    %339 = arith.negf %338 : vector<2x32xf32>
    %340 = math.exp %339 : vector<2x32xf32>
    %cst_49 = arith.constant 1.000000e+00 : f32
    %341 = vector.broadcast %cst_49 : f32 to vector<2x32xf32>
    %342 = arith.addf %341, %340 : vector<2x32xf32>
    %343 = arith.divf %341, %342 : vector<2x32xf32>
    %344 = vector.extract_strided_slice %312 {offsets = [0, 32], sizes = [2, 32], strides = [1, 1]} : vector<2x128xf32> to vector<2x32xf32>
    %345 = arith.negf %344 : vector<2x32xf32>
    %346 = math.exp %345 : vector<2x32xf32>
    %cst_50 = arith.constant 1.000000e+00 : f32
    %347 = vector.broadcast %cst_50 : f32 to vector<2x32xf32>
    %348 = arith.addf %347, %346 : vector<2x32xf32>
    %349 = arith.divf %347, %348 : vector<2x32xf32>
    %350 = vector.extract_strided_slice %312 {offsets = [0, 64], sizes = [2, 32], strides = [1, 1]} : vector<2x128xf32> to vector<2x32xf32>
    %351 = math.tanh %350 : vector<2x32xf32>
    %352 = vector.extract_strided_slice %312 {offsets = [0, 96], sizes = [2, 32], strides = [1, 1]} : vector<2x128xf32> to vector<2x32xf32>
    %353 = arith.negf %352 : vector<2x32xf32>
    %354 = math.exp %353 : vector<2x32xf32>
    %cst_51 = arith.constant 1.000000e+00 : f32
    %355 = vector.broadcast %cst_51 : f32 to vector<2x32xf32>
    %356 = arith.addf %355, %354 : vector<2x32xf32>
    %357 = arith.divf %355, %356 : vector<2x32xf32>
    %358 = arith.mulf %349, %301 : vector<2x32xf32>
    %359 = arith.mulf %343, %351 : vector<2x32xf32>
    %360 = arith.addf %358, %359 : vector<2x32xf32>
    %361 = math.tanh %360 : vector<2x32xf32>
    %362 = arith.mulf %357, %361 : vector<2x32xf32>
    %363 = tpu.concatenate %337, %362 in 1 : vector<2x32xf32>, vector<2x32xf32> -> vector<2x64xf32>
    %364 = arith.truncf %363 : vector<2x64xf32> to vector<2x64xbf16>
    %cst_52 = arith.constant dense<0.000000e+00> : vector<2x256xf32>
    %365 = tpu.matmul %364, %6, %cst_52 {dimension_numbers = #tpu.dot_dimension_numbers<[1], [0], [0], [1], [0, 0, 1, 1], [], []>} : vector<2x64xbf16>, vector<64x256xbf16>, vector<2x256xf32> -> vector<2x256xf32>
    %366 = vector.extract_strided_slice %365 {offsets = [0, 0], sizes = [2, 128], strides = [1, 1]} : vector<2x256xf32> to vector<2x128xf32>
    %367 = vector.extract_strided_slice %5 {offsets = [12, 0], sizes = [2, 128], strides = [1, 1]} : vector<16x256xf32> to vector<2x128xf32>
    %368 = arith.addf %366, %367 : vector<2x128xf32>
    %369 = vector.extract_strided_slice %365 {offsets = [0, 128], sizes = [2, 128], strides = [1, 1]} : vector<2x256xf32> to vector<2x128xf32>
    %370 = vector.extract_strided_slice %5 {offsets = [2, 128], sizes = [2, 128], strides = [1, 1]} : vector<16x256xf32> to vector<2x128xf32>
    %371 = arith.addf %369, %370 : vector<2x128xf32>
    %372 = vector.extract_strided_slice %368 {offsets = [0, 0], sizes = [2, 32], strides = [1, 1]} : vector<2x128xf32> to vector<2x32xf32>
    %373 = arith.negf %372 : vector<2x32xf32>
    %374 = math.exp %373 : vector<2x32xf32>
    %cst_53 = arith.constant 1.000000e+00 : f32
    %375 = vector.broadcast %cst_53 : f32 to vector<2x32xf32>
    %376 = arith.addf %375, %374 : vector<2x32xf32>
    %377 = arith.divf %375, %376 : vector<2x32xf32>
    %378 = vector.extract_strided_slice %368 {offsets = [0, 32], sizes = [2, 32], strides = [1, 1]} : vector<2x128xf32> to vector<2x32xf32>
    %379 = arith.negf %378 : vector<2x32xf32>
    %380 = math.exp %379 : vector<2x32xf32>
    %cst_54 = arith.constant 1.000000e+00 : f32
    %381 = vector.broadcast %cst_54 : f32 to vector<2x32xf32>
    %382 = arith.addf %381, %380 : vector<2x32xf32>
    %383 = arith.divf %381, %382 : vector<2x32xf32>
    %384 = vector.extract_strided_slice %368 {offsets = [0, 64], sizes = [2, 32], strides = [1, 1]} : vector<2x128xf32> to vector<2x32xf32>
    %385 = math.tanh %384 : vector<2x32xf32>
    %386 = vector.extract_strided_slice %368 {offsets = [0, 96], sizes = [2, 32], strides = [1, 1]} : vector<2x128xf32> to vector<2x32xf32>
    %387 = arith.negf %386 : vector<2x32xf32>
    %388 = math.exp %387 : vector<2x32xf32>
    %cst_55 = arith.constant 1.000000e+00 : f32
    %389 = vector.broadcast %cst_55 : f32 to vector<2x32xf32>
    %390 = arith.addf %389, %388 : vector<2x32xf32>
    %391 = arith.divf %389, %390 : vector<2x32xf32>
    %392 = arith.mulf %383, %335 : vector<2x32xf32>
    %393 = arith.mulf %377, %385 : vector<2x32xf32>
    %394 = arith.addf %392, %393 : vector<2x32xf32>
    %395 = math.tanh %394 : vector<2x32xf32>
    %396 = arith.mulf %391, %395 : vector<2x32xf32>
    %397 = vector.extract_strided_slice %371 {offsets = [0, 0], sizes = [2, 32], strides = [1, 1]} : vector<2x128xf32> to vector<2x32xf32>
    %398 = arith.negf %397 : vector<2x32xf32>
    %399 = math.exp %398 : vector<2x32xf32>
    %cst_56 = arith.constant 1.000000e+00 : f32
    %400 = vector.broadcast %cst_56 : f32 to vector<2x32xf32>
    %401 = arith.addf %400, %399 : vector<2x32xf32>
    %402 = arith.divf %400, %401 : vector<2x32xf32>
    %403 = vector.extract_strided_slice %371 {offsets = [0, 32], sizes = [2, 32], strides = [1, 1]} : vector<2x128xf32> to vector<2x32xf32>
    %404 = arith.negf %403 : vector<2x32xf32>
    %405 = math.exp %404 : vector<2x32xf32>
    %cst_57 = arith.constant 1.000000e+00 : f32
    %406 = vector.broadcast %cst_57 : f32 to vector<2x32xf32>
    %407 = arith.addf %406, %405 : vector<2x32xf32>
    %408 = arith.divf %406, %407 : vector<2x32xf32>
    %409 = vector.extract_strided_slice %371 {offsets = [0, 64], sizes = [2, 32], strides = [1, 1]} : vector<2x128xf32> to vector<2x32xf32>
    %410 = math.tanh %409 : vector<2x32xf32>
    %411 = vector.extract_strided_slice %371 {offsets = [0, 96], sizes = [2, 32], strides = [1, 1]} : vector<2x128xf32> to vector<2x32xf32>
    %412 = arith.negf %411 : vector<2x32xf32>
    %413 = math.exp %412 : vector<2x32xf32>
    %cst_58 = arith.constant 1.000000e+00 : f32
    %414 = vector.broadcast %cst_58 : f32 to vector<2x32xf32>
    %415 = arith.addf %414, %413 : vector<2x32xf32>
    %416 = arith.divf %414, %415 : vector<2x32xf32>
    %417 = arith.mulf %408, %360 : vector<2x32xf32>
    %418 = arith.mulf %402, %410 : vector<2x32xf32>
    %419 = arith.addf %417, %418 : vector<2x32xf32>
    %420 = math.tanh %419 : vector<2x32xf32>
    %421 = arith.mulf %416, %420 : vector<2x32xf32>
    %422 = tpu.concatenate %396, %421 in 1 : vector<2x32xf32>, vector<2x32xf32> -> vector<2x64xf32>
    %423 = arith.truncf %422 : vector<2x64xf32> to vector<2x64xbf16>
    %cst_59 = arith.constant dense<0.000000e+00> : vector<2x256xf32>
    %424 = tpu.matmul %423, %6, %cst_59 {dimension_numbers = #tpu.dot_dimension_numbers<[1], [0], [0], [1], [0, 0, 1, 1], [], []>} : vector<2x64xbf16>, vector<64x256xbf16>, vector<2x256xf32> -> vector<2x256xf32>
    %425 = vector.extract_strided_slice %424 {offsets = [0, 0], sizes = [2, 128], strides = [1, 1]} : vector<2x256xf32> to vector<2x128xf32>
    %426 = vector.extract_strided_slice %5 {offsets = [14, 0], sizes = [2, 128], strides = [1, 1]} : vector<16x256xf32> to vector<2x128xf32>
    %427 = arith.addf %425, %426 : vector<2x128xf32>
    %428 = vector.extract_strided_slice %424 {offsets = [0, 128], sizes = [2, 128], strides = [1, 1]} : vector<2x256xf32> to vector<2x128xf32>
    %429 = vector.extract_strided_slice %5 {offsets = [0, 128], sizes = [2, 128], strides = [1, 1]} : vector<16x256xf32> to vector<2x128xf32>
    %430 = arith.addf %428, %429 : vector<2x128xf32>
    %431 = vector.extract_strided_slice %427 {offsets = [0, 0], sizes = [2, 32], strides = [1, 1]} : vector<2x128xf32> to vector<2x32xf32>
    %432 = arith.negf %431 : vector<2x32xf32>
    %433 = math.exp %432 : vector<2x32xf32>
    %cst_60 = arith.constant 1.000000e+00 : f32
    %434 = vector.broadcast %cst_60 : f32 to vector<2x32xf32>
    %435 = arith.addf %434, %433 : vector<2x32xf32>
    %436 = arith.divf %434, %435 : vector<2x32xf32>
    %437 = vector.extract_strided_slice %427 {offsets = [0, 32], sizes = [2, 32], strides = [1, 1]} : vector<2x128xf32> to vector<2x32xf32>
    %438 = arith.negf %437 : vector<2x32xf32>
    %439 = math.exp %438 : vector<2x32xf32>
    %cst_61 = arith.constant 1.000000e+00 : f32
    %440 = vector.broadcast %cst_61 : f32 to vector<2x32xf32>
    %441 = arith.addf %440, %439 : vector<2x32xf32>
    %442 = arith.divf %440, %441 : vector<2x32xf32>
    %443 = vector.extract_strided_slice %427 {offsets = [0, 64], sizes = [2, 32], strides = [1, 1]} : vector<2x128xf32> to vector<2x32xf32>
    %444 = math.tanh %443 : vector<2x32xf32>
    %445 = vector.extract_strided_slice %427 {offsets = [0, 96], sizes = [2, 32], strides = [1, 1]} : vector<2x128xf32> to vector<2x32xf32>
    %446 = arith.negf %445 : vector<2x32xf32>
    %447 = math.exp %446 : vector<2x32xf32>
    %cst_62 = arith.constant 1.000000e+00 : f32
    %448 = vector.broadcast %cst_62 : f32 to vector<2x32xf32>
    %449 = arith.addf %448, %447 : vector<2x32xf32>
    %450 = arith.divf %448, %449 : vector<2x32xf32>
    %451 = arith.mulf %442, %394 : vector<2x32xf32>
    %452 = arith.mulf %436, %444 : vector<2x32xf32>
    %453 = arith.addf %451, %452 : vector<2x32xf32>
    %454 = math.tanh %453 : vector<2x32xf32>
    %455 = arith.mulf %450, %454 : vector<2x32xf32>
    %456 = vector.extract_strided_slice %430 {offsets = [0, 0], sizes = [2, 32], strides = [1, 1]} : vector<2x128xf32> to vector<2x32xf32>
    %457 = arith.negf %456 : vector<2x32xf32>
    %458 = math.exp %457 : vector<2x32xf32>
    %cst_63 = arith.constant 1.000000e+00 : f32
    %459 = vector.broadcast %cst_63 : f32 to vector<2x32xf32>
    %460 = arith.addf %459, %458 : vector<2x32xf32>
    %461 = arith.divf %459, %460 : vector<2x32xf32>
    %462 = vector.extract_strided_slice %430 {offsets = [0, 32], sizes = [2, 32], strides = [1, 1]} : vector<2x128xf32> to vector<2x32xf32>
    %463 = arith.negf %462 : vector<2x32xf32>
    %464 = math.exp %463 : vector<2x32xf32>
    %cst_64 = arith.constant 1.000000e+00 : f32
    %465 = vector.broadcast %cst_64 : f32 to vector<2x32xf32>
    %466 = arith.addf %465, %464 : vector<2x32xf32>
    %467 = arith.divf %465, %466 : vector<2x32xf32>
    %468 = vector.extract_strided_slice %430 {offsets = [0, 64], sizes = [2, 32], strides = [1, 1]} : vector<2x128xf32> to vector<2x32xf32>
    %469 = math.tanh %468 : vector<2x32xf32>
    %470 = vector.extract_strided_slice %430 {offsets = [0, 96], sizes = [2, 32], strides = [1, 1]} : vector<2x128xf32> to vector<2x32xf32>
    %471 = arith.negf %470 : vector<2x32xf32>
    %472 = math.exp %471 : vector<2x32xf32>
    %cst_65 = arith.constant 1.000000e+00 : f32
    %473 = vector.broadcast %cst_65 : f32 to vector<2x32xf32>
    %474 = arith.addf %473, %472 : vector<2x32xf32>
    %475 = arith.divf %473, %474 : vector<2x32xf32>
    %476 = arith.mulf %467, %419 : vector<2x32xf32>
    %477 = arith.mulf %461, %469 : vector<2x32xf32>
    %478 = arith.addf %476, %477 : vector<2x32xf32>
    %479 = math.tanh %478 : vector<2x32xf32>
    %480 = arith.mulf %475, %479 : vector<2x32xf32>
    %481 = tpu.concatenate %455, %480 in 1 : vector<2x32xf32>, vector<2x32xf32> -> vector<2x64xf32>
    %c0_66 = arith.constant 0 : index
    %c0_67 = arith.constant 0 : index
    %482 = vector.load %arg1[%c0_66, %c0_67] : memref<32x32xbf16, #tpu.memory_space<vmem>>, vector<32x32xbf16>
    %c0_68 = arith.constant 0 : index
    %c0_69 = arith.constant 0 : index
    %483 = vector.load %arg7[%c0_68, %c0_69] : memref<32x256xbf16, #tpu.memory_space<vmem>>, vector<32x256xbf16>
    %cst_70 = arith.constant dense<0.000000e+00> : vector<32x256xf32>
    %484 = tpu.matmul %482, %483, %cst_70 {dimension_numbers = #tpu.dot_dimension_numbers<[1], [0], [0], [1], [0, 0, 1, 1], [], []>} : vector<32x32xbf16>, vector<32x256xbf16>, vector<32x256xf32> -> vector<32x256xf32>
    %c0_71 = arith.constant 0 : index
    %c0_72 = arith.constant 0 : index
    %485 = vector.load %arg9[%c0_71, %c0_72] : memref<1x256xf32, #tpu.memory_space<vmem>>, vector<1x256xf32>
    %486 = vector.broadcast %485 : vector<1x256xf32> to vector<32x256xf32>
    %487 = arith.addf %484, %486 : vector<32x256xf32>
    %c0_73 = arith.constant 0 : index
    %c0_74 = arith.constant 0 : index
    %488 = vector.load %arg8[%c0_73, %c0_74] : memref<64x256xbf16, #tpu.memory_space<vmem>>, vector<64x256xbf16>
    %cst_75 = arith.constant 0.000000e+00 : f32
    %489 = vector.broadcast %cst_75 : f32 to vector<4x64xf32>
    %cst_76 = arith.constant 0.000000e+00 : f32
    %490 = vector.broadcast %cst_76 : f32 to vector<4x32xf32>
    %cst_77 = arith.constant 0.000000e+00 : f32
    %491 = vector.broadcast %cst_77 : f32 to vector<4x32xf32>
    %492 = arith.truncf %489 : vector<4x64xf32> to vector<4x64xbf16>
    %cst_78 = arith.constant dense<0.000000e+00> : vector<4x256xf32>
    %493 = tpu.matmul %492, %488, %cst_78 {dimension_numbers = #tpu.dot_dimension_numbers<[1], [0], [0], [1], [0, 0, 1, 1], [], []>} : vector<4x64xbf16>, vector<64x256xbf16>, vector<4x256xf32> -> vector<4x256xf32>
    %494 = vector.extract_strided_slice %493 {offsets = [0, 0], sizes = [4, 128], strides = [1, 1]} : vector<4x256xf32> to vector<4x128xf32>
    %495 = vector.extract_strided_slice %487 {offsets = [0, 0], sizes = [4, 128], strides = [1, 1]} : vector<32x256xf32> to vector<4x128xf32>
    %496 = arith.addf %494, %495 : vector<4x128xf32>
    %497 = vector.extract_strided_slice %493 {offsets = [0, 128], sizes = [4, 128], strides = [1, 1]} : vector<4x256xf32> to vector<4x128xf32>
    %498 = vector.extract_strided_slice %487 {offsets = [28, 128], sizes = [4, 128], strides = [1, 1]} : vector<32x256xf32> to vector<4x128xf32>
    %499 = arith.addf %497, %498 : vector<4x128xf32>
    %500 = vector.extract_strided_slice %496 {offsets = [0, 0], sizes = [4, 32], strides = [1, 1]} : vector<4x128xf32> to vector<4x32xf32>
    %501 = arith.negf %500 : vector<4x32xf32>
    %502 = math.exp %501 : vector<4x32xf32>
    %cst_79 = arith.constant 1.000000e+00 : f32
    %503 = vector.broadcast %cst_79 : f32 to vector<4x32xf32>
    %504 = arith.addf %503, %502 : vector<4x32xf32>
    %505 = arith.divf %503, %504 : vector<4x32xf32>
    %506 = vector.extract_strided_slice %496 {offsets = [0, 32], sizes = [4, 32], strides = [1, 1]} : vector<4x128xf32> to vector<4x32xf32>
    %507 = arith.negf %506 : vector<4x32xf32>
    %508 = math.exp %507 : vector<4x32xf32>
    %cst_80 = arith.constant 1.000000e+00 : f32
    %509 = vector.broadcast %cst_80 : f32 to vector<4x32xf32>
    %510 = arith.addf %509, %508 : vector<4x32xf32>
    %511 = arith.divf %509, %510 : vector<4x32xf32>
    %512 = vector.extract_strided_slice %496 {offsets = [0, 64], sizes = [4, 32], strides = [1, 1]} : vector<4x128xf32> to vector<4x32xf32>
    %513 = math.tanh %512 : vector<4x32xf32>
    %514 = vector.extract_strided_slice %496 {offsets = [0, 96], sizes = [4, 32], strides = [1, 1]} : vector<4x128xf32> to vector<4x32xf32>
    %515 = arith.negf %514 : vector<4x32xf32>
    %516 = math.exp %515 : vector<4x32xf32>
    %cst_81 = arith.constant 1.000000e+00 : f32
    %517 = vector.broadcast %cst_81 : f32 to vector<4x32xf32>
    %518 = arith.addf %517, %516 : vector<4x32xf32>
    %519 = arith.divf %517, %518 : vector<4x32xf32>
    %520 = arith.mulf %511, %490 : vector<4x32xf32>
    %521 = arith.mulf %505, %513 : vector<4x32xf32>
    %522 = arith.addf %520, %521 : vector<4x32xf32>
    %523 = math.tanh %522 : vector<4x32xf32>
    %524 = arith.mulf %519, %523 : vector<4x32xf32>
    %525 = vector.extract_strided_slice %499 {offsets = [0, 0], sizes = [4, 32], strides = [1, 1]} : vector<4x128xf32> to vector<4x32xf32>
    %526 = arith.negf %525 : vector<4x32xf32>
    %527 = math.exp %526 : vector<4x32xf32>
    %cst_82 = arith.constant 1.000000e+00 : f32
    %528 = vector.broadcast %cst_82 : f32 to vector<4x32xf32>
    %529 = arith.addf %528, %527 : vector<4x32xf32>
    %530 = arith.divf %528, %529 : vector<4x32xf32>
    %531 = vector.extract_strided_slice %499 {offsets = [0, 32], sizes = [4, 32], strides = [1, 1]} : vector<4x128xf32> to vector<4x32xf32>
    %532 = arith.negf %531 : vector<4x32xf32>
    %533 = math.exp %532 : vector<4x32xf32>
    %cst_83 = arith.constant 1.000000e+00 : f32
    %534 = vector.broadcast %cst_83 : f32 to vector<4x32xf32>
    %535 = arith.addf %534, %533 : vector<4x32xf32>
    %536 = arith.divf %534, %535 : vector<4x32xf32>
    %537 = vector.extract_strided_slice %499 {offsets = [0, 64], sizes = [4, 32], strides = [1, 1]} : vector<4x128xf32> to vector<4x32xf32>
    %538 = math.tanh %537 : vector<4x32xf32>
    %539 = vector.extract_strided_slice %499 {offsets = [0, 96], sizes = [4, 32], strides = [1, 1]} : vector<4x128xf32> to vector<4x32xf32>
    %540 = arith.negf %539 : vector<4x32xf32>
    %541 = math.exp %540 : vector<4x32xf32>
    %cst_84 = arith.constant 1.000000e+00 : f32
    %542 = vector.broadcast %cst_84 : f32 to vector<4x32xf32>
    %543 = arith.addf %542, %541 : vector<4x32xf32>
    %544 = arith.divf %542, %543 : vector<4x32xf32>
    %545 = arith.mulf %536, %491 : vector<4x32xf32>
    %546 = arith.mulf %530, %538 : vector<4x32xf32>
    %547 = arith.addf %545, %546 : vector<4x32xf32>
    %548 = math.tanh %547 : vector<4x32xf32>
    %549 = arith.mulf %544, %548 : vector<4x32xf32>
    %550 = tpu.concatenate %524, %549 in 1 : vector<4x32xf32>, vector<4x32xf32> -> vector<4x64xf32>
    %551 = arith.truncf %550 : vector<4x64xf32> to vector<4x64xbf16>
    %cst_85 = arith.constant dense<0.000000e+00> : vector<4x256xf32>
    %552 = tpu.matmul %551, %488, %cst_85 {dimension_numbers = #tpu.dot_dimension_numbers<[1], [0], [0], [1], [0, 0, 1, 1], [], []>} : vector<4x64xbf16>, vector<64x256xbf16>, vector<4x256xf32> -> vector<4x256xf32>
    %553 = vector.extract_strided_slice %552 {offsets = [0, 0], sizes = [4, 128], strides = [1, 1]} : vector<4x256xf32> to vector<4x128xf32>
    %554 = vector.extract_strided_slice %487 {offsets = [4, 0], sizes = [4, 128], strides = [1, 1]} : vector<32x256xf32> to vector<4x128xf32>
    %555 = arith.addf %553, %554 : vector<4x128xf32>
    %556 = vector.extract_strided_slice %552 {offsets = [0, 128], sizes = [4, 128], strides = [1, 1]} : vector<4x256xf32> to vector<4x128xf32>
    %557 = vector.extract_strided_slice %487 {offsets = [24, 128], sizes = [4, 128], strides = [1, 1]} : vector<32x256xf32> to vector<4x128xf32>
    %558 = arith.addf %556, %557 : vector<4x128xf32>
    %559 = vector.extract_strided_slice %555 {offsets = [0, 0], sizes = [4, 32], strides = [1, 1]} : vector<4x128xf32> to vector<4x32xf32>
    %560 = arith.negf %559 : vector<4x32xf32>
    %561 = math.exp %560 : vector<4x32xf32>
    %cst_86 = arith.constant 1.000000e+00 : f32
    %562 = vector.broadcast %cst_86 : f32 to vector<4x32xf32>
    %563 = arith.addf %562, %561 : vector<4x32xf32>
    %564 = arith.divf %562, %563 : vector<4x32xf32>
    %565 = vector.extract_strided_slice %555 {offsets = [0, 32], sizes = [4, 32], strides = [1, 1]} : vector<4x128xf32> to vector<4x32xf32>
    %566 = arith.negf %565 : vector<4x32xf32>
    %567 = math.exp %566 : vector<4x32xf32>
    %cst_87 = arith.constant 1.000000e+00 : f32
    %568 = vector.broadcast %cst_87 : f32 to vector<4x32xf32>
    %569 = arith.addf %568, %567 : vector<4x32xf32>
    %570 = arith.divf %568, %569 : vector<4x32xf32>
    %571 = vector.extract_strided_slice %555 {offsets = [0, 64], sizes = [4, 32], strides = [1, 1]} : vector<4x128xf32> to vector<4x32xf32>
    %572 = math.tanh %571 : vector<4x32xf32>
    %573 = vector.extract_strided_slice %555 {offsets = [0, 96], sizes = [4, 32], strides = [1, 1]} : vector<4x128xf32> to vector<4x32xf32>
    %574 = arith.negf %573 : vector<4x32xf32>
    %575 = math.exp %574 : vector<4x32xf32>
    %cst_88 = arith.constant 1.000000e+00 : f32
    %576 = vector.broadcast %cst_88 : f32 to vector<4x32xf32>
    %577 = arith.addf %576, %575 : vector<4x32xf32>
    %578 = arith.divf %576, %577 : vector<4x32xf32>
    %579 = arith.mulf %570, %522 : vector<4x32xf32>
    %580 = arith.mulf %564, %572 : vector<4x32xf32>
    %581 = arith.addf %579, %580 : vector<4x32xf32>
    %582 = math.tanh %581 : vector<4x32xf32>
    %583 = arith.mulf %578, %582 : vector<4x32xf32>
    %584 = vector.extract_strided_slice %558 {offsets = [0, 0], sizes = [4, 32], strides = [1, 1]} : vector<4x128xf32> to vector<4x32xf32>
    %585 = arith.negf %584 : vector<4x32xf32>
    %586 = math.exp %585 : vector<4x32xf32>
    %cst_89 = arith.constant 1.000000e+00 : f32
    %587 = vector.broadcast %cst_89 : f32 to vector<4x32xf32>
    %588 = arith.addf %587, %586 : vector<4x32xf32>
    %589 = arith.divf %587, %588 : vector<4x32xf32>
    %590 = vector.extract_strided_slice %558 {offsets = [0, 32], sizes = [4, 32], strides = [1, 1]} : vector<4x128xf32> to vector<4x32xf32>
    %591 = arith.negf %590 : vector<4x32xf32>
    %592 = math.exp %591 : vector<4x32xf32>
    %cst_90 = arith.constant 1.000000e+00 : f32
    %593 = vector.broadcast %cst_90 : f32 to vector<4x32xf32>
    %594 = arith.addf %593, %592 : vector<4x32xf32>
    %595 = arith.divf %593, %594 : vector<4x32xf32>
    %596 = vector.extract_strided_slice %558 {offsets = [0, 64], sizes = [4, 32], strides = [1, 1]} : vector<4x128xf32> to vector<4x32xf32>
    %597 = math.tanh %596 : vector<4x32xf32>
    %598 = vector.extract_strided_slice %558 {offsets = [0, 96], sizes = [4, 32], strides = [1, 1]} : vector<4x128xf32> to vector<4x32xf32>
    %599 = arith.negf %598 : vector<4x32xf32>
    %600 = math.exp %599 : vector<4x32xf32>
    %cst_91 = arith.constant 1.000000e+00 : f32
    %601 = vector.broadcast %cst_91 : f32 to vector<4x32xf32>
    %602 = arith.addf %601, %600 : vector<4x32xf32>
    %603 = arith.divf %601, %602 : vector<4x32xf32>
    %604 = arith.mulf %595, %547 : vector<4x32xf32>
    %605 = arith.mulf %589, %597 : vector<4x32xf32>
    %606 = arith.addf %604, %605 : vector<4x32xf32>
    %607 = math.tanh %606 : vector<4x32xf32>
    %608 = arith.mulf %603, %607 : vector<4x32xf32>
    %609 = tpu.concatenate %583, %608 in 1 : vector<4x32xf32>, vector<4x32xf32> -> vector<4x64xf32>
    %610 = arith.truncf %609 : vector<4x64xf32> to vector<4x64xbf16>
    %cst_92 = arith.constant dense<0.000000e+00> : vector<4x256xf32>
    %611 = tpu.matmul %610, %488, %cst_92 {dimension_numbers = #tpu.dot_dimension_numbers<[1], [0], [0], [1], [0, 0, 1, 1], [], []>} : vector<4x64xbf16>, vector<64x256xbf16>, vector<4x256xf32> -> vector<4x256xf32>
    %612 = vector.extract_strided_slice %611 {offsets = [0, 0], sizes = [4, 128], strides = [1, 1]} : vector<4x256xf32> to vector<4x128xf32>
    %613 = vector.extract_strided_slice %487 {offsets = [8, 0], sizes = [4, 128], strides = [1, 1]} : vector<32x256xf32> to vector<4x128xf32>
    %614 = arith.addf %612, %613 : vector<4x128xf32>
    %615 = vector.extract_strided_slice %611 {offsets = [0, 128], sizes = [4, 128], strides = [1, 1]} : vector<4x256xf32> to vector<4x128xf32>
    %616 = vector.extract_strided_slice %487 {offsets = [20, 128], sizes = [4, 128], strides = [1, 1]} : vector<32x256xf32> to vector<4x128xf32>
    %617 = arith.addf %615, %616 : vector<4x128xf32>
    %618 = vector.extract_strided_slice %614 {offsets = [0, 0], sizes = [4, 32], strides = [1, 1]} : vector<4x128xf32> to vector<4x32xf32>
    %619 = arith.negf %618 : vector<4x32xf32>
    %620 = math.exp %619 : vector<4x32xf32>
    %cst_93 = arith.constant 1.000000e+00 : f32
    %621 = vector.broadcast %cst_93 : f32 to vector<4x32xf32>
    %622 = arith.addf %621, %620 : vector<4x32xf32>
    %623 = arith.divf %621, %622 : vector<4x32xf32>
    %624 = vector.extract_strided_slice %614 {offsets = [0, 32], sizes = [4, 32], strides = [1, 1]} : vector<4x128xf32> to vector<4x32xf32>
    %625 = arith.negf %624 : vector<4x32xf32>
    %626 = math.exp %625 : vector<4x32xf32>
    %cst_94 = arith.constant 1.000000e+00 : f32
    %627 = vector.broadcast %cst_94 : f32 to vector<4x32xf32>
    %628 = arith.addf %627, %626 : vector<4x32xf32>
    %629 = arith.divf %627, %628 : vector<4x32xf32>
    %630 = vector.extract_strided_slice %614 {offsets = [0, 64], sizes = [4, 32], strides = [1, 1]} : vector<4x128xf32> to vector<4x32xf32>
    %631 = math.tanh %630 : vector<4x32xf32>
    %632 = vector.extract_strided_slice %614 {offsets = [0, 96], sizes = [4, 32], strides = [1, 1]} : vector<4x128xf32> to vector<4x32xf32>
    %633 = arith.negf %632 : vector<4x32xf32>
    %634 = math.exp %633 : vector<4x32xf32>
    %cst_95 = arith.constant 1.000000e+00 : f32
    %635 = vector.broadcast %cst_95 : f32 to vector<4x32xf32>
    %636 = arith.addf %635, %634 : vector<4x32xf32>
    %637 = arith.divf %635, %636 : vector<4x32xf32>
    %638 = arith.mulf %629, %581 : vector<4x32xf32>
    %639 = arith.mulf %623, %631 : vector<4x32xf32>
    %640 = arith.addf %638, %639 : vector<4x32xf32>
    %641 = math.tanh %640 : vector<4x32xf32>
    %642 = arith.mulf %637, %641 : vector<4x32xf32>
    %643 = vector.extract_strided_slice %617 {offsets = [0, 0], sizes = [4, 32], strides = [1, 1]} : vector<4x128xf32> to vector<4x32xf32>
    %644 = arith.negf %643 : vector<4x32xf32>
    %645 = math.exp %644 : vector<4x32xf32>
    %cst_96 = arith.constant 1.000000e+00 : f32
    %646 = vector.broadcast %cst_96 : f32 to vector<4x32xf32>
    %647 = arith.addf %646, %645 : vector<4x32xf32>
    %648 = arith.divf %646, %647 : vector<4x32xf32>
    %649 = vector.extract_strided_slice %617 {offsets = [0, 32], sizes = [4, 32], strides = [1, 1]} : vector<4x128xf32> to vector<4x32xf32>
    %650 = arith.negf %649 : vector<4x32xf32>
    %651 = math.exp %650 : vector<4x32xf32>
    %cst_97 = arith.constant 1.000000e+00 : f32
    %652 = vector.broadcast %cst_97 : f32 to vector<4x32xf32>
    %653 = arith.addf %652, %651 : vector<4x32xf32>
    %654 = arith.divf %652, %653 : vector<4x32xf32>
    %655 = vector.extract_strided_slice %617 {offsets = [0, 64], sizes = [4, 32], strides = [1, 1]} : vector<4x128xf32> to vector<4x32xf32>
    %656 = math.tanh %655 : vector<4x32xf32>
    %657 = vector.extract_strided_slice %617 {offsets = [0, 96], sizes = [4, 32], strides = [1, 1]} : vector<4x128xf32> to vector<4x32xf32>
    %658 = arith.negf %657 : vector<4x32xf32>
    %659 = math.exp %658 : vector<4x32xf32>
    %cst_98 = arith.constant 1.000000e+00 : f32
    %660 = vector.broadcast %cst_98 : f32 to vector<4x32xf32>
    %661 = arith.addf %660, %659 : vector<4x32xf32>
    %662 = arith.divf %660, %661 : vector<4x32xf32>
    %663 = arith.mulf %654, %606 : vector<4x32xf32>
    %664 = arith.mulf %648, %656 : vector<4x32xf32>
    %665 = arith.addf %663, %664 : vector<4x32xf32>
    %666 = math.tanh %665 : vector<4x32xf32>
    %667 = arith.mulf %662, %666 : vector<4x32xf32>
    %668 = tpu.concatenate %642, %667 in 1 : vector<4x32xf32>, vector<4x32xf32> -> vector<4x64xf32>
    %669 = arith.truncf %668 : vector<4x64xf32> to vector<4x64xbf16>
    %cst_99 = arith.constant dense<0.000000e+00> : vector<4x256xf32>
    %670 = tpu.matmul %669, %488, %cst_99 {dimension_numbers = #tpu.dot_dimension_numbers<[1], [0], [0], [1], [0, 0, 1, 1], [], []>} : vector<4x64xbf16>, vector<64x256xbf16>, vector<4x256xf32> -> vector<4x256xf32>
    %671 = vector.extract_strided_slice %670 {offsets = [0, 0], sizes = [4, 128], strides = [1, 1]} : vector<4x256xf32> to vector<4x128xf32>
    %672 = vector.extract_strided_slice %487 {offsets = [12, 0], sizes = [4, 128], strides = [1, 1]} : vector<32x256xf32> to vector<4x128xf32>
    %673 = arith.addf %671, %672 : vector<4x128xf32>
    %674 = vector.extract_strided_slice %670 {offsets = [0, 128], sizes = [4, 128], strides = [1, 1]} : vector<4x256xf32> to vector<4x128xf32>
    %675 = vector.extract_strided_slice %487 {offsets = [16, 128], sizes = [4, 128], strides = [1, 1]} : vector<32x256xf32> to vector<4x128xf32>
    %676 = arith.addf %674, %675 : vector<4x128xf32>
    %677 = vector.extract_strided_slice %673 {offsets = [0, 0], sizes = [4, 32], strides = [1, 1]} : vector<4x128xf32> to vector<4x32xf32>
    %678 = arith.negf %677 : vector<4x32xf32>
    %679 = math.exp %678 : vector<4x32xf32>
    %cst_100 = arith.constant 1.000000e+00 : f32
    %680 = vector.broadcast %cst_100 : f32 to vector<4x32xf32>
    %681 = arith.addf %680, %679 : vector<4x32xf32>
    %682 = arith.divf %680, %681 : vector<4x32xf32>
    %683 = vector.extract_strided_slice %673 {offsets = [0, 32], sizes = [4, 32], strides = [1, 1]} : vector<4x128xf32> to vector<4x32xf32>
    %684 = arith.negf %683 : vector<4x32xf32>
    %685 = math.exp %684 : vector<4x32xf32>
    %cst_101 = arith.constant 1.000000e+00 : f32
    %686 = vector.broadcast %cst_101 : f32 to vector<4x32xf32>
    %687 = arith.addf %686, %685 : vector<4x32xf32>
    %688 = arith.divf %686, %687 : vector<4x32xf32>
    %689 = vector.extract_strided_slice %673 {offsets = [0, 64], sizes = [4, 32], strides = [1, 1]} : vector<4x128xf32> to vector<4x32xf32>
    %690 = math.tanh %689 : vector<4x32xf32>
    %691 = vector.extract_strided_slice %673 {offsets = [0, 96], sizes = [4, 32], strides = [1, 1]} : vector<4x128xf32> to vector<4x32xf32>
    %692 = arith.negf %691 : vector<4x32xf32>
    %693 = math.exp %692 : vector<4x32xf32>
    %cst_102 = arith.constant 1.000000e+00 : f32
    %694 = vector.broadcast %cst_102 : f32 to vector<4x32xf32>
    %695 = arith.addf %694, %693 : vector<4x32xf32>
    %696 = arith.divf %694, %695 : vector<4x32xf32>
    %697 = arith.mulf %688, %640 : vector<4x32xf32>
    %698 = arith.mulf %682, %690 : vector<4x32xf32>
    %699 = arith.addf %697, %698 : vector<4x32xf32>
    %700 = math.tanh %699 : vector<4x32xf32>
    %701 = arith.mulf %696, %700 : vector<4x32xf32>
    %702 = vector.extract_strided_slice %676 {offsets = [0, 0], sizes = [4, 32], strides = [1, 1]} : vector<4x128xf32> to vector<4x32xf32>
    %703 = arith.negf %702 : vector<4x32xf32>
    %704 = math.exp %703 : vector<4x32xf32>
    %cst_103 = arith.constant 1.000000e+00 : f32
    %705 = vector.broadcast %cst_103 : f32 to vector<4x32xf32>
    %706 = arith.addf %705, %704 : vector<4x32xf32>
    %707 = arith.divf %705, %706 : vector<4x32xf32>
    %708 = vector.extract_strided_slice %676 {offsets = [0, 32], sizes = [4, 32], strides = [1, 1]} : vector<4x128xf32> to vector<4x32xf32>
    %709 = arith.negf %708 : vector<4x32xf32>
    %710 = math.exp %709 : vector<4x32xf32>
    %cst_104 = arith.constant 1.000000e+00 : f32
    %711 = vector.broadcast %cst_104 : f32 to vector<4x32xf32>
    %712 = arith.addf %711, %710 : vector<4x32xf32>
    %713 = arith.divf %711, %712 : vector<4x32xf32>
    %714 = vector.extract_strided_slice %676 {offsets = [0, 64], sizes = [4, 32], strides = [1, 1]} : vector<4x128xf32> to vector<4x32xf32>
    %715 = math.tanh %714 : vector<4x32xf32>
    %716 = vector.extract_strided_slice %676 {offsets = [0, 96], sizes = [4, 32], strides = [1, 1]} : vector<4x128xf32> to vector<4x32xf32>
    %717 = arith.negf %716 : vector<4x32xf32>
    %718 = math.exp %717 : vector<4x32xf32>
    %cst_105 = arith.constant 1.000000e+00 : f32
    %719 = vector.broadcast %cst_105 : f32 to vector<4x32xf32>
    %720 = arith.addf %719, %718 : vector<4x32xf32>
    %721 = arith.divf %719, %720 : vector<4x32xf32>
    %722 = arith.mulf %713, %665 : vector<4x32xf32>
    %723 = arith.mulf %707, %715 : vector<4x32xf32>
    %724 = arith.addf %722, %723 : vector<4x32xf32>
    %725 = math.tanh %724 : vector<4x32xf32>
    %726 = arith.mulf %721, %725 : vector<4x32xf32>
    %727 = tpu.concatenate %701, %726 in 1 : vector<4x32xf32>, vector<4x32xf32> -> vector<4x64xf32>
    %728 = arith.truncf %727 : vector<4x64xf32> to vector<4x64xbf16>
    %cst_106 = arith.constant dense<0.000000e+00> : vector<4x256xf32>
    %729 = tpu.matmul %728, %488, %cst_106 {dimension_numbers = #tpu.dot_dimension_numbers<[1], [0], [0], [1], [0, 0, 1, 1], [], []>} : vector<4x64xbf16>, vector<64x256xbf16>, vector<4x256xf32> -> vector<4x256xf32>
    %730 = vector.extract_strided_slice %729 {offsets = [0, 0], sizes = [4, 128], strides = [1, 1]} : vector<4x256xf32> to vector<4x128xf32>
    %731 = vector.extract_strided_slice %487 {offsets = [16, 0], sizes = [4, 128], strides = [1, 1]} : vector<32x256xf32> to vector<4x128xf32>
    %732 = arith.addf %730, %731 : vector<4x128xf32>
    %733 = vector.extract_strided_slice %729 {offsets = [0, 128], sizes = [4, 128], strides = [1, 1]} : vector<4x256xf32> to vector<4x128xf32>
    %734 = vector.extract_strided_slice %487 {offsets = [12, 128], sizes = [4, 128], strides = [1, 1]} : vector<32x256xf32> to vector<4x128xf32>
    %735 = arith.addf %733, %734 : vector<4x128xf32>
    %736 = vector.extract_strided_slice %732 {offsets = [0, 0], sizes = [4, 32], strides = [1, 1]} : vector<4x128xf32> to vector<4x32xf32>
    %737 = arith.negf %736 : vector<4x32xf32>
    %738 = math.exp %737 : vector<4x32xf32>
    %cst_107 = arith.constant 1.000000e+00 : f32
    %739 = vector.broadcast %cst_107 : f32 to vector<4x32xf32>
    %740 = arith.addf %739, %738 : vector<4x32xf32>
    %741 = arith.divf %739, %740 : vector<4x32xf32>
    %742 = vector.extract_strided_slice %732 {offsets = [0, 32], sizes = [4, 32], strides = [1, 1]} : vector<4x128xf32> to vector<4x32xf32>
    %743 = arith.negf %742 : vector<4x32xf32>
    %744 = math.exp %743 : vector<4x32xf32>
    %cst_108 = arith.constant 1.000000e+00 : f32
    %745 = vector.broadcast %cst_108 : f32 to vector<4x32xf32>
    %746 = arith.addf %745, %744 : vector<4x32xf32>
    %747 = arith.divf %745, %746 : vector<4x32xf32>
    %748 = vector.extract_strided_slice %732 {offsets = [0, 64], sizes = [4, 32], strides = [1, 1]} : vector<4x128xf32> to vector<4x32xf32>
    %749 = math.tanh %748 : vector<4x32xf32>
    %750 = vector.extract_strided_slice %732 {offsets = [0, 96], sizes = [4, 32], strides = [1, 1]} : vector<4x128xf32> to vector<4x32xf32>
    %751 = arith.negf %750 : vector<4x32xf32>
    %752 = math.exp %751 : vector<4x32xf32>
    %cst_109 = arith.constant 1.000000e+00 : f32
    %753 = vector.broadcast %cst_109 : f32 to vector<4x32xf32>
    %754 = arith.addf %753, %752 : vector<4x32xf32>
    %755 = arith.divf %753, %754 : vector<4x32xf32>
    %756 = arith.mulf %747, %699 : vector<4x32xf32>
    %757 = arith.mulf %741, %749 : vector<4x32xf32>
    %758 = arith.addf %756, %757 : vector<4x32xf32>
    %759 = math.tanh %758 : vector<4x32xf32>
    %760 = arith.mulf %755, %759 : vector<4x32xf32>
    %761 = vector.extract_strided_slice %735 {offsets = [0, 0], sizes = [4, 32], strides = [1, 1]} : vector<4x128xf32> to vector<4x32xf32>
    %762 = arith.negf %761 : vector<4x32xf32>
    %763 = math.exp %762 : vector<4x32xf32>
    %cst_110 = arith.constant 1.000000e+00 : f32
    %764 = vector.broadcast %cst_110 : f32 to vector<4x32xf32>
    %765 = arith.addf %764, %763 : vector<4x32xf32>
    %766 = arith.divf %764, %765 : vector<4x32xf32>
    %767 = vector.extract_strided_slice %735 {offsets = [0, 32], sizes = [4, 32], strides = [1, 1]} : vector<4x128xf32> to vector<4x32xf32>
    %768 = arith.negf %767 : vector<4x32xf32>
    %769 = math.exp %768 : vector<4x32xf32>
    %cst_111 = arith.constant 1.000000e+00 : f32
    %770 = vector.broadcast %cst_111 : f32 to vector<4x32xf32>
    %771 = arith.addf %770, %769 : vector<4x32xf32>
    %772 = arith.divf %770, %771 : vector<4x32xf32>
    %773 = vector.extract_strided_slice %735 {offsets = [0, 64], sizes = [4, 32], strides = [1, 1]} : vector<4x128xf32> to vector<4x32xf32>
    %774 = math.tanh %773 : vector<4x32xf32>
    %775 = vector.extract_strided_slice %735 {offsets = [0, 96], sizes = [4, 32], strides = [1, 1]} : vector<4x128xf32> to vector<4x32xf32>
    %776 = arith.negf %775 : vector<4x32xf32>
    %777 = math.exp %776 : vector<4x32xf32>
    %cst_112 = arith.constant 1.000000e+00 : f32
    %778 = vector.broadcast %cst_112 : f32 to vector<4x32xf32>
    %779 = arith.addf %778, %777 : vector<4x32xf32>
    %780 = arith.divf %778, %779 : vector<4x32xf32>
    %781 = arith.mulf %772, %724 : vector<4x32xf32>
    %782 = arith.mulf %766, %774 : vector<4x32xf32>
    %783 = arith.addf %781, %782 : vector<4x32xf32>
    %784 = math.tanh %783 : vector<4x32xf32>
    %785 = arith.mulf %780, %784 : vector<4x32xf32>
    %786 = tpu.concatenate %760, %785 in 1 : vector<4x32xf32>, vector<4x32xf32> -> vector<4x64xf32>
    %787 = arith.truncf %786 : vector<4x64xf32> to vector<4x64xbf16>
    %cst_113 = arith.constant dense<0.000000e+00> : vector<4x256xf32>
    %788 = tpu.matmul %787, %488, %cst_113 {dimension_numbers = #tpu.dot_dimension_numbers<[1], [0], [0], [1], [0, 0, 1, 1], [], []>} : vector<4x64xbf16>, vector<64x256xbf16>, vector<4x256xf32> -> vector<4x256xf32>
    %789 = vector.extract_strided_slice %788 {offsets = [0, 0], sizes = [4, 128], strides = [1, 1]} : vector<4x256xf32> to vector<4x128xf32>
    %790 = vector.extract_strided_slice %487 {offsets = [20, 0], sizes = [4, 128], strides = [1, 1]} : vector<32x256xf32> to vector<4x128xf32>
    %791 = arith.addf %789, %790 : vector<4x128xf32>
    %792 = vector.extract_strided_slice %788 {offsets = [0, 128], sizes = [4, 128], strides = [1, 1]} : vector<4x256xf32> to vector<4x128xf32>
    %793 = vector.extract_strided_slice %487 {offsets = [8, 128], sizes = [4, 128], strides = [1, 1]} : vector<32x256xf32> to vector<4x128xf32>
    %794 = arith.addf %792, %793 : vector<4x128xf32>
    %795 = vector.extract_strided_slice %791 {offsets = [0, 0], sizes = [4, 32], strides = [1, 1]} : vector<4x128xf32> to vector<4x32xf32>
    %796 = arith.negf %795 : vector<4x32xf32>
    %797 = math.exp %796 : vector<4x32xf32>
    %cst_114 = arith.constant 1.000000e+00 : f32
    %798 = vector.broadcast %cst_114 : f32 to vector<4x32xf32>
    %799 = arith.addf %798, %797 : vector<4x32xf32>
    %800 = arith.divf %798, %799 : vector<4x32xf32>
    %801 = vector.extract_strided_slice %791 {offsets = [0, 32], sizes = [4, 32], strides = [1, 1]} : vector<4x128xf32> to vector<4x32xf32>
    %802 = arith.negf %801 : vector<4x32xf32>
    %803 = math.exp %802 : vector<4x32xf32>
    %cst_115 = arith.constant 1.000000e+00 : f32
    %804 = vector.broadcast %cst_115 : f32 to vector<4x32xf32>
    %805 = arith.addf %804, %803 : vector<4x32xf32>
    %806 = arith.divf %804, %805 : vector<4x32xf32>
    %807 = vector.extract_strided_slice %791 {offsets = [0, 64], sizes = [4, 32], strides = [1, 1]} : vector<4x128xf32> to vector<4x32xf32>
    %808 = math.tanh %807 : vector<4x32xf32>
    %809 = vector.extract_strided_slice %791 {offsets = [0, 96], sizes = [4, 32], strides = [1, 1]} : vector<4x128xf32> to vector<4x32xf32>
    %810 = arith.negf %809 : vector<4x32xf32>
    %811 = math.exp %810 : vector<4x32xf32>
    %cst_116 = arith.constant 1.000000e+00 : f32
    %812 = vector.broadcast %cst_116 : f32 to vector<4x32xf32>
    %813 = arith.addf %812, %811 : vector<4x32xf32>
    %814 = arith.divf %812, %813 : vector<4x32xf32>
    %815 = arith.mulf %806, %758 : vector<4x32xf32>
    %816 = arith.mulf %800, %808 : vector<4x32xf32>
    %817 = arith.addf %815, %816 : vector<4x32xf32>
    %818 = math.tanh %817 : vector<4x32xf32>
    %819 = arith.mulf %814, %818 : vector<4x32xf32>
    %820 = vector.extract_strided_slice %794 {offsets = [0, 0], sizes = [4, 32], strides = [1, 1]} : vector<4x128xf32> to vector<4x32xf32>
    %821 = arith.negf %820 : vector<4x32xf32>
    %822 = math.exp %821 : vector<4x32xf32>
    %cst_117 = arith.constant 1.000000e+00 : f32
    %823 = vector.broadcast %cst_117 : f32 to vector<4x32xf32>
    %824 = arith.addf %823, %822 : vector<4x32xf32>
    %825 = arith.divf %823, %824 : vector<4x32xf32>
    %826 = vector.extract_strided_slice %794 {offsets = [0, 32], sizes = [4, 32], strides = [1, 1]} : vector<4x128xf32> to vector<4x32xf32>
    %827 = arith.negf %826 : vector<4x32xf32>
    %828 = math.exp %827 : vector<4x32xf32>
    %cst_118 = arith.constant 1.000000e+00 : f32
    %829 = vector.broadcast %cst_118 : f32 to vector<4x32xf32>
    %830 = arith.addf %829, %828 : vector<4x32xf32>
    %831 = arith.divf %829, %830 : vector<4x32xf32>
    %832 = vector.extract_strided_slice %794 {offsets = [0, 64], sizes = [4, 32], strides = [1, 1]} : vector<4x128xf32> to vector<4x32xf32>
    %833 = math.tanh %832 : vector<4x32xf32>
    %834 = vector.extract_strided_slice %794 {offsets = [0, 96], sizes = [4, 32], strides = [1, 1]} : vector<4x128xf32> to vector<4x32xf32>
    %835 = arith.negf %834 : vector<4x32xf32>
    %836 = math.exp %835 : vector<4x32xf32>
    %cst_119 = arith.constant 1.000000e+00 : f32
    %837 = vector.broadcast %cst_119 : f32 to vector<4x32xf32>
    %838 = arith.addf %837, %836 : vector<4x32xf32>
    %839 = arith.divf %837, %838 : vector<4x32xf32>
    %840 = arith.mulf %831, %783 : vector<4x32xf32>
    %841 = arith.mulf %825, %833 : vector<4x32xf32>
    %842 = arith.addf %840, %841 : vector<4x32xf32>
    %843 = math.tanh %842 : vector<4x32xf32>
    %844 = arith.mulf %839, %843 : vector<4x32xf32>
    %845 = tpu.concatenate %819, %844 in 1 : vector<4x32xf32>, vector<4x32xf32> -> vector<4x64xf32>
    %846 = arith.truncf %845 : vector<4x64xf32> to vector<4x64xbf16>
    %cst_120 = arith.constant dense<0.000000e+00> : vector<4x256xf32>
    %847 = tpu.matmul %846, %488, %cst_120 {dimension_numbers = #tpu.dot_dimension_numbers<[1], [0], [0], [1], [0, 0, 1, 1], [], []>} : vector<4x64xbf16>, vector<64x256xbf16>, vector<4x256xf32> -> vector<4x256xf32>
    %848 = vector.extract_strided_slice %847 {offsets = [0, 0], sizes = [4, 128], strides = [1, 1]} : vector<4x256xf32> to vector<4x128xf32>
    %849 = vector.extract_strided_slice %487 {offsets = [24, 0], sizes = [4, 128], strides = [1, 1]} : vector<32x256xf32> to vector<4x128xf32>
    %850 = arith.addf %848, %849 : vector<4x128xf32>
    %851 = vector.extract_strided_slice %847 {offsets = [0, 128], sizes = [4, 128], strides = [1, 1]} : vector<4x256xf32> to vector<4x128xf32>
    %852 = vector.extract_strided_slice %487 {offsets = [4, 128], sizes = [4, 128], strides = [1, 1]} : vector<32x256xf32> to vector<4x128xf32>
    %853 = arith.addf %851, %852 : vector<4x128xf32>
    %854 = vector.extract_strided_slice %850 {offsets = [0, 0], sizes = [4, 32], strides = [1, 1]} : vector<4x128xf32> to vector<4x32xf32>
    %855 = arith.negf %854 : vector<4x32xf32>
    %856 = math.exp %855 : vector<4x32xf32>
    %cst_121 = arith.constant 1.000000e+00 : f32
    %857 = vector.broadcast %cst_121 : f32 to vector<4x32xf32>
    %858 = arith.addf %857, %856 : vector<4x32xf32>
    %859 = arith.divf %857, %858 : vector<4x32xf32>
    %860 = vector.extract_strided_slice %850 {offsets = [0, 32], sizes = [4, 32], strides = [1, 1]} : vector<4x128xf32> to vector<4x32xf32>
    %861 = arith.negf %860 : vector<4x32xf32>
    %862 = math.exp %861 : vector<4x32xf32>
    %cst_122 = arith.constant 1.000000e+00 : f32
    %863 = vector.broadcast %cst_122 : f32 to vector<4x32xf32>
    %864 = arith.addf %863, %862 : vector<4x32xf32>
    %865 = arith.divf %863, %864 : vector<4x32xf32>
    %866 = vector.extract_strided_slice %850 {offsets = [0, 64], sizes = [4, 32], strides = [1, 1]} : vector<4x128xf32> to vector<4x32xf32>
    %867 = math.tanh %866 : vector<4x32xf32>
    %868 = vector.extract_strided_slice %850 {offsets = [0, 96], sizes = [4, 32], strides = [1, 1]} : vector<4x128xf32> to vector<4x32xf32>
    %869 = arith.negf %868 : vector<4x32xf32>
    %870 = math.exp %869 : vector<4x32xf32>
    %cst_123 = arith.constant 1.000000e+00 : f32
    %871 = vector.broadcast %cst_123 : f32 to vector<4x32xf32>
    %872 = arith.addf %871, %870 : vector<4x32xf32>
    %873 = arith.divf %871, %872 : vector<4x32xf32>
    %874 = arith.mulf %865, %817 : vector<4x32xf32>
    %875 = arith.mulf %859, %867 : vector<4x32xf32>
    %876 = arith.addf %874, %875 : vector<4x32xf32>
    %877 = math.tanh %876 : vector<4x32xf32>
    %878 = arith.mulf %873, %877 : vector<4x32xf32>
    %879 = vector.extract_strided_slice %853 {offsets = [0, 0], sizes = [4, 32], strides = [1, 1]} : vector<4x128xf32> to vector<4x32xf32>
    %880 = arith.negf %879 : vector<4x32xf32>
    %881 = math.exp %880 : vector<4x32xf32>
    %cst_124 = arith.constant 1.000000e+00 : f32
    %882 = vector.broadcast %cst_124 : f32 to vector<4x32xf32>
    %883 = arith.addf %882, %881 : vector<4x32xf32>
    %884 = arith.divf %882, %883 : vector<4x32xf32>
    %885 = vector.extract_strided_slice %853 {offsets = [0, 32], sizes = [4, 32], strides = [1, 1]} : vector<4x128xf32> to vector<4x32xf32>
    %886 = arith.negf %885 : vector<4x32xf32>
    %887 = math.exp %886 : vector<4x32xf32>
    %cst_125 = arith.constant 1.000000e+00 : f32
    %888 = vector.broadcast %cst_125 : f32 to vector<4x32xf32>
    %889 = arith.addf %888, %887 : vector<4x32xf32>
    %890 = arith.divf %888, %889 : vector<4x32xf32>
    %891 = vector.extract_strided_slice %853 {offsets = [0, 64], sizes = [4, 32], strides = [1, 1]} : vector<4x128xf32> to vector<4x32xf32>
    %892 = math.tanh %891 : vector<4x32xf32>
    %893 = vector.extract_strided_slice %853 {offsets = [0, 96], sizes = [4, 32], strides = [1, 1]} : vector<4x128xf32> to vector<4x32xf32>
    %894 = arith.negf %893 : vector<4x32xf32>
    %895 = math.exp %894 : vector<4x32xf32>
    %cst_126 = arith.constant 1.000000e+00 : f32
    %896 = vector.broadcast %cst_126 : f32 to vector<4x32xf32>
    %897 = arith.addf %896, %895 : vector<4x32xf32>
    %898 = arith.divf %896, %897 : vector<4x32xf32>
    %899 = arith.mulf %890, %842 : vector<4x32xf32>
    %900 = arith.mulf %884, %892 : vector<4x32xf32>
    %901 = arith.addf %899, %900 : vector<4x32xf32>
    %902 = math.tanh %901 : vector<4x32xf32>
    %903 = arith.mulf %898, %902 : vector<4x32xf32>
    %904 = tpu.concatenate %878, %903 in 1 : vector<4x32xf32>, vector<4x32xf32> -> vector<4x64xf32>
    %905 = arith.truncf %904 : vector<4x64xf32> to vector<4x64xbf16>
    %cst_127 = arith.constant dense<0.000000e+00> : vector<4x256xf32>
    %906 = tpu.matmul %905, %488, %cst_127 {dimension_numbers = #tpu.dot_dimension_numbers<[1], [0], [0], [1], [0, 0, 1, 1], [], []>} : vector<4x64xbf16>, vector<64x256xbf16>, vector<4x256xf32> -> vector<4x256xf32>
    %907 = vector.extract_strided_slice %906 {offsets = [0, 0], sizes = [4, 128], strides = [1, 1]} : vector<4x256xf32> to vector<4x128xf32>
    %908 = vector.extract_strided_slice %487 {offsets = [28, 0], sizes = [4, 128], strides = [1, 1]} : vector<32x256xf32> to vector<4x128xf32>
    %909 = arith.addf %907, %908 : vector<4x128xf32>
    %910 = vector.extract_strided_slice %906 {offsets = [0, 128], sizes = [4, 128], strides = [1, 1]} : vector<4x256xf32> to vector<4x128xf32>
    %911 = vector.extract_strided_slice %487 {offsets = [0, 128], sizes = [4, 128], strides = [1, 1]} : vector<32x256xf32> to vector<4x128xf32>
    %912 = arith.addf %910, %911 : vector<4x128xf32>
    %913 = vector.extract_strided_slice %909 {offsets = [0, 0], sizes = [4, 32], strides = [1, 1]} : vector<4x128xf32> to vector<4x32xf32>
    %914 = arith.negf %913 : vector<4x32xf32>
    %915 = math.exp %914 : vector<4x32xf32>
    %cst_128 = arith.constant 1.000000e+00 : f32
    %916 = vector.broadcast %cst_128 : f32 to vector<4x32xf32>
    %917 = arith.addf %916, %915 : vector<4x32xf32>
    %918 = arith.divf %916, %917 : vector<4x32xf32>
    %919 = vector.extract_strided_slice %909 {offsets = [0, 32], sizes = [4, 32], strides = [1, 1]} : vector<4x128xf32> to vector<4x32xf32>
    %920 = arith.negf %919 : vector<4x32xf32>
    %921 = math.exp %920 : vector<4x32xf32>
    %cst_129 = arith.constant 1.000000e+00 : f32
    %922 = vector.broadcast %cst_129 : f32 to vector<4x32xf32>
    %923 = arith.addf %922, %921 : vector<4x32xf32>
    %924 = arith.divf %922, %923 : vector<4x32xf32>
    %925 = vector.extract_strided_slice %909 {offsets = [0, 64], sizes = [4, 32], strides = [1, 1]} : vector<4x128xf32> to vector<4x32xf32>
    %926 = math.tanh %925 : vector<4x32xf32>
    %927 = vector.extract_strided_slice %909 {offsets = [0, 96], sizes = [4, 32], strides = [1, 1]} : vector<4x128xf32> to vector<4x32xf32>
    %928 = arith.negf %927 : vector<4x32xf32>
    %929 = math.exp %928 : vector<4x32xf32>
    %cst_130 = arith.constant 1.000000e+00 : f32
    %930 = vector.broadcast %cst_130 : f32 to vector<4x32xf32>
    %931 = arith.addf %930, %929 : vector<4x32xf32>
    %932 = arith.divf %930, %931 : vector<4x32xf32>
    %933 = arith.mulf %924, %876 : vector<4x32xf32>
    %934 = arith.mulf %918, %926 : vector<4x32xf32>
    %935 = arith.addf %933, %934 : vector<4x32xf32>
    %936 = math.tanh %935 : vector<4x32xf32>
    %937 = arith.mulf %932, %936 : vector<4x32xf32>
    %938 = vector.extract_strided_slice %912 {offsets = [0, 0], sizes = [4, 32], strides = [1, 1]} : vector<4x128xf32> to vector<4x32xf32>
    %939 = arith.negf %938 : vector<4x32xf32>
    %940 = math.exp %939 : vector<4x32xf32>
    %cst_131 = arith.constant 1.000000e+00 : f32
    %941 = vector.broadcast %cst_131 : f32 to vector<4x32xf32>
    %942 = arith.addf %941, %940 : vector<4x32xf32>
    %943 = arith.divf %941, %942 : vector<4x32xf32>
    %944 = vector.extract_strided_slice %912 {offsets = [0, 32], sizes = [4, 32], strides = [1, 1]} : vector<4x128xf32> to vector<4x32xf32>
    %945 = arith.negf %944 : vector<4x32xf32>
    %946 = math.exp %945 : vector<4x32xf32>
    %cst_132 = arith.constant 1.000000e+00 : f32
    %947 = vector.broadcast %cst_132 : f32 to vector<4x32xf32>
    %948 = arith.addf %947, %946 : vector<4x32xf32>
    %949 = arith.divf %947, %948 : vector<4x32xf32>
    %950 = vector.extract_strided_slice %912 {offsets = [0, 64], sizes = [4, 32], strides = [1, 1]} : vector<4x128xf32> to vector<4x32xf32>
    %951 = math.tanh %950 : vector<4x32xf32>
    %952 = vector.extract_strided_slice %912 {offsets = [0, 96], sizes = [4, 32], strides = [1, 1]} : vector<4x128xf32> to vector<4x32xf32>
    %953 = arith.negf %952 : vector<4x32xf32>
    %954 = math.exp %953 : vector<4x32xf32>
    %cst_133 = arith.constant 1.000000e+00 : f32
    %955 = vector.broadcast %cst_133 : f32 to vector<4x32xf32>
    %956 = arith.addf %955, %954 : vector<4x32xf32>
    %957 = arith.divf %955, %956 : vector<4x32xf32>
    %958 = arith.mulf %949, %901 : vector<4x32xf32>
    %959 = arith.mulf %943, %951 : vector<4x32xf32>
    %960 = arith.addf %958, %959 : vector<4x32xf32>
    %961 = math.tanh %960 : vector<4x32xf32>
    %962 = arith.mulf %957, %961 : vector<4x32xf32>
    %963 = tpu.concatenate %937, %962 in 1 : vector<4x32xf32>, vector<4x32xf32> -> vector<4x64xf32>
    %964 = arith.truncf %481 : vector<2x64xf32> to vector<2x64xbf16>
    %c0_134 = arith.constant 0 : index
    %c0_135 = arith.constant 0 : index
    %965 = vector.load %arg10[%c0_134, %c0_135] : memref<64x128xbf16, #tpu.memory_space<vmem>>, vector<64x128xbf16>
    %cst_136 = arith.constant dense<0.000000e+00> : vector<2x128xf32>
    %966 = tpu.matmul %964, %965, %cst_136 {dimension_numbers = #tpu.dot_dimension_numbers<[1], [0], [0], [1], [0, 0, 1, 1], [], []>} : vector<2x64xbf16>, vector<64x128xbf16>, vector<2x128xf32> -> vector<2x128xf32>
    %c0_137 = arith.constant 0 : index
    %c0_138 = arith.constant 0 : index
    %967 = vector.load %arg11[%c0_137, %c0_138] : memref<1x128xf32, #tpu.memory_space<vmem>>, vector<1x128xf32>
    %968 = vector.broadcast %967 : vector<1x128xf32> to vector<2x128xf32>
    %969 = arith.addf %966, %968 : vector<2x128xf32>
    %970 = vector.extract_strided_slice %969 {offsets = [0, 0], sizes = [2, 64], strides = [1, 1]} : vector<2x128xf32> to vector<2x64xf32>
    %971 = vector.extract_strided_slice %969 {offsets = [0, 64], sizes = [2, 64], strides = [1, 1]} : vector<2x128xf32> to vector<2x64xf32>
    %c0_139 = arith.constant 0 : index
    %c0_140 = arith.constant 0 : index
    %972 = vector.load %arg14[%c0_139, %c0_140] : memref<2x64xf32, #tpu.memory_space<vmem>>, vector<2x64xf32>
    %cst_141 = arith.constant 5.000000e-01 : f32
    %973 = vector.broadcast %cst_141 : f32 to vector<2x64xf32>
    %974 = arith.mulf %973, %971 : vector<2x64xf32>
    %975 = math.exp %974 : vector<2x64xf32>
    %976 = arith.mulf %972, %975 : vector<2x64xf32>
    %977 = arith.addf %976, %970 : vector<2x64xf32>
    %978 = arith.truncf %963 : vector<4x64xf32> to vector<4x64xbf16>
    %c0_142 = arith.constant 0 : index
    %c0_143 = arith.constant 0 : index
    %979 = vector.load %arg12[%c0_142, %c0_143] : memref<64x128xbf16, #tpu.memory_space<vmem>>, vector<64x128xbf16>
    %cst_144 = arith.constant dense<0.000000e+00> : vector<4x128xf32>
    %980 = tpu.matmul %978, %979, %cst_144 {dimension_numbers = #tpu.dot_dimension_numbers<[1], [0], [0], [1], [0, 0, 1, 1], [], []>} : vector<4x64xbf16>, vector<64x128xbf16>, vector<4x128xf32> -> vector<4x128xf32>
    %c0_145 = arith.constant 0 : index
    %c0_146 = arith.constant 0 : index
    %981 = vector.load %arg13[%c0_145, %c0_146] : memref<1x128xf32, #tpu.memory_space<vmem>>, vector<1x128xf32>
    %982 = vector.broadcast %981 : vector<1x128xf32> to vector<4x128xf32>
    %983 = arith.addf %980, %982 : vector<4x128xf32>
    %984 = vector.extract_strided_slice %983 {offsets = [0, 0], sizes = [4, 64], strides = [1, 1]} : vector<4x128xf32> to vector<4x64xf32>
    %985 = vector.extract_strided_slice %983 {offsets = [0, 64], sizes = [4, 64], strides = [1, 1]} : vector<4x128xf32> to vector<4x64xf32>
    %c0_147 = arith.constant 0 : index
    %c0_148 = arith.constant 0 : index
    %986 = vector.load %arg15[%c0_147, %c0_148] : memref<4x64xf32, #tpu.memory_space<vmem>>, vector<4x64xf32>
    %cst_149 = arith.constant 5.000000e-01 : f32
    %987 = vector.broadcast %cst_149 : f32 to vector<4x64xf32>
    %988 = arith.mulf %987, %985 : vector<4x64xf32>
    %989 = math.exp %988 : vector<4x64xf32>
    %990 = arith.mulf %986, %989 : vector<4x64xf32>
    %991 = arith.addf %990, %984 : vector<4x64xf32>
    %992 = vector.extract_strided_slice %991 {offsets = [0, 0], sizes = [2, 64], strides = [1, 1]} : vector<4x64xf32> to vector<2x64xf32>
    %993 = vector.extract_strided_slice %991 {offsets = [2, 0], sizes = [2, 64], strides = [1, 1]} : vector<4x64xf32> to vector<2x64xf32>
    %994 = vector.extract_strided_slice %984 {offsets = [0, 0], sizes = [2, 64], strides = [1, 1]} : vector<4x64xf32> to vector<2x64xf32>
    %995 = vector.extract_strided_slice %985 {offsets = [0, 0], sizes = [2, 64], strides = [1, 1]} : vector<4x64xf32> to vector<2x64xf32>
    %996 = arith.mulf %977, %992 : vector<2x64xf32>
    %cst_150 = arith.constant dense<0.000000e+00> : vector<2xf32>
    %997 = vector.multi_reduction <add>, %996, %cst_150 [1] : vector<2x64xf32> to vector<2xf32>
    %998 = vector.shape_cast %997 : vector<2xf32> to vector<2x1xf32>
    %999 = arith.mulf %977, %977 : vector<2x64xf32>
    %cst_151 = arith.constant dense<0.000000e+00> : vector<2xf32>
    %1000 = vector.multi_reduction <add>, %999, %cst_151 [1] : vector<2x64xf32> to vector<2xf32>
    %1001 = vector.shape_cast %1000 : vector<2xf32> to vector<2x1xf32>
    %cst_152 = arith.constant 1.000000e-16 : f32
    %1002 = vector.broadcast %cst_152 : f32 to vector<2x1xf32>
    %1003 = arith.maximumf %1001, %1002 : vector<2x1xf32>
    %1004 = arith.mulf %992, %992 : vector<2x64xf32>
    %cst_153 = arith.constant dense<0.000000e+00> : vector<2xf32>
    %1005 = vector.multi_reduction <add>, %1004, %cst_153 [1] : vector<2x64xf32> to vector<2xf32>
    %1006 = vector.shape_cast %1005 : vector<2xf32> to vector<2x1xf32>
    %cst_154 = arith.constant 1.000000e-16 : f32
    %1007 = vector.broadcast %cst_154 : f32 to vector<2x1xf32>
    %1008 = arith.maximumf %1006, %1007 : vector<2x1xf32>
    %1009 = arith.mulf %1003, %1008 : vector<2x1xf32>
    %1010 = math.rsqrt %1009 : vector<2x1xf32>
    %1011 = arith.mulf %998, %1010 : vector<2x1xf32>
    %1012 = arith.mulf %977, %993 : vector<2x64xf32>
    %cst_155 = arith.constant dense<0.000000e+00> : vector<2xf32>
    %1013 = vector.multi_reduction <add>, %1012, %cst_155 [1] : vector<2x64xf32> to vector<2xf32>
    %1014 = vector.shape_cast %1013 : vector<2xf32> to vector<2x1xf32>
    %1015 = arith.mulf %977, %977 : vector<2x64xf32>
    %cst_156 = arith.constant dense<0.000000e+00> : vector<2xf32>
    %1016 = vector.multi_reduction <add>, %1015, %cst_156 [1] : vector<2x64xf32> to vector<2xf32>
    %1017 = vector.shape_cast %1016 : vector<2xf32> to vector<2x1xf32>
    %cst_157 = arith.constant 1.000000e-16 : f32
    %1018 = vector.broadcast %cst_157 : f32 to vector<2x1xf32>
    %1019 = arith.maximumf %1017, %1018 : vector<2x1xf32>
    %1020 = arith.mulf %993, %993 : vector<2x64xf32>
    %cst_158 = arith.constant dense<0.000000e+00> : vector<2xf32>
    %1021 = vector.multi_reduction <add>, %1020, %cst_158 [1] : vector<2x64xf32> to vector<2xf32>
    %1022 = vector.shape_cast %1021 : vector<2xf32> to vector<2x1xf32>
    %cst_159 = arith.constant 1.000000e-16 : f32
    %1023 = vector.broadcast %cst_159 : f32 to vector<2x1xf32>
    %1024 = arith.maximumf %1022, %1023 : vector<2x1xf32>
    %1025 = arith.mulf %1019, %1024 : vector<2x1xf32>
    %1026 = math.rsqrt %1025 : vector<2x1xf32>
    %1027 = arith.mulf %1014, %1026 : vector<2x1xf32>
    %1028 = arith.subf %1027, %1011 : vector<2x1xf32>
    %cst_160 = arith.constant 5.000000e-01 : f32
    %1029 = vector.broadcast %cst_160 : f32 to vector<2x1xf32>
    %1030 = arith.addf %1028, %1029 : vector<2x1xf32>
    %cst_161 = arith.constant 0.000000e+00 : f32
    %1031 = vector.broadcast %cst_161 : f32 to vector<2x1xf32>
    %1032 = arith.maximumf %1031, %1030 : vector<2x1xf32>
    %1033 = vector.shape_cast %1032 : vector<2x1xf32> to vector<1x2x1xf32>
    %cst_162 = arith.constant dense<0.000000e+00> : vector<1xf32>
    %1034 = vector.multi_reduction <add>, %1033, %cst_162 [1, 2] : vector<1x2x1xf32> to vector<1xf32>
    %1035 = vector.shape_cast %1034 : vector<1xf32> to vector<1x1x1xf32>
    %1036 = vector.extract %1035[0, 0, 0] : f32 from vector<1x1x1xf32>
    %cst_163 = arith.constant 2.000000e+00 : f32
    %1037 = arith.divf %1036, %cst_163 : f32
    %cst_164 = arith.constant -1.000000e+00 : f32
    %1038 = vector.broadcast %cst_164 : f32 to vector<2x64xf32>
    %1039 = arith.addf %1038, %995 : vector<2x64xf32>
    %1040 = arith.subf %1039, %971 : vector<2x64xf32>
    %1041 = math.exp %971 : vector<2x64xf32>
    %1042 = arith.subf %970, %994 : vector<2x64xf32>
    %1043 = arith.mulf %1042, %1042 : vector<2x64xf32>
    %1044 = arith.addf %1041, %1043 : vector<2x64xf32>
    %cst_165 = arith.constant 0.000000e+00 : f32
    %1045 = vector.broadcast %cst_165 : f32 to vector<2x64xf32>
    %1046 = arith.subf %1045, %995 : vector<2x64xf32>
    %1047 = math.exp %1046 : vector<2x64xf32>
    %1048 = arith.mulf %1044, %1047 : vector<2x64xf32>
    %1049 = arith.addf %1040, %1048 : vector<2x64xf32>
    %1050 = vector.shape_cast %1049 : vector<2x64xf32> to vector<1x2x64xf32>
    %cst_166 = arith.constant dense<0.000000e+00> : vector<1xf32>
    %1051 = vector.multi_reduction <add>, %1050, %cst_166 [1, 2] : vector<1x2x64xf32> to vector<1xf32>
    %1052 = vector.shape_cast %1051 : vector<1xf32> to vector<1x1x1xf32>
    %1053 = vector.extract %1052[0, 0, 0] : f32 from vector<1x1x1xf32>
    %cst_167 = arith.constant 5.000000e-01 : f32
    %1054 = arith.mulf %cst_167, %1053 : f32
    %cst_168 = arith.constant 2.000000e+00 : f32
    %1055 = arith.divf %1054, %cst_168 : f32
    %1056 = arith.truncf %977 : vector<2x64xf32> to vector<2x64xbf16>
    %c0_169 = arith.constant 0 : index
    %c0_170 = arith.constant 0 : index
    %1057 = vector.load %arg16[%c0_169, %c0_170] : memref<64x64xbf16, #tpu.memory_space<vmem>>, vector<64x64xbf16>
    %cst_171 = arith.constant dense<0.000000e+00> : vector<2x64xf32>
    %1058 = tpu.matmul %1056, %1057, %cst_171 {dimension_numbers = #tpu.dot_dimension_numbers<[1], [0], [0], [1], [0, 0, 1, 1], [], []>} : vector<2x64xbf16>, vector<64x64xbf16>, vector<2x64xf32> -> vector<2x64xf32>
    %c0_172 = arith.constant 0 : index
    %c0_173 = arith.constant 0 : index
    %1059 = vector.load %arg17[%c0_172, %c0_173] : memref<1x64xf32, #tpu.memory_space<vmem>>, vector<1x64xf32>
    %1060 = vector.broadcast %1059 : vector<1x64xf32> to vector<2x64xf32>
    %1061 = arith.addf %1058, %1060 : vector<2x64xf32>
    %c0_174 = arith.constant 0 : index
    %c0_175 = arith.constant 0 : index
    %1062 = vector.load %arg2[%c0_174, %c0_175] : memref<14x32xbf16, #tpu.memory_space<vmem>>, vector<14x32xbf16>
    %c0_176 = arith.constant 0 : index
    %c0_177 = arith.constant 0 : index
    %1063 = vector.load %arg18[%c0_176, %c0_177] : memref<32x256xbf16, #tpu.memory_space<vmem>>, vector<32x256xbf16>
    %cst_178 = arith.constant dense<0.000000e+00> : vector<14x256xf32>
    %1064 = tpu.matmul %1062, %1063, %cst_178 {dimension_numbers = #tpu.dot_dimension_numbers<[1], [0], [0], [1], [0, 0, 1, 1], [], []>} : vector<14x32xbf16>, vector<32x256xbf16>, vector<14x256xf32> -> vector<14x256xf32>
    %c0_179 = arith.constant 0 : index
    %c0_180 = arith.constant 0 : index
    %1065 = vector.load %arg20[%c0_179, %c0_180] : memref<1x256xf32, #tpu.memory_space<vmem>>, vector<1x256xf32>
    %1066 = vector.broadcast %1065 : vector<1x256xf32> to vector<14x256xf32>
    %1067 = arith.addf %1064, %1066 : vector<14x256xf32>
    %c0_181 = arith.constant 0 : index
    %c0_182 = arith.constant 0 : index
    %1068 = vector.load %arg19[%c0_181, %c0_182] : memref<64x256xbf16, #tpu.memory_space<vmem>>, vector<64x256xbf16>
    %c0_183 = arith.constant 0 : index
    %c0_184 = arith.constant 0 : index
    %1069 = vector.load %arg21[%c0_183, %c0_184] : memref<1x256xf32, #tpu.memory_space<vmem>>, vector<1x256xf32>
    %1070 = arith.truncf %1061 : vector<2x64xf32> to vector<2x64xbf16>
    %cst_185 = arith.constant dense<0.000000e+00> : vector<2x256xf32>
    %1071 = tpu.matmul %1070, %1068, %cst_185 {dimension_numbers = #tpu.dot_dimension_numbers<[1], [0], [0], [1], [0, 0, 1, 1], [], []>} : vector<2x64xbf16>, vector<64x256xbf16>, vector<2x256xf32> -> vector<2x256xf32>
    %1072 = vector.broadcast %1069 : vector<1x256xf32> to vector<2x256xf32>
    %1073 = arith.addf %1071, %1072 : vector<2x256xf32>
    %1074 = vector.extract_strided_slice %1067 {offsets = [0, 0], sizes = [2, 256], strides = [1, 1]} : vector<14x256xf32> to vector<2x256xf32>
    %1075 = vector.extract_strided_slice %1074 {offsets = [0, 0], sizes = [2, 128], strides = [1, 1]} : vector<2x256xf32> to vector<2x128xf32>
    %1076 = vector.extract_strided_slice %1073 {offsets = [0, 0], sizes = [2, 128], strides = [1, 1]} : vector<2x256xf32> to vector<2x128xf32>
    %1077 = vector.extract_strided_slice %1074 {offsets = [0, 128], sizes = [2, 128], strides = [1, 1]} : vector<2x256xf32> to vector<2x128xf32>
    %1078 = vector.extract_strided_slice %1073 {offsets = [0, 128], sizes = [2, 128], strides = [1, 1]} : vector<2x256xf32> to vector<2x128xf32>
    %1079 = vector.extract_strided_slice %1075 {offsets = [0, 0], sizes = [2, 32], strides = [1, 1]} : vector<2x128xf32> to vector<2x32xf32>
    %1080 = vector.extract_strided_slice %1076 {offsets = [0, 0], sizes = [2, 32], strides = [1, 1]} : vector<2x128xf32> to vector<2x32xf32>
    %1081 = arith.addf %1079, %1080 : vector<2x32xf32>
    %1082 = arith.negf %1081 : vector<2x32xf32>
    %1083 = math.exp %1082 : vector<2x32xf32>
    %cst_186 = arith.constant 1.000000e+00 : f32
    %1084 = vector.broadcast %cst_186 : f32 to vector<2x32xf32>
    %1085 = arith.addf %1084, %1083 : vector<2x32xf32>
    %1086 = arith.divf %1084, %1085 : vector<2x32xf32>
    %1087 = vector.extract_strided_slice %1075 {offsets = [0, 32], sizes = [2, 32], strides = [1, 1]} : vector<2x128xf32> to vector<2x32xf32>
    %1088 = vector.extract_strided_slice %1076 {offsets = [0, 32], sizes = [2, 32], strides = [1, 1]} : vector<2x128xf32> to vector<2x32xf32>
    %1089 = arith.addf %1087, %1088 : vector<2x32xf32>
    %1090 = arith.negf %1089 : vector<2x32xf32>
    %1091 = math.exp %1090 : vector<2x32xf32>
    %cst_187 = arith.constant 1.000000e+00 : f32
    %1092 = vector.broadcast %cst_187 : f32 to vector<2x32xf32>
    %1093 = arith.addf %1092, %1091 : vector<2x32xf32>
    %1094 = arith.divf %1092, %1093 : vector<2x32xf32>
    %1095 = vector.extract_strided_slice %1075 {offsets = [0, 64], sizes = [2, 32], strides = [1, 1]} : vector<2x128xf32> to vector<2x32xf32>
    %1096 = vector.extract_strided_slice %1076 {offsets = [0, 64], sizes = [2, 32], strides = [1, 1]} : vector<2x128xf32> to vector<2x32xf32>
    %1097 = arith.mulf %1086, %1096 : vector<2x32xf32>
    %1098 = arith.addf %1095, %1097 : vector<2x32xf32>
    %1099 = math.tanh %1098 : vector<2x32xf32>
    %cst_188 = arith.constant 1.000000e+00 : f32
    %1100 = vector.broadcast %cst_188 : f32 to vector<2x32xf32>
    %1101 = arith.subf %1100, %1094 : vector<2x32xf32>
    %1102 = arith.mulf %1101, %1099 : vector<2x32xf32>
    %1103 = vector.extract_strided_slice %1061 {offsets = [0, 0], sizes = [2, 32], strides = [1, 1]} : vector<2x64xf32> to vector<2x32xf32>
    %1104 = arith.mulf %1094, %1103 : vector<2x32xf32>
    %1105 = arith.addf %1102, %1104 : vector<2x32xf32>
    %1106 = vector.extract_strided_slice %1077 {offsets = [0, 0], sizes = [2, 32], strides = [1, 1]} : vector<2x128xf32> to vector<2x32xf32>
    %1107 = vector.extract_strided_slice %1078 {offsets = [0, 0], sizes = [2, 32], strides = [1, 1]} : vector<2x128xf32> to vector<2x32xf32>
    %1108 = arith.addf %1106, %1107 : vector<2x32xf32>
    %1109 = arith.negf %1108 : vector<2x32xf32>
    %1110 = math.exp %1109 : vector<2x32xf32>
    %cst_189 = arith.constant 1.000000e+00 : f32
    %1111 = vector.broadcast %cst_189 : f32 to vector<2x32xf32>
    %1112 = arith.addf %1111, %1110 : vector<2x32xf32>
    %1113 = arith.divf %1111, %1112 : vector<2x32xf32>
    %1114 = vector.extract_strided_slice %1077 {offsets = [0, 32], sizes = [2, 32], strides = [1, 1]} : vector<2x128xf32> to vector<2x32xf32>
    %1115 = vector.extract_strided_slice %1078 {offsets = [0, 32], sizes = [2, 32], strides = [1, 1]} : vector<2x128xf32> to vector<2x32xf32>
    %1116 = arith.addf %1114, %1115 : vector<2x32xf32>
    %1117 = arith.negf %1116 : vector<2x32xf32>
    %1118 = math.exp %1117 : vector<2x32xf32>
    %cst_190 = arith.constant 1.000000e+00 : f32
    %1119 = vector.broadcast %cst_190 : f32 to vector<2x32xf32>
    %1120 = arith.addf %1119, %1118 : vector<2x32xf32>
    %1121 = arith.divf %1119, %1120 : vector<2x32xf32>
    %1122 = vector.extract_strided_slice %1077 {offsets = [0, 64], sizes = [2, 32], strides = [1, 1]} : vector<2x128xf32> to vector<2x32xf32>
    %1123 = vector.extract_strided_slice %1078 {offsets = [0, 64], sizes = [2, 32], strides = [1, 1]} : vector<2x128xf32> to vector<2x32xf32>
    %1124 = arith.mulf %1113, %1123 : vector<2x32xf32>
    %1125 = arith.addf %1122, %1124 : vector<2x32xf32>
    %1126 = math.tanh %1125 : vector<2x32xf32>
    %cst_191 = arith.constant 1.000000e+00 : f32
    %1127 = vector.broadcast %cst_191 : f32 to vector<2x32xf32>
    %1128 = arith.subf %1127, %1121 : vector<2x32xf32>
    %1129 = arith.mulf %1128, %1126 : vector<2x32xf32>
    %1130 = vector.extract_strided_slice %1061 {offsets = [0, 32], sizes = [2, 32], strides = [1, 1]} : vector<2x64xf32> to vector<2x32xf32>
    %1131 = arith.mulf %1121, %1130 : vector<2x32xf32>
    %1132 = arith.addf %1129, %1131 : vector<2x32xf32>
    %1133 = tpu.concatenate %1105, %1132 in 1 : vector<2x32xf32>, vector<2x32xf32> -> vector<2x64xf32>
    %1134 = arith.truncf %1133 : vector<2x64xf32> to vector<2x64xbf16>
    %cst_192 = arith.constant dense<0.000000e+00> : vector<2x256xf32>
    %1135 = tpu.matmul %1134, %1068, %cst_192 {dimension_numbers = #tpu.dot_dimension_numbers<[1], [0], [0], [1], [0, 0, 1, 1], [], []>} : vector<2x64xbf16>, vector<64x256xbf16>, vector<2x256xf32> -> vector<2x256xf32>
    %1136 = vector.broadcast %1069 : vector<1x256xf32> to vector<2x256xf32>
    %1137 = arith.addf %1135, %1136 : vector<2x256xf32>
    %1138 = vector.extract_strided_slice %1067 {offsets = [2, 0], sizes = [2, 256], strides = [1, 1]} : vector<14x256xf32> to vector<2x256xf32>
    %1139 = vector.extract_strided_slice %1138 {offsets = [0, 0], sizes = [2, 128], strides = [1, 1]} : vector<2x256xf32> to vector<2x128xf32>
    %1140 = vector.extract_strided_slice %1137 {offsets = [0, 0], sizes = [2, 128], strides = [1, 1]} : vector<2x256xf32> to vector<2x128xf32>
    %1141 = vector.extract_strided_slice %1138 {offsets = [0, 128], sizes = [2, 128], strides = [1, 1]} : vector<2x256xf32> to vector<2x128xf32>
    %1142 = vector.extract_strided_slice %1137 {offsets = [0, 128], sizes = [2, 128], strides = [1, 1]} : vector<2x256xf32> to vector<2x128xf32>
    %1143 = vector.extract_strided_slice %1139 {offsets = [0, 0], sizes = [2, 32], strides = [1, 1]} : vector<2x128xf32> to vector<2x32xf32>
    %1144 = vector.extract_strided_slice %1140 {offsets = [0, 0], sizes = [2, 32], strides = [1, 1]} : vector<2x128xf32> to vector<2x32xf32>
    %1145 = arith.addf %1143, %1144 : vector<2x32xf32>
    %1146 = arith.negf %1145 : vector<2x32xf32>
    %1147 = math.exp %1146 : vector<2x32xf32>
    %cst_193 = arith.constant 1.000000e+00 : f32
    %1148 = vector.broadcast %cst_193 : f32 to vector<2x32xf32>
    %1149 = arith.addf %1148, %1147 : vector<2x32xf32>
    %1150 = arith.divf %1148, %1149 : vector<2x32xf32>
    %1151 = vector.extract_strided_slice %1139 {offsets = [0, 32], sizes = [2, 32], strides = [1, 1]} : vector<2x128xf32> to vector<2x32xf32>
    %1152 = vector.extract_strided_slice %1140 {offsets = [0, 32], sizes = [2, 32], strides = [1, 1]} : vector<2x128xf32> to vector<2x32xf32>
    %1153 = arith.addf %1151, %1152 : vector<2x32xf32>
    %1154 = arith.negf %1153 : vector<2x32xf32>
    %1155 = math.exp %1154 : vector<2x32xf32>
    %cst_194 = arith.constant 1.000000e+00 : f32
    %1156 = vector.broadcast %cst_194 : f32 to vector<2x32xf32>
    %1157 = arith.addf %1156, %1155 : vector<2x32xf32>
    %1158 = arith.divf %1156, %1157 : vector<2x32xf32>
    %1159 = vector.extract_strided_slice %1139 {offsets = [0, 64], sizes = [2, 32], strides = [1, 1]} : vector<2x128xf32> to vector<2x32xf32>
    %1160 = vector.extract_strided_slice %1140 {offsets = [0, 64], sizes = [2, 32], strides = [1, 1]} : vector<2x128xf32> to vector<2x32xf32>
    %1161 = arith.mulf %1150, %1160 : vector<2x32xf32>
    %1162 = arith.addf %1159, %1161 : vector<2x32xf32>
    %1163 = math.tanh %1162 : vector<2x32xf32>
    %cst_195 = arith.constant 1.000000e+00 : f32
    %1164 = vector.broadcast %cst_195 : f32 to vector<2x32xf32>
    %1165 = arith.subf %1164, %1158 : vector<2x32xf32>
    %1166 = arith.mulf %1165, %1163 : vector<2x32xf32>
    %1167 = vector.extract_strided_slice %1133 {offsets = [0, 0], sizes = [2, 32], strides = [1, 1]} : vector<2x64xf32> to vector<2x32xf32>
    %1168 = arith.mulf %1158, %1167 : vector<2x32xf32>
    %1169 = arith.addf %1166, %1168 : vector<2x32xf32>
    %1170 = vector.extract_strided_slice %1141 {offsets = [0, 0], sizes = [2, 32], strides = [1, 1]} : vector<2x128xf32> to vector<2x32xf32>
    %1171 = vector.extract_strided_slice %1142 {offsets = [0, 0], sizes = [2, 32], strides = [1, 1]} : vector<2x128xf32> to vector<2x32xf32>
    %1172 = arith.addf %1170, %1171 : vector<2x32xf32>
    %1173 = arith.negf %1172 : vector<2x32xf32>
    %1174 = math.exp %1173 : vector<2x32xf32>
    %cst_196 = arith.constant 1.000000e+00 : f32
    %1175 = vector.broadcast %cst_196 : f32 to vector<2x32xf32>
    %1176 = arith.addf %1175, %1174 : vector<2x32xf32>
    %1177 = arith.divf %1175, %1176 : vector<2x32xf32>
    %1178 = vector.extract_strided_slice %1141 {offsets = [0, 32], sizes = [2, 32], strides = [1, 1]} : vector<2x128xf32> to vector<2x32xf32>
    %1179 = vector.extract_strided_slice %1142 {offsets = [0, 32], sizes = [2, 32], strides = [1, 1]} : vector<2x128xf32> to vector<2x32xf32>
    %1180 = arith.addf %1178, %1179 : vector<2x32xf32>
    %1181 = arith.negf %1180 : vector<2x32xf32>
    %1182 = math.exp %1181 : vector<2x32xf32>
    %cst_197 = arith.constant 1.000000e+00 : f32
    %1183 = vector.broadcast %cst_197 : f32 to vector<2x32xf32>
    %1184 = arith.addf %1183, %1182 : vector<2x32xf32>
    %1185 = arith.divf %1183, %1184 : vector<2x32xf32>
    %1186 = vector.extract_strided_slice %1141 {offsets = [0, 64], sizes = [2, 32], strides = [1, 1]} : vector<2x128xf32> to vector<2x32xf32>
    %1187 = vector.extract_strided_slice %1142 {offsets = [0, 64], sizes = [2, 32], strides = [1, 1]} : vector<2x128xf32> to vector<2x32xf32>
    %1188 = arith.mulf %1177, %1187 : vector<2x32xf32>
    %1189 = arith.addf %1186, %1188 : vector<2x32xf32>
    %1190 = math.tanh %1189 : vector<2x32xf32>
    %cst_198 = arith.constant 1.000000e+00 : f32
    %1191 = vector.broadcast %cst_198 : f32 to vector<2x32xf32>
    %1192 = arith.subf %1191, %1185 : vector<2x32xf32>
    %1193 = arith.mulf %1192, %1190 : vector<2x32xf32>
    %1194 = vector.extract_strided_slice %1133 {offsets = [0, 32], sizes = [2, 32], strides = [1, 1]} : vector<2x64xf32> to vector<2x32xf32>
    %1195 = arith.mulf %1185, %1194 : vector<2x32xf32>
    %1196 = arith.addf %1193, %1195 : vector<2x32xf32>
    %1197 = tpu.concatenate %1169, %1196 in 1 : vector<2x32xf32>, vector<2x32xf32> -> vector<2x64xf32>
    %1198 = arith.truncf %1197 : vector<2x64xf32> to vector<2x64xbf16>
    %cst_199 = arith.constant dense<0.000000e+00> : vector<2x256xf32>
    %1199 = tpu.matmul %1198, %1068, %cst_199 {dimension_numbers = #tpu.dot_dimension_numbers<[1], [0], [0], [1], [0, 0, 1, 1], [], []>} : vector<2x64xbf16>, vector<64x256xbf16>, vector<2x256xf32> -> vector<2x256xf32>
    %1200 = vector.broadcast %1069 : vector<1x256xf32> to vector<2x256xf32>
    %1201 = arith.addf %1199, %1200 : vector<2x256xf32>
    %1202 = vector.extract_strided_slice %1067 {offsets = [4, 0], sizes = [2, 256], strides = [1, 1]} : vector<14x256xf32> to vector<2x256xf32>
    %1203 = vector.extract_strided_slice %1202 {offsets = [0, 0], sizes = [2, 128], strides = [1, 1]} : vector<2x256xf32> to vector<2x128xf32>
    %1204 = vector.extract_strided_slice %1201 {offsets = [0, 0], sizes = [2, 128], strides = [1, 1]} : vector<2x256xf32> to vector<2x128xf32>
    %1205 = vector.extract_strided_slice %1202 {offsets = [0, 128], sizes = [2, 128], strides = [1, 1]} : vector<2x256xf32> to vector<2x128xf32>
    %1206 = vector.extract_strided_slice %1201 {offsets = [0, 128], sizes = [2, 128], strides = [1, 1]} : vector<2x256xf32> to vector<2x128xf32>
    %1207 = vector.extract_strided_slice %1203 {offsets = [0, 0], sizes = [2, 32], strides = [1, 1]} : vector<2x128xf32> to vector<2x32xf32>
    %1208 = vector.extract_strided_slice %1204 {offsets = [0, 0], sizes = [2, 32], strides = [1, 1]} : vector<2x128xf32> to vector<2x32xf32>
    %1209 = arith.addf %1207, %1208 : vector<2x32xf32>
    %1210 = arith.negf %1209 : vector<2x32xf32>
    %1211 = math.exp %1210 : vector<2x32xf32>
    %cst_200 = arith.constant 1.000000e+00 : f32
    %1212 = vector.broadcast %cst_200 : f32 to vector<2x32xf32>
    %1213 = arith.addf %1212, %1211 : vector<2x32xf32>
    %1214 = arith.divf %1212, %1213 : vector<2x32xf32>
    %1215 = vector.extract_strided_slice %1203 {offsets = [0, 32], sizes = [2, 32], strides = [1, 1]} : vector<2x128xf32> to vector<2x32xf32>
    %1216 = vector.extract_strided_slice %1204 {offsets = [0, 32], sizes = [2, 32], strides = [1, 1]} : vector<2x128xf32> to vector<2x32xf32>
    %1217 = arith.addf %1215, %1216 : vector<2x32xf32>
    %1218 = arith.negf %1217 : vector<2x32xf32>
    %1219 = math.exp %1218 : vector<2x32xf32>
    %cst_201 = arith.constant 1.000000e+00 : f32
    %1220 = vector.broadcast %cst_201 : f32 to vector<2x32xf32>
    %1221 = arith.addf %1220, %1219 : vector<2x32xf32>
    %1222 = arith.divf %1220, %1221 : vector<2x32xf32>
    %1223 = vector.extract_strided_slice %1203 {offsets = [0, 64], sizes = [2, 32], strides = [1, 1]} : vector<2x128xf32> to vector<2x32xf32>
    %1224 = vector.extract_strided_slice %1204 {offsets = [0, 64], sizes = [2, 32], strides = [1, 1]} : vector<2x128xf32> to vector<2x32xf32>
    %1225 = arith.mulf %1214, %1224 : vector<2x32xf32>
    %1226 = arith.addf %1223, %1225 : vector<2x32xf32>
    %1227 = math.tanh %1226 : vector<2x32xf32>
    %cst_202 = arith.constant 1.000000e+00 : f32
    %1228 = vector.broadcast %cst_202 : f32 to vector<2x32xf32>
    %1229 = arith.subf %1228, %1222 : vector<2x32xf32>
    %1230 = arith.mulf %1229, %1227 : vector<2x32xf32>
    %1231 = vector.extract_strided_slice %1197 {offsets = [0, 0], sizes = [2, 32], strides = [1, 1]} : vector<2x64xf32> to vector<2x32xf32>
    %1232 = arith.mulf %1222, %1231 : vector<2x32xf32>
    %1233 = arith.addf %1230, %1232 : vector<2x32xf32>
    %1234 = vector.extract_strided_slice %1205 {offsets = [0, 0], sizes = [2, 32], strides = [1, 1]} : vector<2x128xf32> to vector<2x32xf32>
    %1235 = vector.extract_strided_slice %1206 {offsets = [0, 0], sizes = [2, 32], strides = [1, 1]} : vector<2x128xf32> to vector<2x32xf32>
    %1236 = arith.addf %1234, %1235 : vector<2x32xf32>
    %1237 = arith.negf %1236 : vector<2x32xf32>
    %1238 = math.exp %1237 : vector<2x32xf32>
    %cst_203 = arith.constant 1.000000e+00 : f32
    %1239 = vector.broadcast %cst_203 : f32 to vector<2x32xf32>
    %1240 = arith.addf %1239, %1238 : vector<2x32xf32>
    %1241 = arith.divf %1239, %1240 : vector<2x32xf32>
    %1242 = vector.extract_strided_slice %1205 {offsets = [0, 32], sizes = [2, 32], strides = [1, 1]} : vector<2x128xf32> to vector<2x32xf32>
    %1243 = vector.extract_strided_slice %1206 {offsets = [0, 32], sizes = [2, 32], strides = [1, 1]} : vector<2x128xf32> to vector<2x32xf32>
    %1244 = arith.addf %1242, %1243 : vector<2x32xf32>
    %1245 = arith.negf %1244 : vector<2x32xf32>
    %1246 = math.exp %1245 : vector<2x32xf32>
    %cst_204 = arith.constant 1.000000e+00 : f32
    %1247 = vector.broadcast %cst_204 : f32 to vector<2x32xf32>
    %1248 = arith.addf %1247, %1246 : vector<2x32xf32>
    %1249 = arith.divf %1247, %1248 : vector<2x32xf32>
    %1250 = vector.extract_strided_slice %1205 {offsets = [0, 64], sizes = [2, 32], strides = [1, 1]} : vector<2x128xf32> to vector<2x32xf32>
    %1251 = vector.extract_strided_slice %1206 {offsets = [0, 64], sizes = [2, 32], strides = [1, 1]} : vector<2x128xf32> to vector<2x32xf32>
    %1252 = arith.mulf %1241, %1251 : vector<2x32xf32>
    %1253 = arith.addf %1250, %1252 : vector<2x32xf32>
    %1254 = math.tanh %1253 : vector<2x32xf32>
    %cst_205 = arith.constant 1.000000e+00 : f32
    %1255 = vector.broadcast %cst_205 : f32 to vector<2x32xf32>
    %1256 = arith.subf %1255, %1249 : vector<2x32xf32>
    %1257 = arith.mulf %1256, %1254 : vector<2x32xf32>
    %1258 = vector.extract_strided_slice %1197 {offsets = [0, 32], sizes = [2, 32], strides = [1, 1]} : vector<2x64xf32> to vector<2x32xf32>
    %1259 = arith.mulf %1249, %1258 : vector<2x32xf32>
    %1260 = arith.addf %1257, %1259 : vector<2x32xf32>
    %1261 = tpu.concatenate %1233, %1260 in 1 : vector<2x32xf32>, vector<2x32xf32> -> vector<2x64xf32>
    %1262 = arith.truncf %1261 : vector<2x64xf32> to vector<2x64xbf16>
    %cst_206 = arith.constant dense<0.000000e+00> : vector<2x256xf32>
    %1263 = tpu.matmul %1262, %1068, %cst_206 {dimension_numbers = #tpu.dot_dimension_numbers<[1], [0], [0], [1], [0, 0, 1, 1], [], []>} : vector<2x64xbf16>, vector<64x256xbf16>, vector<2x256xf32> -> vector<2x256xf32>
    %1264 = vector.broadcast %1069 : vector<1x256xf32> to vector<2x256xf32>
    %1265 = arith.addf %1263, %1264 : vector<2x256xf32>
    %1266 = vector.extract_strided_slice %1067 {offsets = [6, 0], sizes = [2, 256], strides = [1, 1]} : vector<14x256xf32> to vector<2x256xf32>
    %1267 = vector.extract_strided_slice %1266 {offsets = [0, 0], sizes = [2, 128], strides = [1, 1]} : vector<2x256xf32> to vector<2x128xf32>
    %1268 = vector.extract_strided_slice %1265 {offsets = [0, 0], sizes = [2, 128], strides = [1, 1]} : vector<2x256xf32> to vector<2x128xf32>
    %1269 = vector.extract_strided_slice %1266 {offsets = [0, 128], sizes = [2, 128], strides = [1, 1]} : vector<2x256xf32> to vector<2x128xf32>
    %1270 = vector.extract_strided_slice %1265 {offsets = [0, 128], sizes = [2, 128], strides = [1, 1]} : vector<2x256xf32> to vector<2x128xf32>
    %1271 = vector.extract_strided_slice %1267 {offsets = [0, 0], sizes = [2, 32], strides = [1, 1]} : vector<2x128xf32> to vector<2x32xf32>
    %1272 = vector.extract_strided_slice %1268 {offsets = [0, 0], sizes = [2, 32], strides = [1, 1]} : vector<2x128xf32> to vector<2x32xf32>
    %1273 = arith.addf %1271, %1272 : vector<2x32xf32>
    %1274 = arith.negf %1273 : vector<2x32xf32>
    %1275 = math.exp %1274 : vector<2x32xf32>
    %cst_207 = arith.constant 1.000000e+00 : f32
    %1276 = vector.broadcast %cst_207 : f32 to vector<2x32xf32>
    %1277 = arith.addf %1276, %1275 : vector<2x32xf32>
    %1278 = arith.divf %1276, %1277 : vector<2x32xf32>
    %1279 = vector.extract_strided_slice %1267 {offsets = [0, 32], sizes = [2, 32], strides = [1, 1]} : vector<2x128xf32> to vector<2x32xf32>
    %1280 = vector.extract_strided_slice %1268 {offsets = [0, 32], sizes = [2, 32], strides = [1, 1]} : vector<2x128xf32> to vector<2x32xf32>
    %1281 = arith.addf %1279, %1280 : vector<2x32xf32>
    %1282 = arith.negf %1281 : vector<2x32xf32>
    %1283 = math.exp %1282 : vector<2x32xf32>
    %cst_208 = arith.constant 1.000000e+00 : f32
    %1284 = vector.broadcast %cst_208 : f32 to vector<2x32xf32>
    %1285 = arith.addf %1284, %1283 : vector<2x32xf32>
    %1286 = arith.divf %1284, %1285 : vector<2x32xf32>
    %1287 = vector.extract_strided_slice %1267 {offsets = [0, 64], sizes = [2, 32], strides = [1, 1]} : vector<2x128xf32> to vector<2x32xf32>
    %1288 = vector.extract_strided_slice %1268 {offsets = [0, 64], sizes = [2, 32], strides = [1, 1]} : vector<2x128xf32> to vector<2x32xf32>
    %1289 = arith.mulf %1278, %1288 : vector<2x32xf32>
    %1290 = arith.addf %1287, %1289 : vector<2x32xf32>
    %1291 = math.tanh %1290 : vector<2x32xf32>
    %cst_209 = arith.constant 1.000000e+00 : f32
    %1292 = vector.broadcast %cst_209 : f32 to vector<2x32xf32>
    %1293 = arith.subf %1292, %1286 : vector<2x32xf32>
    %1294 = arith.mulf %1293, %1291 : vector<2x32xf32>
    %1295 = vector.extract_strided_slice %1261 {offsets = [0, 0], sizes = [2, 32], strides = [1, 1]} : vector<2x64xf32> to vector<2x32xf32>
    %1296 = arith.mulf %1286, %1295 : vector<2x32xf32>
    %1297 = arith.addf %1294, %1296 : vector<2x32xf32>
    %1298 = vector.extract_strided_slice %1269 {offsets = [0, 0], sizes = [2, 32], strides = [1, 1]} : vector<2x128xf32> to vector<2x32xf32>
    %1299 = vector.extract_strided_slice %1270 {offsets = [0, 0], sizes = [2, 32], strides = [1, 1]} : vector<2x128xf32> to vector<2x32xf32>
    %1300 = arith.addf %1298, %1299 : vector<2x32xf32>
    %1301 = arith.negf %1300 : vector<2x32xf32>
    %1302 = math.exp %1301 : vector<2x32xf32>
    %cst_210 = arith.constant 1.000000e+00 : f32
    %1303 = vector.broadcast %cst_210 : f32 to vector<2x32xf32>
    %1304 = arith.addf %1303, %1302 : vector<2x32xf32>
    %1305 = arith.divf %1303, %1304 : vector<2x32xf32>
    %1306 = vector.extract_strided_slice %1269 {offsets = [0, 32], sizes = [2, 32], strides = [1, 1]} : vector<2x128xf32> to vector<2x32xf32>
    %1307 = vector.extract_strided_slice %1270 {offsets = [0, 32], sizes = [2, 32], strides = [1, 1]} : vector<2x128xf32> to vector<2x32xf32>
    %1308 = arith.addf %1306, %1307 : vector<2x32xf32>
    %1309 = arith.negf %1308 : vector<2x32xf32>
    %1310 = math.exp %1309 : vector<2x32xf32>
    %cst_211 = arith.constant 1.000000e+00 : f32
    %1311 = vector.broadcast %cst_211 : f32 to vector<2x32xf32>
    %1312 = arith.addf %1311, %1310 : vector<2x32xf32>
    %1313 = arith.divf %1311, %1312 : vector<2x32xf32>
    %1314 = vector.extract_strided_slice %1269 {offsets = [0, 64], sizes = [2, 32], strides = [1, 1]} : vector<2x128xf32> to vector<2x32xf32>
    %1315 = vector.extract_strided_slice %1270 {offsets = [0, 64], sizes = [2, 32], strides = [1, 1]} : vector<2x128xf32> to vector<2x32xf32>
    %1316 = arith.mulf %1305, %1315 : vector<2x32xf32>
    %1317 = arith.addf %1314, %1316 : vector<2x32xf32>
    %1318 = math.tanh %1317 : vector<2x32xf32>
    %cst_212 = arith.constant 1.000000e+00 : f32
    %1319 = vector.broadcast %cst_212 : f32 to vector<2x32xf32>
    %1320 = arith.subf %1319, %1313 : vector<2x32xf32>
    %1321 = arith.mulf %1320, %1318 : vector<2x32xf32>
    %1322 = vector.extract_strided_slice %1261 {offsets = [0, 32], sizes = [2, 32], strides = [1, 1]} : vector<2x64xf32> to vector<2x32xf32>
    %1323 = arith.mulf %1313, %1322 : vector<2x32xf32>
    %1324 = arith.addf %1321, %1323 : vector<2x32xf32>
    %1325 = tpu.concatenate %1297, %1324 in 1 : vector<2x32xf32>, vector<2x32xf32> -> vector<2x64xf32>
    %1326 = arith.truncf %1325 : vector<2x64xf32> to vector<2x64xbf16>
    %cst_213 = arith.constant dense<0.000000e+00> : vector<2x256xf32>
    %1327 = tpu.matmul %1326, %1068, %cst_213 {dimension_numbers = #tpu.dot_dimension_numbers<[1], [0], [0], [1], [0, 0, 1, 1], [], []>} : vector<2x64xbf16>, vector<64x256xbf16>, vector<2x256xf32> -> vector<2x256xf32>
    %1328 = vector.broadcast %1069 : vector<1x256xf32> to vector<2x256xf32>
    %1329 = arith.addf %1327, %1328 : vector<2x256xf32>
    %1330 = vector.extract_strided_slice %1067 {offsets = [8, 0], sizes = [2, 256], strides = [1, 1]} : vector<14x256xf32> to vector<2x256xf32>
    %1331 = vector.extract_strided_slice %1330 {offsets = [0, 0], sizes = [2, 128], strides = [1, 1]} : vector<2x256xf32> to vector<2x128xf32>
    %1332 = vector.extract_strided_slice %1329 {offsets = [0, 0], sizes = [2, 128], strides = [1, 1]} : vector<2x256xf32> to vector<2x128xf32>
    %1333 = vector.extract_strided_slice %1330 {offsets = [0, 128], sizes = [2, 128], strides = [1, 1]} : vector<2x256xf32> to vector<2x128xf32>
    %1334 = vector.extract_strided_slice %1329 {offsets = [0, 128], sizes = [2, 128], strides = [1, 1]} : vector<2x256xf32> to vector<2x128xf32>
    %1335 = vector.extract_strided_slice %1331 {offsets = [0, 0], sizes = [2, 32], strides = [1, 1]} : vector<2x128xf32> to vector<2x32xf32>
    %1336 = vector.extract_strided_slice %1332 {offsets = [0, 0], sizes = [2, 32], strides = [1, 1]} : vector<2x128xf32> to vector<2x32xf32>
    %1337 = arith.addf %1335, %1336 : vector<2x32xf32>
    %1338 = arith.negf %1337 : vector<2x32xf32>
    %1339 = math.exp %1338 : vector<2x32xf32>
    %cst_214 = arith.constant 1.000000e+00 : f32
    %1340 = vector.broadcast %cst_214 : f32 to vector<2x32xf32>
    %1341 = arith.addf %1340, %1339 : vector<2x32xf32>
    %1342 = arith.divf %1340, %1341 : vector<2x32xf32>
    %1343 = vector.extract_strided_slice %1331 {offsets = [0, 32], sizes = [2, 32], strides = [1, 1]} : vector<2x128xf32> to vector<2x32xf32>
    %1344 = vector.extract_strided_slice %1332 {offsets = [0, 32], sizes = [2, 32], strides = [1, 1]} : vector<2x128xf32> to vector<2x32xf32>
    %1345 = arith.addf %1343, %1344 : vector<2x32xf32>
    %1346 = arith.negf %1345 : vector<2x32xf32>
    %1347 = math.exp %1346 : vector<2x32xf32>
    %cst_215 = arith.constant 1.000000e+00 : f32
    %1348 = vector.broadcast %cst_215 : f32 to vector<2x32xf32>
    %1349 = arith.addf %1348, %1347 : vector<2x32xf32>
    %1350 = arith.divf %1348, %1349 : vector<2x32xf32>
    %1351 = vector.extract_strided_slice %1331 {offsets = [0, 64], sizes = [2, 32], strides = [1, 1]} : vector<2x128xf32> to vector<2x32xf32>
    %1352 = vector.extract_strided_slice %1332 {offsets = [0, 64], sizes = [2, 32], strides = [1, 1]} : vector<2x128xf32> to vector<2x32xf32>
    %1353 = arith.mulf %1342, %1352 : vector<2x32xf32>
    %1354 = arith.addf %1351, %1353 : vector<2x32xf32>
    %1355 = math.tanh %1354 : vector<2x32xf32>
    %cst_216 = arith.constant 1.000000e+00 : f32
    %1356 = vector.broadcast %cst_216 : f32 to vector<2x32xf32>
    %1357 = arith.subf %1356, %1350 : vector<2x32xf32>
    %1358 = arith.mulf %1357, %1355 : vector<2x32xf32>
    %1359 = vector.extract_strided_slice %1325 {offsets = [0, 0], sizes = [2, 32], strides = [1, 1]} : vector<2x64xf32> to vector<2x32xf32>
    %1360 = arith.mulf %1350, %1359 : vector<2x32xf32>
    %1361 = arith.addf %1358, %1360 : vector<2x32xf32>
    %1362 = vector.extract_strided_slice %1333 {offsets = [0, 0], sizes = [2, 32], strides = [1, 1]} : vector<2x128xf32> to vector<2x32xf32>
    %1363 = vector.extract_strided_slice %1334 {offsets = [0, 0], sizes = [2, 32], strides = [1, 1]} : vector<2x128xf32> to vector<2x32xf32>
    %1364 = arith.addf %1362, %1363 : vector<2x32xf32>
    %1365 = arith.negf %1364 : vector<2x32xf32>
    %1366 = math.exp %1365 : vector<2x32xf32>
    %cst_217 = arith.constant 1.000000e+00 : f32
    %1367 = vector.broadcast %cst_217 : f32 to vector<2x32xf32>
    %1368 = arith.addf %1367, %1366 : vector<2x32xf32>
    %1369 = arith.divf %1367, %1368 : vector<2x32xf32>
    %1370 = vector.extract_strided_slice %1333 {offsets = [0, 32], sizes = [2, 32], strides = [1, 1]} : vector<2x128xf32> to vector<2x32xf32>
    %1371 = vector.extract_strided_slice %1334 {offsets = [0, 32], sizes = [2, 32], strides = [1, 1]} : vector<2x128xf32> to vector<2x32xf32>
    %1372 = arith.addf %1370, %1371 : vector<2x32xf32>
    %1373 = arith.negf %1372 : vector<2x32xf32>
    %1374 = math.exp %1373 : vector<2x32xf32>
    %cst_218 = arith.constant 1.000000e+00 : f32
    %1375 = vector.broadcast %cst_218 : f32 to vector<2x32xf32>
    %1376 = arith.addf %1375, %1374 : vector<2x32xf32>
    %1377 = arith.divf %1375, %1376 : vector<2x32xf32>
    %1378 = vector.extract_strided_slice %1333 {offsets = [0, 64], sizes = [2, 32], strides = [1, 1]} : vector<2x128xf32> to vector<2x32xf32>
    %1379 = vector.extract_strided_slice %1334 {offsets = [0, 64], sizes = [2, 32], strides = [1, 1]} : vector<2x128xf32> to vector<2x32xf32>
    %1380 = arith.mulf %1369, %1379 : vector<2x32xf32>
    %1381 = arith.addf %1378, %1380 : vector<2x32xf32>
    %1382 = math.tanh %1381 : vector<2x32xf32>
    %cst_219 = arith.constant 1.000000e+00 : f32
    %1383 = vector.broadcast %cst_219 : f32 to vector<2x32xf32>
    %1384 = arith.subf %1383, %1377 : vector<2x32xf32>
    %1385 = arith.mulf %1384, %1382 : vector<2x32xf32>
    %1386 = vector.extract_strided_slice %1325 {offsets = [0, 32], sizes = [2, 32], strides = [1, 1]} : vector<2x64xf32> to vector<2x32xf32>
    %1387 = arith.mulf %1377, %1386 : vector<2x32xf32>
    %1388 = arith.addf %1385, %1387 : vector<2x32xf32>
    %1389 = tpu.concatenate %1361, %1388 in 1 : vector<2x32xf32>, vector<2x32xf32> -> vector<2x64xf32>
    %1390 = arith.truncf %1389 : vector<2x64xf32> to vector<2x64xbf16>
    %cst_220 = arith.constant dense<0.000000e+00> : vector<2x256xf32>
    %1391 = tpu.matmul %1390, %1068, %cst_220 {dimension_numbers = #tpu.dot_dimension_numbers<[1], [0], [0], [1], [0, 0, 1, 1], [], []>} : vector<2x64xbf16>, vector<64x256xbf16>, vector<2x256xf32> -> vector<2x256xf32>
    %1392 = vector.broadcast %1069 : vector<1x256xf32> to vector<2x256xf32>
    %1393 = arith.addf %1391, %1392 : vector<2x256xf32>
    %1394 = vector.extract_strided_slice %1067 {offsets = [10, 0], sizes = [2, 256], strides = [1, 1]} : vector<14x256xf32> to vector<2x256xf32>
    %1395 = vector.extract_strided_slice %1394 {offsets = [0, 0], sizes = [2, 128], strides = [1, 1]} : vector<2x256xf32> to vector<2x128xf32>
    %1396 = vector.extract_strided_slice %1393 {offsets = [0, 0], sizes = [2, 128], strides = [1, 1]} : vector<2x256xf32> to vector<2x128xf32>
    %1397 = vector.extract_strided_slice %1394 {offsets = [0, 128], sizes = [2, 128], strides = [1, 1]} : vector<2x256xf32> to vector<2x128xf32>
    %1398 = vector.extract_strided_slice %1393 {offsets = [0, 128], sizes = [2, 128], strides = [1, 1]} : vector<2x256xf32> to vector<2x128xf32>
    %1399 = vector.extract_strided_slice %1395 {offsets = [0, 0], sizes = [2, 32], strides = [1, 1]} : vector<2x128xf32> to vector<2x32xf32>
    %1400 = vector.extract_strided_slice %1396 {offsets = [0, 0], sizes = [2, 32], strides = [1, 1]} : vector<2x128xf32> to vector<2x32xf32>
    %1401 = arith.addf %1399, %1400 : vector<2x32xf32>
    %1402 = arith.negf %1401 : vector<2x32xf32>
    %1403 = math.exp %1402 : vector<2x32xf32>
    %cst_221 = arith.constant 1.000000e+00 : f32
    %1404 = vector.broadcast %cst_221 : f32 to vector<2x32xf32>
    %1405 = arith.addf %1404, %1403 : vector<2x32xf32>
    %1406 = arith.divf %1404, %1405 : vector<2x32xf32>
    %1407 = vector.extract_strided_slice %1395 {offsets = [0, 32], sizes = [2, 32], strides = [1, 1]} : vector<2x128xf32> to vector<2x32xf32>
    %1408 = vector.extract_strided_slice %1396 {offsets = [0, 32], sizes = [2, 32], strides = [1, 1]} : vector<2x128xf32> to vector<2x32xf32>
    %1409 = arith.addf %1407, %1408 : vector<2x32xf32>
    %1410 = arith.negf %1409 : vector<2x32xf32>
    %1411 = math.exp %1410 : vector<2x32xf32>
    %cst_222 = arith.constant 1.000000e+00 : f32
    %1412 = vector.broadcast %cst_222 : f32 to vector<2x32xf32>
    %1413 = arith.addf %1412, %1411 : vector<2x32xf32>
    %1414 = arith.divf %1412, %1413 : vector<2x32xf32>
    %1415 = vector.extract_strided_slice %1395 {offsets = [0, 64], sizes = [2, 32], strides = [1, 1]} : vector<2x128xf32> to vector<2x32xf32>
    %1416 = vector.extract_strided_slice %1396 {offsets = [0, 64], sizes = [2, 32], strides = [1, 1]} : vector<2x128xf32> to vector<2x32xf32>
    %1417 = arith.mulf %1406, %1416 : vector<2x32xf32>
    %1418 = arith.addf %1415, %1417 : vector<2x32xf32>
    %1419 = math.tanh %1418 : vector<2x32xf32>
    %cst_223 = arith.constant 1.000000e+00 : f32
    %1420 = vector.broadcast %cst_223 : f32 to vector<2x32xf32>
    %1421 = arith.subf %1420, %1414 : vector<2x32xf32>
    %1422 = arith.mulf %1421, %1419 : vector<2x32xf32>
    %1423 = vector.extract_strided_slice %1389 {offsets = [0, 0], sizes = [2, 32], strides = [1, 1]} : vector<2x64xf32> to vector<2x32xf32>
    %1424 = arith.mulf %1414, %1423 : vector<2x32xf32>
    %1425 = arith.addf %1422, %1424 : vector<2x32xf32>
    %1426 = vector.extract_strided_slice %1397 {offsets = [0, 0], sizes = [2, 32], strides = [1, 1]} : vector<2x128xf32> to vector<2x32xf32>
    %1427 = vector.extract_strided_slice %1398 {offsets = [0, 0], sizes = [2, 32], strides = [1, 1]} : vector<2x128xf32> to vector<2x32xf32>
    %1428 = arith.addf %1426, %1427 : vector<2x32xf32>
    %1429 = arith.negf %1428 : vector<2x32xf32>
    %1430 = math.exp %1429 : vector<2x32xf32>
    %cst_224 = arith.constant 1.000000e+00 : f32
    %1431 = vector.broadcast %cst_224 : f32 to vector<2x32xf32>
    %1432 = arith.addf %1431, %1430 : vector<2x32xf32>
    %1433 = arith.divf %1431, %1432 : vector<2x32xf32>
    %1434 = vector.extract_strided_slice %1397 {offsets = [0, 32], sizes = [2, 32], strides = [1, 1]} : vector<2x128xf32> to vector<2x32xf32>
    %1435 = vector.extract_strided_slice %1398 {offsets = [0, 32], sizes = [2, 32], strides = [1, 1]} : vector<2x128xf32> to vector<2x32xf32>
    %1436 = arith.addf %1434, %1435 : vector<2x32xf32>
    %1437 = arith.negf %1436 : vector<2x32xf32>
    %1438 = math.exp %1437 : vector<2x32xf32>
    %cst_225 = arith.constant 1.000000e+00 : f32
    %1439 = vector.broadcast %cst_225 : f32 to vector<2x32xf32>
    %1440 = arith.addf %1439, %1438 : vector<2x32xf32>
    %1441 = arith.divf %1439, %1440 : vector<2x32xf32>
    %1442 = vector.extract_strided_slice %1397 {offsets = [0, 64], sizes = [2, 32], strides = [1, 1]} : vector<2x128xf32> to vector<2x32xf32>
    %1443 = vector.extract_strided_slice %1398 {offsets = [0, 64], sizes = [2, 32], strides = [1, 1]} : vector<2x128xf32> to vector<2x32xf32>
    %1444 = arith.mulf %1433, %1443 : vector<2x32xf32>
    %1445 = arith.addf %1442, %1444 : vector<2x32xf32>
    %1446 = math.tanh %1445 : vector<2x32xf32>
    %cst_226 = arith.constant 1.000000e+00 : f32
    %1447 = vector.broadcast %cst_226 : f32 to vector<2x32xf32>
    %1448 = arith.subf %1447, %1441 : vector<2x32xf32>
    %1449 = arith.mulf %1448, %1446 : vector<2x32xf32>
    %1450 = vector.extract_strided_slice %1389 {offsets = [0, 32], sizes = [2, 32], strides = [1, 1]} : vector<2x64xf32> to vector<2x32xf32>
    %1451 = arith.mulf %1441, %1450 : vector<2x32xf32>
    %1452 = arith.addf %1449, %1451 : vector<2x32xf32>
    %1453 = tpu.concatenate %1425, %1452 in 1 : vector<2x32xf32>, vector<2x32xf32> -> vector<2x64xf32>
    %1454 = arith.truncf %1453 : vector<2x64xf32> to vector<2x64xbf16>
    %cst_227 = arith.constant dense<0.000000e+00> : vector<2x256xf32>
    %1455 = tpu.matmul %1454, %1068, %cst_227 {dimension_numbers = #tpu.dot_dimension_numbers<[1], [0], [0], [1], [0, 0, 1, 1], [], []>} : vector<2x64xbf16>, vector<64x256xbf16>, vector<2x256xf32> -> vector<2x256xf32>
    %1456 = vector.broadcast %1069 : vector<1x256xf32> to vector<2x256xf32>
    %1457 = arith.addf %1455, %1456 : vector<2x256xf32>
    %1458 = vector.extract_strided_slice %1067 {offsets = [12, 0], sizes = [2, 256], strides = [1, 1]} : vector<14x256xf32> to vector<2x256xf32>
    %1459 = vector.extract_strided_slice %1458 {offsets = [0, 0], sizes = [2, 128], strides = [1, 1]} : vector<2x256xf32> to vector<2x128xf32>
    %1460 = vector.extract_strided_slice %1457 {offsets = [0, 0], sizes = [2, 128], strides = [1, 1]} : vector<2x256xf32> to vector<2x128xf32>
    %1461 = vector.extract_strided_slice %1458 {offsets = [0, 128], sizes = [2, 128], strides = [1, 1]} : vector<2x256xf32> to vector<2x128xf32>
    %1462 = vector.extract_strided_slice %1457 {offsets = [0, 128], sizes = [2, 128], strides = [1, 1]} : vector<2x256xf32> to vector<2x128xf32>
    %1463 = vector.extract_strided_slice %1459 {offsets = [0, 0], sizes = [2, 32], strides = [1, 1]} : vector<2x128xf32> to vector<2x32xf32>
    %1464 = vector.extract_strided_slice %1460 {offsets = [0, 0], sizes = [2, 32], strides = [1, 1]} : vector<2x128xf32> to vector<2x32xf32>
    %1465 = arith.addf %1463, %1464 : vector<2x32xf32>
    %1466 = arith.negf %1465 : vector<2x32xf32>
    %1467 = math.exp %1466 : vector<2x32xf32>
    %cst_228 = arith.constant 1.000000e+00 : f32
    %1468 = vector.broadcast %cst_228 : f32 to vector<2x32xf32>
    %1469 = arith.addf %1468, %1467 : vector<2x32xf32>
    %1470 = arith.divf %1468, %1469 : vector<2x32xf32>
    %1471 = vector.extract_strided_slice %1459 {offsets = [0, 32], sizes = [2, 32], strides = [1, 1]} : vector<2x128xf32> to vector<2x32xf32>
    %1472 = vector.extract_strided_slice %1460 {offsets = [0, 32], sizes = [2, 32], strides = [1, 1]} : vector<2x128xf32> to vector<2x32xf32>
    %1473 = arith.addf %1471, %1472 : vector<2x32xf32>
    %1474 = arith.negf %1473 : vector<2x32xf32>
    %1475 = math.exp %1474 : vector<2x32xf32>
    %cst_229 = arith.constant 1.000000e+00 : f32
    %1476 = vector.broadcast %cst_229 : f32 to vector<2x32xf32>
    %1477 = arith.addf %1476, %1475 : vector<2x32xf32>
    %1478 = arith.divf %1476, %1477 : vector<2x32xf32>
    %1479 = vector.extract_strided_slice %1459 {offsets = [0, 64], sizes = [2, 32], strides = [1, 1]} : vector<2x128xf32> to vector<2x32xf32>
    %1480 = vector.extract_strided_slice %1460 {offsets = [0, 64], sizes = [2, 32], strides = [1, 1]} : vector<2x128xf32> to vector<2x32xf32>
    %1481 = arith.mulf %1470, %1480 : vector<2x32xf32>
    %1482 = arith.addf %1479, %1481 : vector<2x32xf32>
    %1483 = math.tanh %1482 : vector<2x32xf32>
    %cst_230 = arith.constant 1.000000e+00 : f32
    %1484 = vector.broadcast %cst_230 : f32 to vector<2x32xf32>
    %1485 = arith.subf %1484, %1478 : vector<2x32xf32>
    %1486 = arith.mulf %1485, %1483 : vector<2x32xf32>
    %1487 = vector.extract_strided_slice %1453 {offsets = [0, 0], sizes = [2, 32], strides = [1, 1]} : vector<2x64xf32> to vector<2x32xf32>
    %1488 = arith.mulf %1478, %1487 : vector<2x32xf32>
    %1489 = arith.addf %1486, %1488 : vector<2x32xf32>
    %1490 = vector.extract_strided_slice %1461 {offsets = [0, 0], sizes = [2, 32], strides = [1, 1]} : vector<2x128xf32> to vector<2x32xf32>
    %1491 = vector.extract_strided_slice %1462 {offsets = [0, 0], sizes = [2, 32], strides = [1, 1]} : vector<2x128xf32> to vector<2x32xf32>
    %1492 = arith.addf %1490, %1491 : vector<2x32xf32>
    %1493 = arith.negf %1492 : vector<2x32xf32>
    %1494 = math.exp %1493 : vector<2x32xf32>
    %cst_231 = arith.constant 1.000000e+00 : f32
    %1495 = vector.broadcast %cst_231 : f32 to vector<2x32xf32>
    %1496 = arith.addf %1495, %1494 : vector<2x32xf32>
    %1497 = arith.divf %1495, %1496 : vector<2x32xf32>
    %1498 = vector.extract_strided_slice %1461 {offsets = [0, 32], sizes = [2, 32], strides = [1, 1]} : vector<2x128xf32> to vector<2x32xf32>
    %1499 = vector.extract_strided_slice %1462 {offsets = [0, 32], sizes = [2, 32], strides = [1, 1]} : vector<2x128xf32> to vector<2x32xf32>
    %1500 = arith.addf %1498, %1499 : vector<2x32xf32>
    %1501 = arith.negf %1500 : vector<2x32xf32>
    %1502 = math.exp %1501 : vector<2x32xf32>
    %cst_232 = arith.constant 1.000000e+00 : f32
    %1503 = vector.broadcast %cst_232 : f32 to vector<2x32xf32>
    %1504 = arith.addf %1503, %1502 : vector<2x32xf32>
    %1505 = arith.divf %1503, %1504 : vector<2x32xf32>
    %1506 = vector.extract_strided_slice %1461 {offsets = [0, 64], sizes = [2, 32], strides = [1, 1]} : vector<2x128xf32> to vector<2x32xf32>
    %1507 = vector.extract_strided_slice %1462 {offsets = [0, 64], sizes = [2, 32], strides = [1, 1]} : vector<2x128xf32> to vector<2x32xf32>
    %1508 = arith.mulf %1497, %1507 : vector<2x32xf32>
    %1509 = arith.addf %1506, %1508 : vector<2x32xf32>
    %1510 = math.tanh %1509 : vector<2x32xf32>
    %cst_233 = arith.constant 1.000000e+00 : f32
    %1511 = vector.broadcast %cst_233 : f32 to vector<2x32xf32>
    %1512 = arith.subf %1511, %1505 : vector<2x32xf32>
    %1513 = arith.mulf %1512, %1510 : vector<2x32xf32>
    %1514 = vector.extract_strided_slice %1453 {offsets = [0, 32], sizes = [2, 32], strides = [1, 1]} : vector<2x64xf32> to vector<2x32xf32>
    %1515 = arith.mulf %1505, %1514 : vector<2x32xf32>
    %1516 = arith.addf %1513, %1515 : vector<2x32xf32>
    %1517 = tpu.concatenate %1489, %1516 in 1 : vector<2x32xf32>, vector<2x32xf32> -> vector<2x64xf32>
    %1518 = tpu.concatenate %1133, %1197, %1261, %1325, %1389, %1453, %1517 in 0 : vector<2x64xf32>, vector<2x64xf32>, vector<2x64xf32>, vector<2x64xf32>, vector<2x64xf32>, vector<2x64xf32>, vector<2x64xf32> -> vector<14x64xf32>
    %1519 = arith.truncf %1518 : vector<14x64xf32> to vector<14x64xbf16>
    %c0_234 = arith.constant 0 : index
    %c0_235 = arith.constant 0 : index
    %1520 = vector.load %arg22[%c0_234, %c0_235] : memref<64x64xbf16, #tpu.memory_space<vmem>>, vector<64x64xbf16>
    %cst_236 = arith.constant dense<0.000000e+00> : vector<14x64xf32>
    %1521 = tpu.matmul %1519, %1520, %cst_236 {dimension_numbers = #tpu.dot_dimension_numbers<[1], [0], [0], [1], [0, 0, 1, 1], [], []>} : vector<14x64xbf16>, vector<64x64xbf16>, vector<14x64xf32> -> vector<14x64xf32>
    %c0_237 = arith.constant 0 : index
    %c0_238 = arith.constant 0 : index
    %1522 = vector.load %arg23[%c0_237, %c0_238] : memref<1x64xf32, #tpu.memory_space<vmem>>, vector<1x64xf32>
    %1523 = vector.broadcast %1522 : vector<1x64xf32> to vector<14x64xf32>
    %1524 = arith.addf %1521, %1523 : vector<14x64xf32>
    %cst_239 = arith.constant dense<0xFF800000> : vector<14xf32>
    %1525 = vector.multi_reduction <maximumf>, %1524, %cst_239 [1] : vector<14x64xf32> to vector<14xf32>
    %1526 = vector.shape_cast %1525 : vector<14xf32> to vector<14x1xf32>
    %1527 = vector.broadcast %1526 : vector<14x1xf32> to vector<14x64xf32>
    %1528 = arith.subf %1524, %1527 : vector<14x64xf32>
    %1529 = math.exp %1528 : vector<14x64xf32>
    %cst_240 = arith.constant dense<0.000000e+00> : vector<14xf32>
    %1530 = vector.multi_reduction <add>, %1529, %cst_240 [1] : vector<14x64xf32> to vector<14xf32>
    %1531 = vector.shape_cast %1530 : vector<14xf32> to vector<14x1xf32>
    %1532 = math.log %1531 : vector<14x1xf32>
    %1533 = vector.broadcast %1532 : vector<14x1xf32> to vector<14x64xf32>
    %1534 = arith.subf %1528, %1533 : vector<14x64xf32>
    %c0_241 = arith.constant 0 : index
    %c0_242 = arith.constant 0 : index
    %1535 = vector.load %arg3[%c0_241, %c0_242] : memref<14x64xf32, #tpu.memory_space<vmem>>, vector<14x64xf32>
    %1536 = arith.mulf %1534, %1535 : vector<14x64xf32>
    %1537 = vector.shape_cast %1536 : vector<14x64xf32> to vector<1x14x64xf32>
    %cst_243 = arith.constant dense<0.000000e+00> : vector<1xf32>
    %1538 = vector.multi_reduction <add>, %1537, %cst_243 [1, 2] : vector<1x14x64xf32> to vector<1xf32>
    %1539 = vector.shape_cast %1538 : vector<1xf32> to vector<1x1x1xf32>
    %1540 = vector.extract %1539[0, 0, 0] : f32 from vector<1x1x1xf32>
    %1541 = vector.shape_cast %1535 : vector<14x64xf32> to vector<1x14x64xf32>
    %cst_244 = arith.constant dense<0.000000e+00> : vector<1xf32>
    %1542 = vector.multi_reduction <add>, %1541, %cst_244 [1, 2] : vector<1x14x64xf32> to vector<1xf32>
    %1543 = vector.shape_cast %1542 : vector<1xf32> to vector<1x1x1xf32>
    %1544 = vector.extract %1543[0, 0, 0] : f32 from vector<1x1x1xf32>
    %cst_245 = arith.constant 0.000000e+00 : f32
    %1545 = arith.subf %cst_245, %1540 : f32
    %cst_246 = arith.constant 1.000000e+00 : f32
    %1546 = arith.maximumf %1544, %cst_246 : f32
    %1547 = arith.divf %1545, %1546 : f32
    %1548 = vector.broadcast %1037 : f32 to vector<1x1xf32>
    %1549 = vector.shape_cast %1548 : vector<1x1xf32> to vector<1x1xf32>
    %1550 = vector.broadcast %1549 : vector<1x1xf32> to vector<2x1xf32>
    %1551 = vector.broadcast %1547 : f32 to vector<1x1xf32>
    %1552 = vector.shape_cast %1551 : vector<1x1xf32> to vector<1x1xf32>
    %1553 = vector.broadcast %1552 : vector<1x1xf32> to vector<2x1xf32>
    %1554 = vector.broadcast %1055 : f32 to vector<1x1xf32>
    %1555 = vector.shape_cast %1554 : vector<1x1xf32> to vector<1x1xf32>
    %1556 = vector.broadcast %1555 : vector<1x1xf32> to vector<2x1xf32>
    %cst_247 = arith.constant 0.000000e+00 : f32
    %1557 = vector.broadcast %cst_247 : f32 to vector<2x123xf32>
    %1558 = tpu.concatenate %1011, %1027, %1550, %1553, %1556, %1557 in 1 : vector<2x1xf32>, vector<2x1xf32>, vector<2x1xf32>, vector<2x1xf32>, vector<2x1xf32>, vector<2x123xf32> -> vector<2x128xf32>
    %cst_248 = arith.constant 0.000000e+00 : f32
    %1559 = vector.broadcast %cst_248 : f32 to vector<6x128xf32>
    %1560 = tpu.concatenate %1558, %1559 in 0 : vector<2x128xf32>, vector<6x128xf32> -> vector<8x128xf32>
    %c0_249 = arith.constant 0 : index
    %c0_250 = arith.constant 0 : index
    %1561 = vector.load %arg24[%c0_249, %c0_250] : memref<8x128xf32, #tpu.memory_space<vmem>>, vector<8x128xf32>
    tpu.vector_store %arg24[%c0_249, %c0_250], %1560 {strides = array<i32>} : memref<8x128xf32, #tpu.memory_space<vmem>>, vector<8x128xf32>,
    return
  }
}

</mosaic_0001>

<llo_original>
// kernel: vae_forward.1
$region0: #{vae_forward.1}
  #allocation0 [shape = 'u32[]', space=smem, size = 0x4, offset = 0x4, fixed_abs, tag = 'smem constant byte address 0x4 - core index']
  #allocation1 [shape = 'u32[144,128]{1,0:T(1,128)}', space=vmem, size = 0x12000, scoped, tag = 'internal scratch']
  %s0 = inlined_call_operand.vmem [shape: bf16[16,32], index: 0, kind: input, shape index: {}]
  %s1 = inlined_call_operand.vmem [shape: bf16[32,32], index: 1, kind: input, shape index: {}]
  %s2 = inlined_call_operand.vmem [shape: bf16[14,32], index: 2, kind: input, shape index: {}]
  %s3 = inlined_call_operand.vmem [shape: f32[14,64], index: 3, kind: input, shape index: {}]
  %s4 = inlined_call_operand.vmem [shape: bf16[32,256], index: 4, kind: input, shape index: {}]
  %s5 = inlined_call_operand.vmem [shape: bf16[64,256], index: 5, kind: input, shape index: {}]
  %s6 = inlined_call_operand.vmem [shape: f32[1,256], index: 6, kind: input, shape index: {}]
  %s7 = inlined_call_operand.vmem [shape: bf16[32,256], index: 7, kind: input, shape index: {}]
  %s8 = inlined_call_operand.vmem [shape: bf16[64,256], index: 8, kind: input, shape index: {}]
  %s9 = inlined_call_operand.vmem [shape: f32[1,256], index: 9, kind: input, shape index: {}]
  %s10 = inlined_call_operand.vmem [shape: bf16[64,128], index: 10, kind: input, shape index: {}]
  %s11 = inlined_call_operand.vmem [shape: f32[1,128], index: 11, kind: input, shape index: {}]
  %s12 = inlined_call_operand.vmem [shape: bf16[64,128], index: 12, kind: input, shape index: {}]
  %s13 = inlined_call_operand.vmem [shape: f32[1,128], index: 13, kind: input, shape index: {}]
  %s14 = inlined_call_operand.vmem [shape: f32[2,64], index: 14, kind: input, shape index: {}]
  %s15 = inlined_call_operand.vmem [shape: f32[4,64], index: 15, kind: input, shape index: {}]
  %s16 = inlined_call_operand.vmem [shape: bf16[64,64], index: 16, kind: input, shape index: {}]
  %s17 = inlined_call_operand.vmem [shape: f32[1,64], index: 17, kind: input, shape index: {}]
  %s18 = inlined_call_operand.vmem [shape: bf16[32,256], index: 18, kind: input, shape index: {}]
  %s19 = inlined_call_operand.vmem [shape: bf16[64,256], index: 19, kind: input, shape index: {}]
  %s20 = inlined_call_operand.vmem [shape: f32[1,256], index: 20, kind: input, shape index: {}]
  %s21 = inlined_call_operand.vmem [shape: f32[1,256], index: 21, kind: input, shape index: {}]
  %s22 = inlined_call_operand.vmem [shape: bf16[64,64], index: 22, kind: input, shape index: {}]
  %s23 = inlined_call_operand.vmem [shape: f32[1,64], index: 23, kind: input, shape index: {}]
  %s24 = inlined_call_operand.vmem [shape: f32[8,128], index: 24, kind: output, shape index: {}]
  %s25 = sld [smem:[#allocation0]]
  $region106: #{vae_forward.1} parent=0
    _
  %s27 = ssub.s32 1, %s25
  %s28 = scalar_select 0, %s27, %s25
  // Predicated region
  $region2: #{vae_forward.1} parent=0 // pred_check
    _
  $region3: #{vae_forward.1} parent=0 // pred_check_branch
    %30 = sbr.rel (0) target = $region5
  $region4: #{vae_forward.1} parent=0 // pred_region
    _
  $region5: #{vae_forward.1} parent=0 // pred_fallthru
    _
  // Predicated region
  $region6: #{vae_forward.1} parent=0 // pred_check
    _
  $region7: #{vae_forward.1} parent=0 // pred_check_branch
    %32 = sbr.rel (0) target = $region9
  $region8: #{vae_forward.1} parent=0 // pred_region
    _
  $region9: #{vae_forward.1} parent=0 // pred_fallthru
    _
  // Predicated region
  $region10: #{vae_forward.1} parent=0 // pred_check
    _
  $region11: #{vae_forward.1} parent=0 // pred_check_branch
    %34 = sbr.rel (0) target = $region13
  $region12: #{vae_forward.1} parent=0 // pred_region
    _
  $region13: #{vae_forward.1} parent=0 // pred_fallthru
    _
  // Predicated region
  $region14: #{vae_forward.1} parent=0 // pred_check
    _
  $region15: #{vae_forward.1} parent=0 // pred_check_branch
    %36 = sbr.rel (0) target = $region17
  $region16: #{vae_forward.1} parent=0 // pred_region
    _
  $region17: #{vae_forward.1} parent=0 // pred_fallthru
    _
  // Predicated region
  $region18: #{vae_forward.1} parent=0 // pred_check
    _
  $region19: #{vae_forward.1} parent=0 // pred_check_branch
    %38 = sbr.rel (0) target = $region21
  $region20: #{vae_forward.1} parent=0 // pred_region
    _
  $region21: #{vae_forward.1} parent=0 // pred_fallthru
    _
  // Predicated region
  $region22: #{vae_forward.1} parent=0 // pred_check
    _
  $region23: #{vae_forward.1} parent=0 // pred_check_branch
    %40 = sbr.rel (0) target = $region25
  $region24: #{vae_forward.1} parent=0 // pred_region
    _
  $region25: #{vae_forward.1} parent=0 // pred_fallthru
    _
  // Predicated region
  $region26: #{vae_forward.1} parent=0 // pred_check
    _
  $region27: #{vae_forward.1} parent=0 // pred_check_branch
    %42 = sbr.rel (0) target = $region29
  $region28: #{vae_forward.1} parent=0 // pred_region
    _
  $region29: #{vae_forward.1} parent=0 // pred_fallthru
    _
  // Predicated region
  $region30: #{vae_forward.1} parent=0 // pred_check
    _
  $region31: #{vae_forward.1} parent=0 // pred_check_branch
    %44 = sbr.rel (0) target = $region33
  $region32: #{vae_forward.1} parent=0 // pred_region
    _
  $region33: #{vae_forward.1} parent=0 // pred_fallthru
    _
  // Predicated region
  $region34: #{vae_forward.1} parent=0 // pred_check
    _
  $region35: #{vae_forward.1} parent=0 // pred_check_branch
    %46 = sbr.rel (0) target = $region37
  $region36: #{vae_forward.1} parent=0 // pred_region
    _
  $region37: #{vae_forward.1} parent=0 // pred_fallthru
    _
  // Predicated region
  $region38: #{vae_forward.1} parent=0 // pred_check
    _
  $region39: #{vae_forward.1} parent=0 // pred_check_branch
    %48 = sbr.rel (0) target = $region41
  $region40: #{vae_forward.1} parent=0 // pred_region
    _
  $region41: #{vae_forward.1} parent=0 // pred_fallthru
    _
  // Predicated region
  $region42: #{vae_forward.1} parent=0 // pred_check
    _
  $region43: #{vae_forward.1} parent=0 // pred_check_branch
    %50 = sbr.rel (0) target = $region45
  $region44: #{vae_forward.1} parent=0 // pred_region
    _
  $region45: #{vae_forward.1} parent=0 // pred_fallthru
    _
  // Predicated region
  $region46: #{vae_forward.1} parent=0 // pred_check
    _
  $region47: #{vae_forward.1} parent=0 // pred_check_branch
    %52 = sbr.rel (0) target = $region49
  $region48: #{vae_forward.1} parent=0 // pred_region
    _
  $region49: #{vae_forward.1} parent=0 // pred_fallthru
    _
  // Predicated region
  $region50: #{vae_forward.1} parent=0 // pred_check
    _
  $region51: #{vae_forward.1} parent=0 // pred_check_branch
    %54 = sbr.rel (0) target = $region53
  $region52: #{vae_forward.1} parent=0 // pred_region
    _
  $region53: #{vae_forward.1} parent=0 // pred_fallthru
    _
  // Predicated region
  $region54: #{vae_forward.1} parent=0 // pred_check
    _
  $region55: #{vae_forward.1} parent=0 // pred_check_branch
    %56 = sbr.rel (0) target = $region57
  $region56: #{vae_forward.1} parent=0 // pred_region
    _
  $region57: #{vae_forward.1} parent=0 // pred_fallthru
    _
  // Predicated region
  $region58: #{vae_forward.1} parent=0 // pred_check
    _
  $region59: #{vae_forward.1} parent=0 // pred_check_branch
    %58 = sbr.rel (0) target = $region61
  $region60: #{vae_forward.1} parent=0 // pred_region
    _
  $region61: #{vae_forward.1} parent=0 // pred_fallthru
    _
  // Predicated region
  $region62: #{vae_forward.1} parent=0 // pred_check
    _
  $region63: #{vae_forward.1} parent=0 // pred_check_branch
    %60 = sbr.rel (0) target = $region65
  $region64: #{vae_forward.1} parent=0 // pred_region
    _
  $region65: #{vae_forward.1} parent=0 // pred_fallthru
    _
  // Predicated region
  $region66: #{vae_forward.1} parent=0 // pred_check
    _
  $region67: #{vae_forward.1} parent=0 // pred_check_branch
    %62 = sbr.rel (0) target = $region69
  $region68: #{vae_forward.1} parent=0 // pred_region
    _
  $region69: #{vae_forward.1} parent=0 // pred_fallthru
    _
  // Predicated region
  $region70: #{vae_forward.1} parent=0 // pred_check
    _
  $region71: #{vae_forward.1} parent=0 // pred_check_branch
    %64 = sbr.rel (0) target = $region73
  $region72: #{vae_forward.1} parent=0 // pred_region
    _
  $region73: #{vae_forward.1} parent=0 // pred_fallthru
    _
  // Predicated region
  $region74: #{vae_forward.1} parent=0 // pred_check
    _
  $region75: #{vae_forward.1} parent=0 // pred_check_branch
    %66 = sbr.rel (0) target = $region77
  $region76: #{vae_forward.1} parent=0 // pred_region
    _
  $region77: #{vae_forward.1} parent=0 // pred_fallthru
    _
  // Predicated region
  $region78: #{vae_forward.1} parent=0 // pred_check
    _
  $region79: #{vae_forward.1} parent=0 // pred_check_branch
    %68 = sbr.rel (0) target = $region81
  $region80: #{vae_forward.1} parent=0 // pred_region
    _
  $region81: #{vae_forward.1} parent=0 // pred_fallthru
    _
  // Predicated region
  $region82: #{vae_forward.1} parent=0 // pred_check
    _
  $region83: #{vae_forward.1} parent=0 // pred_check_branch
    %70 = sbr.rel (0) target = $region85
  $region84: #{vae_forward.1} parent=0 // pred_region
    _
  $region85: #{vae_forward.1} parent=0 // pred_fallthru
    _
  // Predicated region
  $region86: #{vae_forward.1} parent=0 // pred_check
    _
  $region87: #{vae_forward.1} parent=0 // pred_check_branch
    %72 = sbr.rel (0) target = $region89
  $region88: #{vae_forward.1} parent=0 // pred_region
    _
  $region89: #{vae_forward.1} parent=0 // pred_fallthru
    _
  // Predicated region
  $region90: #{vae_forward.1} parent=0 // pred_check
    _
  $region91: #{vae_forward.1} parent=0 // pred_check_branch
    %74 = sbr.rel (0) target = $region93
  $region92: #{vae_forward.1} parent=0 // pred_region
    _
  $region93: #{vae_forward.1} parent=0 // pred_fallthru
    _
  // Predicated region
  $region94: #{vae_forward.1} parent=0 // pred_check
    _
  $region95: #{vae_forward.1} parent=0 // pred_check_branch
    %76 = sbr.rel (0) target = $region97
  $region96: #{vae_forward.1} parent=0 // pred_region
    _
  $region97: #{vae_forward.1} parent=0 // pred_fallthru
    _
  %v78 = vld [vmem:[%s0] sm:$0xf]
  %v79 = vld [vmem:[%s0 + $0x4] sm:$0xf]
  %v80 = vld [vmem:[%s4] sm:$0xff]
  %v81 = vld [vmem:[%s4 + $0x8] sm:$0xff]
  %v82 = vld [vmem:[%s4 + $0x10] sm:$0xff]
  %v83 = vld [vmem:[%s4 + $0x18] sm:$0xff]
  %v84 = vld [vmem:[%s6] sm:$0x3]
  %v86 = vlaneseq
  %v87 = vshrl.u32 %v86, 7
  %v88 = vsub.s32 0, %v87
  %v89 = vrot.slane %v84, %v88
  %v90 = vlaneseq
  %v91 = vshrl.u32 %v90, 7
  %v92 = vsub.s32 1, %v91
  %v93 = vrot.slane %v84, %v92
  %v98 = vunpack.c.l.b16 %v78
  %v99 = vunpack.c.l.b16 %v79
  %v100 = vpack.c.b16 %v99, %v98
  %v105 = vunpack.c.l.b16 %v80
  %v106 = vunpack.c.h.b16 %v80
  %v107 = vunpack.c.l.b16 %v81
  %v108 = vunpack.c.h.b16 %v81
  %v109 = vunpack.c.l.b16 %v82
  %v110 = vunpack.c.h.b16 %v82
  %v111 = vunpack.c.l.b16 %v83
  %v112 = vunpack.c.h.b16 %v83
  %v113 = vpack.c.b16 %v107, %v105
  %v114 = vpack.c.b16 %v108, %v106
  %v115 = vpack.c.b16 %v111, %v109
  %v116 = vpack.c.b16 %v112, %v110
  %vm121 = vcmask 261120
  %v123 = vsel %vm121, %v100, 0
  %125 = vmatprep.subr.bf16.mxu0 0
  %126 = vmatpush1.bf16.msra.mxu0 0
  %127 = vmatprep.subr.bf16.mxu0 0
  %128 = vmatpush1.bf16.msra.mxu0 0
  %129 = vmatprep.subr.bf16.mxu0 0
  %130 = vmatpush1.bf16.msra.mxu0 0
  %131 = vmatprep.subr.bf16.mxu0 0
  %132 = vmatpush1.bf16.msra.mxu0 0
  %133 = vmatprep.subr.bf16.mxu0 0
  %134 = vmatpush1.bf16.msra.mxu0 0
  %135 = vmatprep.subr.bf16.mxu0 0
  %136 = vmatpush1.bf16.msra.mxu0 0
  %137 = vmatprep.subr.bf16.mxu0 %v116
  %138 = vmatpush1.bf16.msra.mxu0 %v115
  %139 = vmatprep.subr.bf16.mxu0 %v114
  %140 = vmatpush1.bf16.msra.mxu0 %v113
  %141 = vmatprep.subr.bf16.mxu0 0
  %142 = vmatpush2.bf16.msra.mxu0 0
  %143 = vmatprep.subr.bf16.mxu0 0
  %144 = vmatpush2.bf16.msra.mxu0 0
  %145 = vmatprep.subr.bf16.mxu0 0
  %146 = vmatpush2.bf16.msra.mxu0 0
  %147 = vmatprep.subr.bf16.mxu0 0
  %148 = vmatpush2.bf16.msra.mxu0 0
  %149 = vmatprep.subr.bf16.mxu0 0
  %150 = vmatpush2.bf16.msra.mxu0 0
  %151 = vmatprep.subr.bf16.mxu0 0
  %152 = vmatpush2.bf16.msra.mxu0 0
  %153 = vmatprep.subr.bf16.mxu0 0
  %154 = vmatpush2.bf16.msra.mxu0 0
  %155 = vmatprep.subr.bf16.mxu0 0
  %156 = vmatpush2.bf16.msra.mxu0 0
  %157 = vmatprep.mubr.bf16.mxu0 0
  %158 = vmatmul.mubr.bf16.gmra.mxu0 %v123
  %v159 = vpop.f32.mrf.mxu0
  %v160 = vadd.f32 %v89, %v159
  %v161 = vpop.f32.mrf.mxu0
  %v162 = vadd.f32 %v93, %v161
  %v163 = vpop.f32.mrf.mxu0
  %v164 = vadd.f32 %v89, %v163
  %v165 = vpop.f32.mrf.mxu0
  %v166 = vadd.f32 %v93, %v165
  %167 = vdwg.mxu0
  %v168 = vld [vmem:[%s5] sm:$0xff]
  %v169 = vld [vmem:[%s5 + $0x8] sm:$0xff]
  %v170 = vld [vmem:[%s5 + $0x10] sm:$0xff]
  %v171 = vld [vmem:[%s5 + $0x18] sm:$0xff]
  %v172 = vld [vmem:[%s5 + $0x20] sm:$0xff]
  %v173 = vld [vmem:[%s5 + $0x28] sm:$0xff]
  %v174 = vld [vmem:[%s5 + $0x30] sm:$0xff]
  %v175 = vld [vmem:[%s5 + $0x38] sm:$0xff]
  %v184 = vunpack.c.l.b16 %v168
  %v185 = vunpack.c.h.b16 %v168
  %v186 = vunpack.c.l.b16 %v169
  %v187 = vunpack.c.h.b16 %v169
  %v188 = vunpack.c.l.b16 %v170
  %v189 = vunpack.c.h.b16 %v170
  %v190 = vunpack.c.l.b16 %v171
  %v191 = vunpack.c.h.b16 %v171
  %v192 = vunpack.c.l.b16 %v172
  %v193 = vunpack.c.h.b16 %v172
  %v194 = vunpack.c.l.b16 %v173
  %v195 = vunpack.c.h.b16 %v173
  %v196 = vunpack.c.l.b16 %v174
  %v197 = vunpack.c.h.b16 %v174
  %v198 = vunpack.c.l.b16 %v175
  %v199 = vunpack.c.h.b16 %v175
  %v200 = vpack.c.b16 %v186, %v184
  %v201 = vpack.c.b16 %v187, %v185
  %v202 = vpack.c.b16 %v190, %v188
  %v203 = vpack.c.b16 %v191, %v189
  %v204 = vpack.c.b16 %v194, %v192
  %v205 = vpack.c.b16 %v195, %v193
  %v206 = vpack.c.b16 %v198, %v196
  %v207 = vpack.c.b16 %v199, %v197
  %vm216 = vcmask 523264
  %v218 = vsel %vm216, 0, 0
  %220 = vmatprep.subr.bf16.mxu0 0
  %221 = vmatpush1.bf16.msra.mxu0 0
  %222 = vmatprep.subr.bf16.mxu0 0
  %223 = vmatpush1.bf16.msra.mxu0 0
  %224 = vmatprep.subr.bf16.mxu0 0
  %225 = vmatpush1.bf16.msra.mxu0 0
  %226 = vmatprep.subr.bf16.mxu0 0
  %227 = vmatpush1.bf16.msra.mxu0 0
  %228 = vmatprep.subr.bf16.mxu0 %v207
  %229 = vmatpush1.bf16.msra.mxu0 %v206
  %230 = vmatprep.subr.bf16.mxu0 %v205
  %231 = vmatpush1.bf16.msra.mxu0 %v204
  %232 = vmatprep.subr.bf16.mxu0 %v203
  %233 = vmatpush1.bf16.msra.mxu0 %v202
  %234 = vmatprep.subr.bf16.mxu0 %v201
  %235 = vmatpush1.bf16.msra.mxu0 %v200
  %236 = vmatprep.subr.bf16.mxu0 0
  %237 = vmatpush2.bf16.msra.mxu0 0
  %238 = vmatprep.subr.bf16.mxu0 0
  %239 = vmatpush2.bf16.msra.mxu0 0
  %240 = vmatprep.subr.bf16.mxu0 0
  %241 = vmatpush2.bf16.msra.mxu0 0
  %242 = vmatprep.subr.bf16.mxu0 0
  %243 = vmatpush2.bf16.msra.mxu0 0
  %244 = vmatprep.subr.bf16.mxu0 0
  %245 = vmatpush2.bf16.msra.mxu0 0
  %246 = vmatprep.subr.bf16.mxu0 0
  %247 = vmatpush2.bf16.msra.mxu0 0
  %248 = vmatprep.subr.bf16.mxu0 0
  %249 = vmatpush2.bf16.msra.mxu0 0
  %250 = vmatprep.subr.bf16.mxu0 0
  %251 = vmatpush2.bf16.msra.mxu0 0
  %252 = vmatprep.mubr.bf16.mxu0 0
  %253 = vmatmul.mubr.bf16.gmra.mxu0 %v218
  %v254 = vpop.f32.mrf.mxu0
  %v255 = vadd.f32 0.0, %v254
  %v256 = vpop.f32.mrf.mxu0
  %v257 = vadd.f32 0.0, %v256
  %v258 = vpop.f32.mrf.mxu0
  %v259 = vpop.f32.mrf.mxu0
  %260 = vdwg.mxu0
  %v261 = vadd.f32 %v255, %v160
  %v263 = vrot.slane %v166, 6
  %v265 = vadd.f32 %v257, %v263
  %v266 = vxor.u32 %v261, 2147483648
  %v267 = vmul.f32 %v266, 1.442695
  %v268 = vpow.pop %v267
  %v269 = vadd.f32 %v268, 1.0
  %v270 = vrcp.pop %v269
  %v271 = vmul.f32 1.0, %v270
  %v272 = vtanh.pop %v261
  %v273 = vmul.f32 %v271, 0.0
  %275 = vrot.lane.b32.xlu0 %v272, 64
  %v276 = vpop.permute.xlu0 %275
  %v278 = vmul.f32 %v271, %v276
  %280 = vrot.lane.b32.xlu0 %v278, 32
  %v281 = vpop.permute.xlu0 %280
  %v283 = vadd.f32 %v273, %v281
  %v284 = vtanh.pop %v283
  %286 = vrot.lane.b32.xlu0 %v284, 64
  %v287 = vpop.permute.xlu0 %286
  %v289 = vmul.f32 %v271, %v287
  %v290 = vxor.u32 %v265, 2147483648
  %v291 = vmul.f32 %v290, 1.442695
  %v292 = vpow.pop %v291
  %v293 = vadd.f32 %v292, 1.0
  %v294 = vrcp.pop %v293
  %v295 = vmul.f32 1.0, %v294
  %v296 = vtanh.pop %v265
  %v297 = vmul.f32 %v295, 0.0
  %299 = vrot.lane.b32.xlu0 %v296, 64
  %v300 = vpop.permute.xlu0 %299
  %v302 = vmul.f32 %v295, %v300
  %304 = vrot.lane.b32.xlu0 %v302, 32
  %v305 = vpop.permute.xlu0 %304
  %v307 = vadd.f32 %v297, %v305
  %v308 = vtanh.pop %v307
  %310 = vrot.lane.b32.xlu0 %v308, 64
  %v311 = vpop.permute.xlu0 %310
  %v313 = vmul.f32 %v295, %v311
  %315 = vrot.lane.b32.xlu0 %v289, 32
  %v316 = vpop.permute.xlu0 %315
  %319 = vrot.lane.b32.xlu0 %v313, 64
  %v320 = vpop.permute.xlu0 %319
  %v322 = vsel %vm121, %v316, %v320
  %v323 = vpack.c.bf16 %v322, %v322
  %v325 = vsel %vm216, %v323, 0
  %327 = vmatprep.subr.bf16.mxu0 0
  %328 = vmatpush1.bf16.msra.mxu0 0
  %329 = vmatprep.subr.bf16.mxu0 0
  %330 = vmatpush1.bf16.msra.mxu0 0
  %331 = vmatprep.subr.bf16.mxu0 0
  %332 = vmatpush1.bf16.msra.mxu0 0
  %333 = vmatprep.subr.bf16.mxu0 0
  %334 = vmatpush1.bf16.msra.mxu0 0
  %335 = vmatprep.subr.bf16.mxu0 %v207
  %336 = vmatpush1.bf16.msra.mxu0 %v206
  %337 = vmatprep.subr.bf16.mxu0 %v205
  %338 = vmatpush1.bf16.msra.mxu0 %v204
  %339 = vmatprep.subr.bf16.mxu0 %v203
  %340 = vmatpush1.bf16.msra.mxu0 %v202
  %341 = vmatprep.subr.bf16.mxu0 %v201
  %342 = vmatpush1.bf16.msra.mxu0 %v200
  %343 = vmatprep.subr.bf16.mxu0 0
  %344 = vmatpush2.bf16.msra.mxu0 0
  %345 = vmatprep.subr.bf16.mxu0 0
  %346 = vmatpush2.bf16.msra.mxu0 0
  %347 = vmatprep.subr.bf16.mxu0 0
  %348 = vmatpush2.bf16.msra.mxu0 0
  %349 = vmatprep.subr.bf16.mxu0 0
  %350 = vmatpush2.bf16.msra.mxu0 0
  %351 = vmatprep.subr.bf16.mxu0 0
  %352 = vmatpush2.bf16.msra.mxu0 0
  %353 = vmatprep.subr.bf16.mxu0 0
  %354 = vmatpush2.bf16.msra.mxu0 0
  %355 = vmatprep.subr.bf16.mxu0 0
  %356 = vmatpush2.bf16.msra.mxu0 0
  %357 = vmatprep.subr.bf16.mxu0 0
  %358 = vmatpush2.bf16.msra.mxu0 0
  %359 = vmatprep.mubr.bf16.mxu0 0
  %360 = vmatmul.mubr.bf16.gmra.mxu0 %v325
  %v361 = vpop.f32.mrf.mxu0
  %v362 = vadd.f32 0.0, %v361
  %v363 = vpop.f32.mrf.mxu0
  %v364 = vadd.f32 0.0, %v363
  %v365 = vpop.f32.mrf.mxu0
  %v366 = vpop.f32.mrf.mxu0
  %367 = vdwg.mxu0
  %v369 = vrot.slane %v160, 2
  %v371 = vadd.f32 %v362, %v369
  %v372 = vrot.slane %v166, 4
  %v374 = vadd.f32 %v364, %v372
  %v375 = vxor.u32 %v371, 2147483648
  %v376 = vmul.f32 %v375, 1.442695
  %v377 = vpow.pop %v376
  %v378 = vadd.f32 %v377, 1.0
  %v379 = vrcp.pop %v378
  %v380 = vmul.f32 1.0, %v379
  %v381 = vtanh.pop %v371
  %v382 = vmul.f32 %v380, %v283
  %384 = vrot.lane.b32.xlu0 %v381, 64
  %v385 = vpop.permute.xlu0 %384
  %v387 = vmul.f32 %v380, %v385
  %389 = vrot.lane.b32.xlu0 %v387, 32
  %v390 = vpop.permute.xlu0 %389
  %v392 = vadd.f32 %v382, %v390
  %v393 = vtanh.pop %v392
  %395 = vrot.lane.b32.xlu0 %v393, 64
  %v396 = vpop.permute.xlu0 %395
  %v398 = vmul.f32 %v380, %v396
  %v399 = vxor.u32 %v374, 2147483648
  %v400 = vmul.f32 %v399, 1.442695
  %v401 = vpow.pop %v400
  %v402 = vadd.f32 %v401, 1.0
  %v403 = vrcp.pop %v402
  %v404 = vmul.f32 1.0, %v403
  %v405 = vtanh.pop %v374
  %v406 = vmul.f32 %v404, %v307
  %408 = vrot.lane.b32.xlu0 %v405, 64
  %v409 = vpop.permute.xlu0 %408
  %v411 = vmul.f32 %v404, %v409
  %413 = vrot.lane.b32.xlu0 %v411, 32
  %v414 = vpop.permute.xlu0 %413
  %v416 = vadd.f32 %v406, %v414
  %v417 = vtanh.pop %v416
  %419 = vrot.lane.b32.xlu0 %v417, 64
  %v420 = vpop.permute.xlu0 %419
  %v422 = vmul.f32 %v404, %v420
  %424 = vrot.lane.b32.xlu0 %v398, 32
  %v425 = vpop.permute.xlu0 %424
  %428 = vrot.lane.b32.xlu0 %v422, 64
  %v429 = vpop.permute.xlu0 %428
  %v431 = vsel %vm121, %v425, %v429
  %v432 = vpack.c.bf16 %v431, %v431
  %v434 = vsel %vm216, %v432, 0
  %436 = vmatprep.subr.bf16.mxu0 0
  %437 = vmatpush1.bf16.msra.mxu0 0
  %438 = vmatprep.subr.bf16.mxu0 0
  %439 = vmatpush1.bf16.msra.mxu0 0
  %440 = vmatprep.subr.bf16.mxu0 0
  %441 = vmatpush1.bf16.msra.mxu0 0
  %442 = vmatprep.subr.bf16.mxu0 0
  %443 = vmatpush1.bf16.msra.mxu0 0
  %444 = vmatprep.subr.bf16.mxu0 %v207
  %445 = vmatpush1.bf16.msra.mxu0 %v206
  %446 = vmatprep.subr.bf16.mxu0 %v205
  %447 = vmatpush1.bf16.msra.mxu0 %v204
  %448 = vmatprep.subr.bf16.mxu0 %v203
  %449 = vmatpush1.bf16.msra.mxu0 %v202
  %450 = vmatprep.subr.bf16.mxu0 %v201
  %451 = vmatpush1.bf16.msra.mxu0 %v200
  %452 = vmatprep.subr.bf16.mxu0 0
  %453 = vmatpush2.bf16.msra.mxu0 0
  %454 = vmatprep.subr.bf16.mxu0 0
  %455 = vmatpush2.bf16.msra.mxu0 0
  %456 = vmatprep.subr.bf16.mxu0 0
  %457 = vmatpush2.bf16.msra.mxu0 0
  %458 = vmatprep.subr.bf16.mxu0 0
  %459 = vmatpush2.bf16.msra.mxu0 0
  %460 = vmatprep.subr.bf16.mxu0 0
  %461 = vmatpush2.bf16.msra.mxu0 0
  %462 = vmatprep.subr.bf16.mxu0 0
  %463 = vmatpush2.bf16.msra.mxu0 0
  %464 = vmatprep.subr.bf16.mxu0 0
  %465 = vmatpush2.bf16.msra.mxu0 0
  %466 = vmatprep.subr.bf16.mxu0 0
  %467 = vmatpush2.bf16.msra.mxu0 0
  %468 = vmatprep.mubr.bf16.mxu0 0
  %469 = vmatmul.mubr.bf16.gmra.mxu0 %v434
  %v470 = vpop.f32.mrf.mxu0
  %v471 = vadd.f32 0.0, %v470
  %v472 = vpop.f32.mrf.mxu0
  %v473 = vadd.f32 0.0, %v472
  %v474 = vpop.f32.mrf.mxu0
  %v475 = vpop.f32.mrf.mxu0
  %476 = vdwg.mxu0
  %v477 = vrot.slane %v160, 4
  %v479 = vadd.f32 %v471, %v477
  %v480 = vrot.slane %v166, 2
  %v482 = vadd.f32 %v473, %v480
  %v483 = vxor.u32 %v479, 2147483648
  %v484 = vmul.f32 %v483, 1.442695
  %v485 = vpow.pop %v484
  %v486 = vadd.f32 %v485, 1.0
  %v487 = vrcp.pop %v486
  %v488 = vmul.f32 1.0, %v487
  %v489 = vtanh.pop %v479
  %v490 = vmul.f32 %v488, %v392
  %492 = vrot.lane.b32.xlu0 %v489, 64
  %v493 = vpop.permute.xlu0 %492
  %v495 = vmul.f32 %v488, %v493
  %497 = vrot.lane.b32.xlu0 %v495, 32
  %v498 = vpop.permute.xlu0 %497
  %v500 = vadd.f32 %v490, %v498
  %v501 = vtanh.pop %v500
  %503 = vrot.lane.b32.xlu0 %v501, 64
  %v504 = vpop.permute.xlu0 %503
  %v506 = vmul.f32 %v488, %v504
  %v507 = vxor.u32 %v482, 2147483648
  %v508 = vmul.f32 %v507, 1.442695
  %v509 = vpow.pop %v508
  %v510 = vadd.f32 %v509, 1.0
  %v511 = vrcp.pop %v510
  %v512 = vmul.f32 1.0, %v511
  %v513 = vtanh.pop %v482
  %v514 = vmul.f32 %v512, %v416
  %516 = vrot.lane.b32.xlu0 %v513, 64
  %v517 = vpop.permute.xlu0 %516
  %v519 = vmul.f32 %v512, %v517
  %521 = vrot.lane.b32.xlu0 %v519, 32
  %v522 = vpop.permute.xlu0 %521
  %v524 = vadd.f32 %v514, %v522
  %v525 = vtanh.pop %v524
  %527 = vrot.lane.b32.xlu0 %v525, 64
  %v528 = vpop.permute.xlu0 %527
  %v530 = vmul.f32 %v512, %v528
  %532 = vrot.lane.b32.xlu0 %v506, 32
  %v533 = vpop.permute.xlu0 %532
  %536 = vrot.lane.b32.xlu0 %v530, 64
  %v537 = vpop.permute.xlu0 %536
  %v539 = vsel %vm121, %v533, %v537
  %v540 = vpack.c.bf16 %v539, %v539
  %v542 = vsel %vm216, %v540, 0
  %544 = vmatprep.subr.bf16.mxu0 0
  %545 = vmatpush1.bf16.msra.mxu0 0
  %546 = vmatprep.subr.bf16.mxu0 0
  %547 = vmatpush1.bf16.msra.mxu0 0
  %548 = vmatprep.subr.bf16.mxu0 0
  %549 = vmatpush1.bf16.msra.mxu0 0
  %550 = vmatprep.subr.bf16.mxu0 0
  %551 = vmatpush1.bf16.msra.mxu0 0
  %552 = vmatprep.subr.bf16.mxu0 %v207
  %553 = vmatpush1.bf16.msra.mxu0 %v206
  %554 = vmatprep.subr.bf16.mxu0 %v205
  %555 = vmatpush1.bf16.msra.mxu0 %v204
  %556 = vmatprep.subr.bf16.mxu0 %v203
  %557 = vmatpush1.bf16.msra.mxu0 %v202
  %558 = vmatprep.subr.bf16.mxu0 %v201
  %559 = vmatpush1.bf16.msra.mxu0 %v200
  %560 = vmatprep.subr.bf16.mxu0 0
  %561 = vmatpush2.bf16.msra.mxu0 0
  %562 = vmatprep.subr.bf16.mxu0 0
  %563 = vmatpush2.bf16.msra.mxu0 0
  %564 = vmatprep.subr.bf16.mxu0 0
  %565 = vmatpush2.bf16.msra.mxu0 0
  %566 = vmatprep.subr.bf16.mxu0 0
  %567 = vmatpush2.bf16.msra.mxu0 0
  %568 = vmatprep.subr.bf16.mxu0 0
  %569 = vmatpush2.bf16.msra.mxu0 0
  %570 = vmatprep.subr.bf16.mxu0 0
  %571 = vmatpush2.bf16.msra.mxu0 0
  %572 = vmatprep.subr.bf16.mxu0 0
  %573 = vmatpush2.bf16.msra.mxu0 0
  %574 = vmatprep.subr.bf16.mxu0 0
  %575 = vmatpush2.bf16.msra.mxu0 0
  %576 = vmatprep.mubr.bf16.mxu0 0
  %577 = vmatmul.mubr.bf16.gmra.mxu0 %v542
  %v578 = vpop.f32.mrf.mxu0
  %v579 = vadd.f32 0.0, %v578
  %v580 = vpop.f32.mrf.mxu0
  %v581 = vadd.f32 0.0, %v580
  %v582 = vpop.f32.mrf.mxu0
  %v583 = vpop.f32.mrf.mxu0
  %584 = vdwg.mxu0
  %v585 = vrot.slane %v160, 6
  %v587 = vadd.f32 %v579, %v585
  %v588 = vadd.f32 %v581, %v166
  %v589 = vxor.u32 %v587, 2147483648
  %v590 = vmul.f32 %v589, 1.442695
  %v591 = vpow.pop %v590
  %v592 = vadd.f32 %v591, 1.0
  %v593 = vrcp.pop %v592
  %v594 = vmul.f32 1.0, %v593
  %v595 = vtanh.pop %v587
  %v596 = vmul.f32 %v594, %v500
  %598 = vrot.lane.b32.xlu0 %v595, 64
  %v599 = vpop.permute.xlu0 %598
  %v601 = vmul.f32 %v594, %v599
  %603 = vrot.lane.b32.xlu0 %v601, 32
  %v604 = vpop.permute.xlu0 %603
  %v606 = vadd.f32 %v596, %v604
  %v607 = vtanh.pop %v606
  %609 = vrot.lane.b32.xlu0 %v607, 64
  %v610 = vpop.permute.xlu0 %609
  %v612 = vmul.f32 %v594, %v610
  %v613 = vxor.u32 %v588, 2147483648
  %v614 = vmul.f32 %v613, 1.442695
  %v615 = vpow.pop %v614
  %v616 = vadd.f32 %v615, 1.0
  %v617 = vrcp.pop %v616
  %v618 = vmul.f32 1.0, %v617
  %v619 = vtanh.pop %v588
  %v620 = vmul.f32 %v618, %v524
  %622 = vrot.lane.b32.xlu0 %v619, 64
  %v623 = vpop.permute.xlu0 %622
  %v625 = vmul.f32 %v618, %v623
  %627 = vrot.lane.b32.xlu0 %v625, 32
  %v628 = vpop.permute.xlu0 %627
  %v630 = vadd.f32 %v620, %v628
  %v631 = vtanh.pop %v630
  %633 = vrot.lane.b32.xlu0 %v631, 64
  %v634 = vpop.permute.xlu0 %633
  %v636 = vmul.f32 %v618, %v634
  %638 = vrot.lane.b32.xlu0 %v612, 32
  %v639 = vpop.permute.xlu0 %638
  %642 = vrot.lane.b32.xlu0 %v636, 64
  %v643 = vpop.permute.xlu0 %642
  %v645 = vsel %vm121, %v639, %v643
  %v646 = vpack.c.bf16 %v645, %v645
  %v648 = vsel %vm216, %v646, 0
  %650 = vmatprep.subr.bf16.mxu0 0
  %651 = vmatpush1.bf16.msra.mxu0 0
  %652 = vmatprep.subr.bf16.mxu0 0
  %653 = vmatpush1.bf16.msra.mxu0 0
  %654 = vmatprep.subr.bf16.mxu0 0
  %655 = vmatpush1.bf16.msra.mxu0 0
  %656 = vmatprep.subr.bf16.mxu0 0
  %657 = vmatpush1.bf16.msra.mxu0 0
  %658 = vmatprep.subr.bf16.mxu0 %v207
  %659 = vmatpush1.bf16.msra.mxu0 %v206
  %660 = vmatprep.subr.bf16.mxu0 %v205
  %661 = vmatpush1.bf16.msra.mxu0 %v204
  %662 = vmatprep.subr.bf16.mxu0 %v203
  %663 = vmatpush1.bf16.msra.mxu0 %v202
  %664 = vmatprep.subr.bf16.mxu0 %v201
  %665 = vmatpush1.bf16.msra.mxu0 %v200
  %666 = vmatprep.subr.bf16.mxu0 0
  %667 = vmatpush2.bf16.msra.mxu0 0
  %668 = vmatprep.subr.bf16.mxu0 0
  %669 = vmatpush2.bf16.msra.mxu0 0
  %670 = vmatprep.subr.bf16.mxu0 0
  %671 = vmatpush2.bf16.msra.mxu0 0
  %672 = vmatprep.subr.bf16.mxu0 0
  %673 = vmatpush2.bf16.msra.mxu0 0
  %674 = vmatprep.subr.bf16.mxu0 0
  %675 = vmatpush2.bf16.msra.mxu0 0
  %676 = vmatprep.subr.bf16.mxu0 0
  %677 = vmatpush2.bf16.msra.mxu0 0
  %678 = vmatprep.subr.bf16.mxu0 0
  %679 = vmatpush2.bf16.msra.mxu0 0
  %680 = vmatprep.subr.bf16.mxu0 0
  %681 = vmatpush2.bf16.msra.mxu0 0
  %682 = vmatprep.mubr.bf16.mxu0 0
  %683 = vmatmul.mubr.bf16.gmra.mxu0 %v648
  %v684 = vpop.f32.mrf.mxu0
  %v685 = vadd.f32 0.0, %v684
  %v686 = vpop.f32.mrf.mxu0
  %v687 = vadd.f32 0.0, %v686
  %v688 = vpop.f32.mrf.mxu0
  %v689 = vpop.f32.mrf.mxu0
  %690 = vdwg.mxu0
  %v691 = vadd.f32 %v685, %v164
  %v693 = vrot.slane %v162, 6
  %v695 = vadd.f32 %v687, %v693
  %v696 = vxor.u32 %v691, 2147483648
  %v697 = vmul.f32 %v696, 1.442695
  %v698 = vpow.pop %v697
  %v699 = vadd.f32 %v698, 1.0
  %v700 = vrcp.pop %v699
  %v701 = vmul.f32 1.0, %v700
  %v702 = vtanh.pop %v691
  %v703 = vmul.f32 %v701, %v606
  %705 = vrot.lane.b32.xlu0 %v702, 64
  %v706 = vpop.permute.xlu0 %705
  %v708 = vmul.f32 %v701, %v706
  %710 = vrot.lane.b32.xlu0 %v708, 32
  %v711 = vpop.permute.xlu0 %710
  %v713 = vadd.f32 %v703, %v711
  %v714 = vtanh.pop %v713
  %716 = vrot.lane.b32.xlu0 %v714, 64
  %v717 = vpop.permute.xlu0 %716
  %v719 = vmul.f32 %v701, %v717
  %v720 = vxor.u32 %v695, 2147483648
  %v721 = vmul.f32 %v720, 1.442695
  %v722 = vpow.pop %v721
  %v723 = vadd.f32 %v722, 1.0
  %v724 = vrcp.pop %v723
  %v725 = vmul.f32 1.0, %v724
  %v726 = vtanh.pop %v695
  %v727 = vmul.f32 %v725, %v630
  %729 = vrot.lane.b32.xlu0 %v726, 64
  %v730 = vpop.permute.xlu0 %729
  %v732 = vmul.f32 %v725, %v730
  %734 = vrot.lane.b32.xlu0 %v732, 32
  %v735 = vpop.permute.xlu0 %734
  %v737 = vadd.f32 %v727, %v735
  %v738 = vtanh.pop %v737
  %740 = vrot.lane.b32.xlu0 %v738, 64
  %v741 = vpop.permute.xlu0 %740
  %v743 = vmul.f32 %v725, %v741
  %745 = vrot.lane.b32.xlu0 %v719, 32
  %v746 = vpop.permute.xlu0 %745
  %749 = vrot.lane.b32.xlu0 %v743, 64
  %v750 = vpop.permute.xlu0 %749
  %v752 = vsel %vm121, %v746, %v750
  %v753 = vpack.c.bf16 %v752, %v752
  %v755 = vsel %vm216, %v753, 0
  %757 = vmatprep.subr.bf16.mxu0 0
  %758 = vmatpush1.bf16.msra.mxu0 0
  %759 = vmatprep.subr.bf16.mxu0 0
  %760 = vmatpush1.bf16.msra.mxu0 0
  %761 = vmatprep.subr.bf16.mxu0 0
  %762 = vmatpush1.bf16.msra.mxu0 0
  %763 = vmatprep.subr.bf16.mxu0 0
  %764 = vmatpush1.bf16.msra.mxu0 0
  %765 = vmatprep.subr.bf16.mxu0 %v207
  %766 = vmatpush1.bf16.msra.mxu0 %v206
  %767 = vmatprep.subr.bf16.mxu0 %v205
  %768 = vmatpush1.bf16.msra.mxu0 %v204
  %769 = vmatprep.subr.bf16.mxu0 %v203
  %770 = vmatpush1.bf16.msra.mxu0 %v202
  %771 = vmatprep.subr.bf16.mxu0 %v201
  %772 = vmatpush1.bf16.msra.mxu0 %v200
  %773 = vmatprep.subr.bf16.mxu0 0
  %774 = vmatpush2.bf16.msra.mxu0 0
  %775 = vmatprep.subr.bf16.mxu0 0
  %776 = vmatpush2.bf16.msra.mxu0 0
  %777 = vmatprep.subr.bf16.mxu0 0
  %778 = vmatpush2.bf16.msra.mxu0 0
  %779 = vmatprep.subr.bf16.mxu0 0
  %780 = vmatpush2.bf16.msra.mxu0 0
  %781 = vmatprep.subr.bf16.mxu0 0
  %782 = vmatpush2.bf16.msra.mxu0 0
  %783 = vmatprep.subr.bf16.mxu0 0
  %784 = vmatpush2.bf16.msra.mxu0 0
  %785 = vmatprep.subr.bf16.mxu0 0
  %786 = vmatpush2.bf16.msra.mxu0 0
  %787 = vmatprep.subr.bf16.mxu0 0
  %788 = vmatpush2.bf16.msra.mxu0 0
  %789 = vmatprep.mubr.bf16.mxu0 0
  %790 = vmatmul.mubr.bf16.gmra.mxu0 %v755
  %v791 = vpop.f32.mrf.mxu0
  %v792 = vadd.f32 0.0, %v791
  %v793 = vpop.f32.mrf.mxu0
  %v794 = vadd.f32 0.0, %v793
  %v795 = vpop.f32.mrf.mxu0
  %v796 = vpop.f32.mrf.mxu0
  %797 = vdwg.mxu0
  %v799 = vrot.slane %v164, 2
  %v801 = vadd.f32 %v792, %v799
  %v802 = vrot.slane %v162, 4
  %v804 = vadd.f32 %v794, %v802
  %v805 = vxor.u32 %v801, 2147483648
  %v806 = vmul.f32 %v805, 1.442695
  %v807 = vpow.pop %v806
  %v808 = vadd.f32 %v807, 1.0
  %v809 = vrcp.pop %v808
  %v810 = vmul.f32 1.0, %v809
  %v811 = vtanh.pop %v801
  %v812 = vmul.f32 %v810, %v713
  %814 = vrot.lane.b32.xlu0 %v811, 64
  %v815 = vpop.permute.xlu0 %814
  %v817 = vmul.f32 %v810, %v815
  %819 = vrot.lane.b32.xlu0 %v817, 32
  %v820 = vpop.permute.xlu0 %819
  %v822 = vadd.f32 %v812, %v820
  %v823 = vtanh.pop %v822
  %825 = vrot.lane.b32.xlu0 %v823, 64
  %v826 = vpop.permute.xlu0 %825
  %v828 = vmul.f32 %v810, %v826
  %v829 = vxor.u32 %v804, 2147483648
  %v830 = vmul.f32 %v829, 1.442695
  %v831 = vpow.pop %v830
  %v832 = vadd.f32 %v831, 1.0
  %v833 = vrcp.pop %v832
  %v834 = vmul.f32 1.0, %v833
  %v835 = vtanh.pop %v804
  %v836 = vmul.f32 %v834, %v737
  %838 = vrot.lane.b32.xlu0 %v835, 64
  %v839 = vpop.permute.xlu0 %838
  %v841 = vmul.f32 %v834, %v839
  %843 = vrot.lane.b32.xlu0 %v841, 32
  %v844 = vpop.permute.xlu0 %843
  %v846 = vadd.f32 %v836, %v844
  %v847 = vtanh.pop %v846
  %849 = vrot.lane.b32.xlu0 %v847, 64
  %v850 = vpop.permute.xlu0 %849
  %v852 = vmul.f32 %v834, %v850
  %854 = vrot.lane.b32.xlu0 %v828, 32
  %v855 = vpop.permute.xlu0 %854
  %858 = vrot.lane.b32.xlu0 %v852, 64
  %v859 = vpop.permute.xlu0 %858
  %v861 = vsel %vm121, %v855, %v859
  %v862 = vpack.c.bf16 %v861, %v861
  %v864 = vsel %vm216, %v862, 0
  %866 = vmatprep.subr.bf16.mxu0 0
  %867 = vmatpush1.bf16.msra.mxu0 0
  %868 = vmatprep.subr.bf16.mxu0 0
  %869 = vmatpush1.bf16.msra.mxu0 0
  %870 = vmatprep.subr.bf16.mxu0 0
  %871 = vmatpush1.bf16.msra.mxu0 0
  %872 = vmatprep.subr.bf16.mxu0 0
  %873 = vmatpush1.bf16.msra.mxu0 0
  %874 = vmatprep.subr.bf16.mxu0 %v207
  %875 = vmatpush1.bf16.msra.mxu0 %v206
  %876 = vmatprep.subr.bf16.mxu0 %v205
  %877 = vmatpush1.bf16.msra.mxu0 %v204
  %878 = vmatprep.subr.bf16.mxu0 %v203
  %879 = vmatpush1.bf16.msra.mxu0 %v202
  %880 = vmatprep.subr.bf16.mxu0 %v201
  %881 = vmatpush1.bf16.msra.mxu0 %v200
  %882 = vmatprep.subr.bf16.mxu0 0
  %883 = vmatpush2.bf16.msra.mxu0 0
  %884 = vmatprep.subr.bf16.mxu0 0
  %885 = vmatpush2.bf16.msra.mxu0 0
  %886 = vmatprep.subr.bf16.mxu0 0
  %887 = vmatpush2.bf16.msra.mxu0 0
  %888 = vmatprep.subr.bf16.mxu0 0
  %889 = vmatpush2.bf16.msra.mxu0 0
  %890 = vmatprep.subr.bf16.mxu0 0
  %891 = vmatpush2.bf16.msra.mxu0 0
  %892 = vmatprep.subr.bf16.mxu0 0
  %893 = vmatpush2.bf16.msra.mxu0 0
  %894 = vmatprep.subr.bf16.mxu0 0
  %895 = vmatpush2.bf16.msra.mxu0 0
  %896 = vmatprep.subr.bf16.mxu0 0
  %897 = vmatpush2.bf16.msra.mxu0 0
  %898 = vmatprep.mubr.bf16.mxu0 0
  %899 = vmatmul.mubr.bf16.gmra.mxu0 %v864
  %v900 = vpop.f32.mrf.mxu0
  %v901 = vadd.f32 0.0, %v900
  %v902 = vpop.f32.mrf.mxu0
  %v903 = vadd.f32 0.0, %v902
  %v904 = vpop.f32.mrf.mxu0
  %v905 = vpop.f32.mrf.mxu0
  %906 = vdwg.mxu0
  %v907 = vrot.slane %v164, 4
  %v909 = vadd.f32 %v901, %v907
  %v910 = vrot.slane %v162, 2
  %v912 = vadd.f32 %v903, %v910
  %v913 = vxor.u32 %v909, 2147483648
  %v914 = vmul.f32 %v913, 1.442695
  %v915 = vpow.pop %v914
  %v916 = vadd.f32 %v915, 1.0
  %v917 = vrcp.pop %v916
  %v918 = vmul.f32 1.0, %v917
  %v919 = vtanh.pop %v909
  %v920 = vmul.f32 %v918, %v822
  %922 = vrot.lane.b32.xlu0 %v919, 64
  %v923 = vpop.permute.xlu0 %922
  %v925 = vmul.f32 %v918, %v923
  %927 = vrot.lane.b32.xlu0 %v925, 32
  %v928 = vpop.permute.xlu0 %927
  %v930 = vadd.f32 %v920, %v928
  %v931 = vtanh.pop %v930
  %933 = vrot.lane.b32.xlu0 %v931, 64
  %v934 = vpop.permute.xlu0 %933
  %v936 = vmul.f32 %v918, %v934
  %v937 = vxor.u32 %v912, 2147483648
  %v938 = vmul.f32 %v937, 1.442695
  %v939 = vpow.pop %v938
  %v940 = vadd.f32 %v939, 1.0
  %v941 = vrcp.pop %v940
  %v942 = vmul.f32 1.0, %v941
  %v943 = vtanh.pop %v912
  %v944 = vmul.f32 %v942, %v846
  %946 = vrot.lane.b32.xlu0 %v943, 64
  %v947 = vpop.permute.xlu0 %946
  %v949 = vmul.f32 %v942, %v947
  %951 = vrot.lane.b32.xlu0 %v949, 32
  %v952 = vpop.permute.xlu0 %951
  %v954 = vadd.f32 %v944, %v952
  %v955 = vtanh.pop %v954
  %957 = vrot.lane.b32.xlu0 %v955, 64
  %v958 = vpop.permute.xlu0 %957
  %v960 = vmul.f32 %v942, %v958
  %962 = vrot.lane.b32.xlu0 %v936, 32
  %v963 = vpop.permute.xlu0 %962
  %966 = vrot.lane.b32.xlu0 %v960, 64
  %v967 = vpop.permute.xlu0 %966
  %v969 = vsel %vm121, %v963, %v967
  %v970 = vpack.c.bf16 %v969, %v969
  %v972 = vsel %vm216, %v970, 0
  %974 = vmatprep.subr.bf16.mxu0 0
  %975 = vmatpush1.bf16.msra.mxu0 0
  %976 = vmatprep.subr.bf16.mxu0 0
  %977 = vmatpush1.bf16.msra.mxu0 0
  %978 = vmatprep.subr.bf16.mxu0 0
  %979 = vmatpush1.bf16.msra.mxu0 0
  %980 = vmatprep.subr.bf16.mxu0 0
  %981 = vmatpush1.bf16.msra.mxu0 0
  %982 = vmatprep.subr.bf16.mxu0 %v207
  %983 = vmatpush1.bf16.msra.mxu0 %v206
  %984 = vmatprep.subr.bf16.mxu0 %v205
  %985 = vmatpush1.bf16.msra.mxu0 %v204
  %986 = vmatprep.subr.bf16.mxu0 %v203
  %987 = vmatpush1.bf16.msra.mxu0 %v202
  %988 = vmatprep.subr.bf16.mxu0 %v201
  %989 = vmatpush1.bf16.msra.mxu0 %v200
  %990 = vmatprep.subr.bf16.mxu0 0
  %991 = vmatpush2.bf16.msra.mxu0 0
  %992 = vmatprep.subr.bf16.mxu0 0
  %993 = vmatpush2.bf16.msra.mxu0 0
  %994 = vmatprep.subr.bf16.mxu0 0
  %995 = vmatpush2.bf16.msra.mxu0 0
  %996 = vmatprep.subr.bf16.mxu0 0
  %997 = vmatpush2.bf16.msra.mxu0 0
  %998 = vmatprep.subr.bf16.mxu0 0
  %999 = vmatpush2.bf16.msra.mxu0 0
  %1000 = vmatprep.subr.bf16.mxu0 0
  %1001 = vmatpush2.bf16.msra.mxu0 0
  %1002 = vmatprep.subr.bf16.mxu0 0
  %1003 = vmatpush2.bf16.msra.mxu0 0
  %1004 = vmatprep.subr.bf16.mxu0 0
  %1005 = vmatpush2.bf16.msra.mxu0 0
  %1006 = vmatprep.mubr.bf16.mxu0 0
  %1007 = vmatmul.mubr.bf16.gmra.mxu0 %v972
  %v1008 = vpop.f32.mrf.mxu0
  %v1009 = vadd.f32 0.0, %v1008
  %v1010 = vpop.f32.mrf.mxu0
  %v1011 = vadd.f32 0.0, %v1010
  %v1012 = vpop.f32.mrf.mxu0
  %v1013 = vpop.f32.mrf.mxu0
  %1014 = vdwg.mxu0
  %v1015 = vrot.slane %v164, 6
  %v1017 = vadd.f32 %v1009, %v1015
  %v1018 = vadd.f32 %v1011, %v162
  %v1019 = vxor.u32 %v1017, 2147483648
  %v1020 = vmul.f32 %v1019, 1.442695
  %v1021 = vpow.pop %v1020
  %v1022 = vadd.f32 %v1021, 1.0
  %v1023 = vrcp.pop %v1022
  %v1024 = vmul.f32 1.0, %v1023
  %v1025 = vtanh.pop %v1017
  %v1026 = vmul.f32 %v1024, %v930
  %1028 = vrot.lane.b32.xlu0 %v1025, 64
  %v1029 = vpop.permute.xlu0 %1028
  %v1031 = vmul.f32 %v1024, %v1029
  %1033 = vrot.lane.b32.xlu0 %v1031, 32
  %v1034 = vpop.permute.xlu0 %1033
  %v1036 = vadd.f32 %v1026, %v1034
  %v1037 = vtanh.pop %v1036
  %1039 = vrot.lane.b32.xlu0 %v1037, 64
  %v1040 = vpop.permute.xlu0 %1039
  %v1042 = vmul.f32 %v1024, %v1040
  %v1043 = vxor.u32 %v1018, 2147483648
  %v1044 = vmul.f32 %v1043, 1.442695
  %v1045 = vpow.pop %v1044
  %v1046 = vadd.f32 %v1045, 1.0
  %v1047 = vrcp.pop %v1046
  %v1048 = vmul.f32 1.0, %v1047
  %v1049 = vtanh.pop %v1018
  %v1050 = vmul.f32 %v1048, %v954
  %1052 = vrot.lane.b32.xlu0 %v1049, 64
  %v1053 = vpop.permute.xlu0 %1052
  %v1055 = vmul.f32 %v1048, %v1053
  %1057 = vrot.lane.b32.xlu0 %v1055, 32
  %v1058 = vpop.permute.xlu0 %1057
  %v1060 = vadd.f32 %v1050, %v1058
  %v1061 = vtanh.pop %v1060
  %1063 = vrot.lane.b32.xlu0 %v1061, 64
  %v1064 = vpop.permute.xlu0 %1063
  %v1066 = vmul.f32 %v1048, %v1064
  %1068 = vrot.lane.b32.xlu0 %v1042, 32
  %v1069 = vpop.permute.xlu0 %1068
  %1072 = vrot.lane.b32.xlu0 %v1066, 64
  %v1073 = vpop.permute.xlu0 %1072
  %v1075 = vsel %vm121, %v1069, %v1073
  %v1076 = vld [vmem:[%s1] sm:$0xf]
  %v1077 = vld [vmem:[%s1 + $0x4] sm:$0xf]
  %v1078 = vld [vmem:[%s1 + $0x8] sm:$0xf]
  %v1079 = vld [vmem:[%s1 + $0xc] sm:$0xf]
  %v1080 = vld [vmem:[%s7] sm:$0xff]
  %v1081 = vld [vmem:[%s7 + $0x8] sm:$0xff]
  %v1082 = vld [vmem:[%s7 + $0x10] sm:$0xff]
  %v1083 = vld [vmem:[%s7 + $0x18] sm:$0xff]
  %v1084 = vld [vmem:[%s9] sm:$0x3]
  %v1086 = vlaneseq
  %v1087 = vshrl.u32 %v1086, 7
  %v1088 = vsub.s32 0, %v1087
  %v1089 = vrot.slane %v1084, %v1088
  %v1090 = vlaneseq
  %v1091 = vshrl.u32 %v1090, 7
  %v1092 = vsub.s32 1, %v1091
  %v1093 = vrot.slane %v1084, %v1092
  %v1100 = vunpack.c.l.b16 %v1076
  %v1101 = vunpack.c.l.b16 %v1077
  %v1102 = vunpack.c.l.b16 %v1078
  %v1103 = vunpack.c.l.b16 %v1079
  %v1104 = vpack.c.b16 %v1101, %v1100
  %v1105 = vpack.c.b16 %v1103, %v1102
  %v1110 = vunpack.c.l.b16 %v1080
  %v1111 = vunpack.c.h.b16 %v1080
  %v1112 = vunpack.c.l.b16 %v1081
  %v1113 = vunpack.c.h.b16 %v1081
  %v1114 = vunpack.c.l.b16 %v1082
  %v1115 = vunpack.c.h.b16 %v1082
  %v1116 = vunpack.c.l.b16 %v1083
  %v1117 = vunpack.c.h.b16 %v1083
  %v1118 = vpack.c.b16 %v1112, %v1110
  %v1119 = vpack.c.b16 %v1113, %v1111
  %v1120 = vpack.c.b16 %v1116, %v1114
  %v1121 = vpack.c.b16 %v1117, %v1115
  %v1127 = vsel %vm121, %v1104, 0
  %v1130 = vsel %vm121, %v1105, 0
  %1132 = vmatprep.subr.bf16.mxu0 0
  %1133 = vmatpush1.bf16.msra.mxu0 0
  %1134 = vmatprep.subr.bf16.mxu0 0
  %1135 = vmatpush1.bf16.msra.mxu0 0
  %1136 = vmatprep.subr.bf16.mxu0 0
  %1137 = vmatpush1.bf16.msra.mxu0 0
  %1138 = vmatprep.subr.bf16.mxu0 0
  %1139 = vmatpush1.bf16.msra.mxu0 0
  %1140 = vmatprep.subr.bf16.mxu0 0
  %1141 = vmatpush1.bf16.msra.mxu0 0
  %1142 = vmatprep.subr.bf16.mxu0 0
  %1143 = vmatpush1.bf16.msra.mxu0 0
  %1144 = vmatprep.subr.bf16.mxu0 %v1121
  %1145 = vmatpush1.bf16.msra.mxu0 %v1120
  %1146 = vmatprep.subr.bf16.mxu0 %v1119
  %1147 = vmatpush1.bf16.msra.mxu0 %v1118
  %1148 = vmatprep.subr.bf16.mxu0 0
  %1149 = vmatpush2.bf16.msra.mxu0 0
  %1150 = vmatprep.subr.bf16.mxu0 0
  %1151 = vmatpush2.bf16.msra.mxu0 0
  %1152 = vmatprep.subr.bf16.mxu0 0
  %1153 = vmatpush2.bf16.msra.mxu0 0
  %1154 = vmatprep.subr.bf16.mxu0 0
  %1155 = vmatpush2.bf16.msra.mxu0 0
  %1156 = vmatprep.subr.bf16.mxu0 0
  %1157 = vmatpush2.bf16.msra.mxu0 0
  %1158 = vmatprep.subr.bf16.mxu0 0
  %1159 = vmatpush2.bf16.msra.mxu0 0
  %1160 = vmatprep.subr.bf16.mxu0 0
  %1161 = vmatpush2.bf16.msra.mxu0 0
  %1162 = vmatprep.subr.bf16.mxu0 0
  %1163 = vmatpush2.bf16.msra.mxu0 0
  %1164 = vmatprep.mubr.bf16.mxu0 0
  %1165 = vmatmul.mubr.bf16.gmra.mxu0 %v1127
  %v1166 = vpop.f32.mrf.mxu0
  %v1167 = vadd.f32 %v1089, %v1166
  %v1168 = vpop.f32.mrf.mxu0
  %v1169 = vadd.f32 %v1093, %v1168
  %v1170 = vpop.f32.mrf.mxu0
  %v1171 = vadd.f32 %v1089, %v1170
  %v1172 = vpop.f32.mrf.mxu0
  %v1173 = vadd.f32 %v1093, %v1172
  %1174 = vmatprep.mubr.bf16.mxu0 0
  %1175 = vmatmul.mubr.bf16.gmra.mxu0 %v1130
  %v1176 = vpop.f32.mrf.mxu0
  %v1177 = vadd.f32 %v1089, %v1176
  %v1178 = vpop.f32.mrf.mxu0
  %v1179 = vadd.f32 %v1093, %v1178
  %v1180 = vpop.f32.mrf.mxu0
  %v1181 = vadd.f32 %v1089, %v1180
  %v1182 = vpop.f32.mrf.mxu0
  %v1183 = vadd.f32 %v1093, %v1182
  %1184 = vdwg.mxu0
  %v1185 = vld [vmem:[%s8] sm:$0xff]
  %v1186 = vld [vmem:[%s8 + $0x8] sm:$0xff]
  %v1187 = vld [vmem:[%s8 + $0x10] sm:$0xff]
  %v1188 = vld [vmem:[%s8 + $0x18] sm:$0xff]
  %v1189 = vld [vmem:[%s8 + $0x20] sm:$0xff]
  %v1190 = vld [vmem:[%s8 + $0x28] sm:$0xff]
  %v1191 = vld [vmem:[%s8 + $0x30] sm:$0xff]
  %v1192 = vld [vmem:[%s8 + $0x38] sm:$0xff]
  %v1201 = vunpack.c.l.b16 %v1185
  %v1202 = vunpack.c.h.b16 %v1185
  %v1203 = vunpack.c.l.b16 %v1186
  %v1204 = vunpack.c.h.b16 %v1186
  %v1205 = vunpack.c.l.b16 %v1187
  %v1206 = vunpack.c.h.b16 %v1187
  %v1207 = vunpack.c.l.b16 %v1188
  %v1208 = vunpack.c.h.b16 %v1188
  %v1209 = vunpack.c.l.b16 %v1189
  %v1210 = vunpack.c.h.b16 %v1189
  %v1211 = vunpack.c.l.b16 %v1190
  %v1212 = vunpack.c.h.b16 %v1190
  %v1213 = vunpack.c.l.b16 %v1191
  %v1214 = vunpack.c.h.b16 %v1191
  %v1215 = vunpack.c.l.b16 %v1192
  %v1216 = vunpack.c.h.b16 %v1192
  %v1217 = vpack.c.b16 %v1203, %v1201
  %v1218 = vpack.c.b16 %v1204, %v1202
  %v1219 = vpack.c.b16 %v1207, %v1205
  %v1220 = vpack.c.b16 %v1208, %v1206
  %v1221 = vpack.c.b16 %v1211, %v1209
  %v1222 = vpack.c.b16 %v1212, %v1210
  %v1223 = vpack.c.b16 %v1215, %v1213
  %v1224 = vpack.c.b16 %v1216, %v1214
  %1233 = vmatprep.subr.bf16.mxu0 0
  %1234 = vmatpush1.bf16.msra.mxu0 0
  %1235 = vmatprep.subr.bf16.mxu0 0
  %1236 = vmatpush1.bf16.msra.mxu0 0
  %1237 = vmatprep.subr.bf16.mxu0 0
  %1238 = vmatpush1.bf16.msra.mxu0 0
  %1239 = vmatprep.subr.bf16.mxu0 0
  %1240 = vmatpush1.bf16.msra.mxu0 0
  %1241 = vmatprep.subr.bf16.mxu0 %v1224
  %1242 = vmatpush1.bf16.msra.mxu0 %v1223
  %1243 = vmatprep.subr.bf16.mxu0 %v1222
  %1244 = vmatpush1.bf16.msra.mxu0 %v1221
  %1245 = vmatprep.subr.bf16.mxu0 %v1220
  %1246 = vmatpush1.bf16.msra.mxu0 %v1219
  %1247 = vmatprep.subr.bf16.mxu0 %v1218
  %1248 = vmatpush1.bf16.msra.mxu0 %v1217
  %1249 = vmatprep.subr.bf16.mxu0 0
  %1250 = vmatpush2.bf16.msra.mxu0 0
  %1251 = vmatprep.subr.bf16.mxu0 0
  %1252 = vmatpush2.bf16.msra.mxu0 0
  %1253 = vmatprep.subr.bf16.mxu0 0
  %1254 = vmatpush2.bf16.msra.mxu0 0
  %1255 = vmatprep.subr.bf16.mxu0 0
  %1256 = vmatpush2.bf16.msra.mxu0 0
  %1257 = vmatprep.subr.bf16.mxu0 0
  %1258 = vmatpush2.bf16.msra.mxu0 0
  %1259 = vmatprep.subr.bf16.mxu0 0
  %1260 = vmatpush2.bf16.msra.mxu0 0
  %1261 = vmatprep.subr.bf16.mxu0 0
  %1262 = vmatpush2.bf16.msra.mxu0 0
  %1263 = vmatprep.subr.bf16.mxu0 0
  %1264 = vmatpush2.bf16.msra.mxu0 0
  %1265 = vmatprep.mubr.bf16.mxu0 0
  %1266 = vmatmul.mubr.bf16.gmra.mxu0 %v218
  %v1267 = vpop.f32.mrf.mxu0
  %v1268 = vadd.f32 0.0, %v1267
  %v1269 = vpop.f32.mrf.mxu0
  %v1270 = vadd.f32 0.0, %v1269
  %v1271 = vpop.f32.mrf.mxu0
  %v1272 = vpop.f32.mrf.mxu0
  %1273 = vdwg.mxu0
  %v1274 = vadd.f32 %v1268, %v1167
  %v1276 = vrot.slane %v1183, 4
  %v1278 = vadd.f32 %v1270, %v1276
  %v1279 = vxor.u32 %v1274, 2147483648
  %v1280 = vmul.f32 %v1279, 1.442695
  %v1281 = vpow.pop %v1280
  %v1282 = vadd.f32 %v1281, 1.0
  %v1283 = vrcp.pop %v1282
  %v1284 = vmul.f32 1.0, %v1283
  %v1285 = vtanh.pop %v1274
  %v1286 = vmul.f32 %v1284, 0.0
  %1288 = vrot.lane.b32.xlu0 %v1285, 64
  %v1289 = vpop.permute.xlu0 %1288
  %v1291 = vmul.f32 %v1284, %v1289
  %1293 = vrot.lane.b32.xlu0 %v1291, 32
  %v1294 = vpop.permute.xlu0 %1293
  %v1296 = vadd.f32 %v1286, %v1294
  %v1297 = vtanh.pop %v1296
  %1299 = vrot.lane.b32.xlu0 %v1297, 64
  %v1300 = vpop.permute.xlu0 %1299
  %v1302 = vmul.f32 %v1284, %v1300
  %v1303 = vxor.u32 %v1278, 2147483648
  %v1304 = vmul.f32 %v1303, 1.442695
  %v1305 = vpow.pop %v1304
  %v1306 = vadd.f32 %v1305, 1.0
  %v1307 = vrcp.pop %v1306
  %v1308 = vmul.f32 1.0, %v1307
  %v1309 = vtanh.pop %v1278
  %v1310 = vmul.f32 %v1308, 0.0
  %1312 = vrot.lane.b32.xlu0 %v1309, 64
  %v1313 = vpop.permute.xlu0 %1312
  %v1315 = vmul.f32 %v1308, %v1313
  %1317 = vrot.lane.b32.xlu0 %v1315, 32
  %v1318 = vpop.permute.xlu0 %1317
  %v1320 = vadd.f32 %v1310, %v1318
  %v1321 = vtanh.pop %v1320
  %1323 = vrot.lane.b32.xlu0 %v1321, 64
  %v1324 = vpop.permute.xlu0 %1323
  %v1326 = vmul.f32 %v1308, %v1324
  %1328 = vrot.lane.b32.xlu0 %v1302, 32
  %v1329 = vpop.permute.xlu0 %1328
  %1332 = vrot.lane.b32.xlu0 %v1326, 64
  %v1333 = vpop.permute.xlu0 %1332
  %v1335 = vsel %vm121, %v1329, %v1333
  %v1336 = vpack.c.bf16 %v1335, %v1335
  %v1338 = vsel %vm216, %v1336, 0
  %1340 = vmatprep.subr.bf16.mxu0 0
  %1341 = vmatpush1.bf16.msra.mxu0 0
  %1342 = vmatprep.subr.bf16.mxu0 0
  %1343 = vmatpush1.bf16.msra.mxu0 0
  %1344 = vmatprep.subr.bf16.mxu0 0
  %1345 = vmatpush1.bf16.msra.mxu0 0
  %1346 = vmatprep.subr.bf16.mxu0 0
  %1347 = vmatpush1.bf16.msra.mxu0 0
  %1348 = vmatprep.subr.bf16.mxu0 %v1224
  %1349 = vmatpush1.bf16.msra.mxu0 %v1223
  %1350 = vmatprep.subr.bf16.mxu0 %v1222
  %1351 = vmatpush1.bf16.msra.mxu0 %v1221
  %1352 = vmatprep.subr.bf16.mxu0 %v1220
  %1353 = vmatpush1.bf16.msra.mxu0 %v1219
  %1354 = vmatprep.subr.bf16.mxu0 %v1218
  %1355 = vmatpush1.bf16.msra.mxu0 %v1217
  %1356 = vmatprep.subr.bf16.mxu0 0
  %1357 = vmatpush2.bf16.msra.mxu0 0
  %1358 = vmatprep.subr.bf16.mxu0 0
  %1359 = vmatpush2.bf16.msra.mxu0 0
  %1360 = vmatprep.subr.bf16.mxu0 0
  %1361 = vmatpush2.bf16.msra.mxu0 0
  %1362 = vmatprep.subr.bf16.mxu0 0
  %1363 = vmatpush2.bf16.msra.mxu0 0
  %1364 = vmatprep.subr.bf16.mxu0 0
  %1365 = vmatpush2.bf16.msra.mxu0 0
  %1366 = vmatprep.subr.bf16.mxu0 0
  %1367 = vmatpush2.bf16.msra.mxu0 0
  %1368 = vmatprep.subr.bf16.mxu0 0
  %1369 = vmatpush2.bf16.msra.mxu0 0
  %1370 = vmatprep.subr.bf16.mxu0 0
  %1371 = vmatpush2.bf16.msra.mxu0 0
  %1372 = vmatprep.mubr.bf16.mxu0 0
  %1373 = vmatmul.mubr.bf16.gmra.mxu0 %v1338
  %v1374 = vpop.f32.mrf.mxu0
  %v1375 = vadd.f32 0.0, %v1374
  %v1376 = vpop.f32.mrf.mxu0
  %v1377 = vadd.f32 0.0, %v1376
  %v1378 = vpop.f32.mrf.mxu0
  %v1379 = vpop.f32.mrf.mxu0
  %1380 = vdwg.mxu0
  %v1382 = vrot.slane %v1167, 4
  %v1384 = vadd.f32 %v1375, %v1382
  %v1385 = vadd.f32 %v1377, %v1183
  %v1386 = vxor.u32 %v1384, 2147483648
  %v1387 = vmul.f32 %v1386, 1.442695
  %v1388 = vpow.pop %v1387
  %v1389 = vadd.f32 %v1388, 1.0
  %v1390 = vrcp.pop %v1389
  %v1391 = vmul.f32 1.0, %v1390
  %v1392 = vtanh.pop %v1384
  %v1393 = vmul.f32 %v1391, %v1296
  %1395 = vrot.lane.b32.xlu0 %v1392, 64
  %v1396 = vpop.permute.xlu0 %1395
  %v1398 = vmul.f32 %v1391, %v1396
  %1400 = vrot.lane.b32.xlu0 %v1398, 32
  %v1401 = vpop.permute.xlu0 %1400
  %v1403 = vadd.f32 %v1393, %v1401
  %v1404 = vtanh.pop %v1403
  %1406 = vrot.lane.b32.xlu0 %v1404, 64
  %v1407 = vpop.permute.xlu0 %1406
  %v1409 = vmul.f32 %v1391, %v1407
  %v1410 = vxor.u32 %v1385, 2147483648
  %v1411 = vmul.f32 %v1410, 1.442695
  %v1412 = vpow.pop %v1411
  %v1413 = vadd.f32 %v1412, 1.0
  %v1414 = vrcp.pop %v1413
  %v1415 = vmul.f32 1.0, %v1414
  %v1416 = vtanh.pop %v1385
  %v1417 = vmul.f32 %v1415, %v1320
  %1419 = vrot.lane.b32.xlu0 %v1416, 64
  %v1420 = vpop.permute.xlu0 %1419
  %v1422 = vmul.f32 %v1415, %v1420
  %1424 = vrot.lane.b32.xlu0 %v1422, 32
  %v1425 = vpop.permute.xlu0 %1424
  %v1427 = vadd.f32 %v1417, %v1425
  %v1428 = vtanh.pop %v1427
  %1430 = vrot.lane.b32.xlu0 %v1428, 64
  %v1431 = vpop.permute.xlu0 %1430
  %v1433 = vmul.f32 %v1415, %v1431
  %1435 = vrot.lane.b32.xlu0 %v1409, 32
  %v1436 = vpop.permute.xlu0 %1435
  %1439 = vrot.lane.b32.xlu0 %v1433, 64
  %v1440 = vpop.permute.xlu0 %1439
  %v1442 = vsel %vm121, %v1436, %v1440
  %v1443 = vpack.c.bf16 %v1442, %v1442
  %v1445 = vsel %vm216, %v1443, 0
  %1447 = vmatprep.subr.bf16.mxu0 0
  %1448 = vmatpush1.bf16.msra.mxu0 0
  %1449 = vmatprep.subr.bf16.mxu0 0
  %1450 = vmatpush1.bf16.msra.mxu0 0
  %1451 = vmatprep.subr.bf16.mxu0 0
  %1452 = vmatpush1.bf16.msra.mxu0 0
  %1453 = vmatprep.subr.bf16.mxu0 0
  %1454 = vmatpush1.bf16.msra.mxu0 0
  %1455 = vmatprep.subr.bf16.mxu0 %v1224
  %1456 = vmatpush1.bf16.msra.mxu0 %v1223
  %1457 = vmatprep.subr.bf16.mxu0 %v1222
  %1458 = vmatpush1.bf16.msra.mxu0 %v1221
  %1459 = vmatprep.subr.bf16.mxu0 %v1220
  %1460 = vmatpush1.bf16.msra.mxu0 %v1219
  %1461 = vmatprep.subr.bf16.mxu0 %v1218
  %1462 = vmatpush1.bf16.msra.mxu0 %v1217
  %1463 = vmatprep.subr.bf16.mxu0 0
  %1464 = vmatpush2.bf16.msra.mxu0 0
  %1465 = vmatprep.subr.bf16.mxu0 0
  %1466 = vmatpush2.bf16.msra.mxu0 0
  %1467 = vmatprep.subr.bf16.mxu0 0
  %1468 = vmatpush2.bf16.msra.mxu0 0
  %1469 = vmatprep.subr.bf16.mxu0 0
  %1470 = vmatpush2.bf16.msra.mxu0 0
  %1471 = vmatprep.subr.bf16.mxu0 0
  %1472 = vmatpush2.bf16.msra.mxu0 0
  %1473 = vmatprep.subr.bf16.mxu0 0
  %1474 = vmatpush2.bf16.msra.mxu0 0
  %1475 = vmatprep.subr.bf16.mxu0 0
  %1476 = vmatpush2.bf16.msra.mxu0 0
  %1477 = vmatprep.subr.bf16.mxu0 0
  %1478 = vmatpush2.bf16.msra.mxu0 0
  %1479 = vmatprep.mubr.bf16.mxu0 0
  %1480 = vmatmul.mubr.bf16.gmra.mxu0 %v1445
  %v1481 = vpop.f32.mrf.mxu0
  %v1482 = vadd.f32 0.0, %v1481
  %v1483 = vpop.f32.mrf.mxu0
  %v1484 = vadd.f32 0.0, %v1483
  %v1485 = vpop.f32.mrf.mxu0
  %v1486 = vpop.f32.mrf.mxu0
  %1487 = vdwg.mxu0
  %v1488 = vadd.f32 %v1482, %v1171
  %v1490 = vrot.slane %v1179, 4
  %v1492 = vadd.f32 %v1484, %v1490
  %v1493 = vxor.u32 %v1488, 2147483648
  %v1494 = vmul.f32 %v1493, 1.442695
  %v1495 = vpow.pop %v1494
  %v1496 = vadd.f32 %v1495, 1.0
  %v1497 = vrcp.pop %v1496
  %v1498 = vmul.f32 1.0, %v1497
  %v1499 = vtanh.pop %v1488
  %v1500 = vmul.f32 %v1498, %v1403
  %1502 = vrot.lane.b32.xlu0 %v1499, 64
  %v1503 = vpop.permute.xlu0 %1502
  %v1505 = vmul.f32 %v1498, %v1503
  %1507 = vrot.lane.b32.xlu0 %v1505, 32
  %v1508 = vpop.permute.xlu0 %1507
  %v1510 = vadd.f32 %v1500, %v1508
  %v1511 = vtanh.pop %v1510
  %1513 = vrot.lane.b32.xlu0 %v1511, 64
  %v1514 = vpop.permute.xlu0 %1513
  %v1516 = vmul.f32 %v1498, %v1514
  %v1517 = vxor.u32 %v1492, 2147483648
  %v1518 = vmul.f32 %v1517, 1.442695
  %v1519 = vpow.pop %v1518
  %v1520 = vadd.f32 %v1519, 1.0
  %v1521 = vrcp.pop %v1520
  %v1522 = vmul.f32 1.0, %v1521
  %v1523 = vtanh.pop %v1492
  %v1524 = vmul.f32 %v1522, %v1427
  %1526 = vrot.lane.b32.xlu0 %v1523, 64
  %v1527 = vpop.permute.xlu0 %1526
  %v1529 = vmul.f32 %v1522, %v1527
  %1531 = vrot.lane.b32.xlu0 %v1529, 32
  %v1532 = vpop.permute.xlu0 %1531
  %v1534 = vadd.f32 %v1524, %v1532
  %v1535 = vtanh.pop %v1534
  %1537 = vrot.lane.b32.xlu0 %v1535, 64
  %v1538 = vpop.permute.xlu0 %1537
  %v1540 = vmul.f32 %v1522, %v1538
  %1542 = vrot.lane.b32.xlu0 %v1516, 32
  %v1543 = vpop.permute.xlu0 %1542
  %1546 = vrot.lane.b32.xlu0 %v1540, 64
  %v1547 = vpop.permute.xlu0 %1546
  %v1549 = vsel %vm121, %v1543, %v1547
  %v1550 = vpack.c.bf16 %v1549, %v1549
  %v1552 = vsel %vm216, %v1550, 0
  %1554 = vmatprep.subr.bf16.mxu0 0
  %1555 = vmatpush1.bf16.msra.mxu0 0
  %1556 = vmatprep.subr.bf16.mxu0 0
  %1557 = vmatpush1.bf16.msra.mxu0 0
  %1558 = vmatprep.subr.bf16.mxu0 0
  %1559 = vmatpush1.bf16.msra.mxu0 0
  %1560 = vmatprep.subr.bf16.mxu0 0
  %1561 = vmatpush1.bf16.msra.mxu0 0
  %1562 = vmatprep.subr.bf16.mxu0 %v1224
  %1563 = vmatpush1.bf16.msra.mxu0 %v1223
  %1564 = vmatprep.subr.bf16.mxu0 %v1222
  %1565 = vmatpush1.bf16.msra.mxu0 %v1221
  %1566 = vmatprep.subr.bf16.mxu0 %v1220
  %1567 = vmatpush1.bf16.msra.mxu0 %v1219
  %1568 = vmatprep.subr.bf16.mxu0 %v1218
  %1569 = vmatpush1.bf16.msra.mxu0 %v1217
  %1570 = vmatprep.subr.bf16.mxu0 0
  %1571 = vmatpush2.bf16.msra.mxu0 0
  %1572 = vmatprep.subr.bf16.mxu0 0
  %1573 = vmatpush2.bf16.msra.mxu0 0
  %1574 = vmatprep.subr.bf16.mxu0 0
  %1575 = vmatpush2.bf16.msra.mxu0 0
  %1576 = vmatprep.subr.bf16.mxu0 0
  %1577 = vmatpush2.bf16.msra.mxu0 0
  %1578 = vmatprep.subr.bf16.mxu0 0
  %1579 = vmatpush2.bf16.msra.mxu0 0
  %1580 = vmatprep.subr.bf16.mxu0 0
  %1581 = vmatpush2.bf16.msra.mxu0 0
  %1582 = vmatprep.subr.bf16.mxu0 0
  %1583 = vmatpush2.bf16.msra.mxu0 0
  %1584 = vmatprep.subr.bf16.mxu0 0
  %1585 = vmatpush2.bf16.msra.mxu0 0
  %1586 = vmatprep.mubr.bf16.mxu0 0
  %1587 = vmatmul.mubr.bf16.gmra.mxu0 %v1552
  %v1588 = vpop.f32.mrf.mxu0
  %v1589 = vadd.f32 0.0, %v1588
  %v1590 = vpop.f32.mrf.mxu0
  %v1591 = vadd.f32 0.0, %v1590
  %v1592 = vpop.f32.mrf.mxu0
  %v1593 = vpop.f32.mrf.mxu0
  %1594 = vdwg.mxu0
  %v1596 = vrot.slane %v1171, 4
  %v1598 = vadd.f32 %v1589, %v1596
  %v1599 = vadd.f32 %v1591, %v1179
  %v1600 = vxor.u32 %v1598, 2147483648
  %v1601 = vmul.f32 %v1600, 1.442695
  %v1602 = vpow.pop %v1601
  %v1603 = vadd.f32 %v1602, 1.0
  %v1604 = vrcp.pop %v1603
  %v1605 = vmul.f32 1.0, %v1604
  %v1606 = vtanh.pop %v1598
  %v1607 = vmul.f32 %v1605, %v1510
  %1609 = vrot.lane.b32.xlu0 %v1606, 64
  %v1610 = vpop.permute.xlu0 %1609
  %v1612 = vmul.f32 %v1605, %v1610
  %1614 = vrot.lane.b32.xlu0 %v1612, 32
  %v1615 = vpop.permute.xlu0 %1614
  %v1617 = vadd.f32 %v1607, %v1615
  %v1618 = vtanh.pop %v1617
  %1620 = vrot.lane.b32.xlu0 %v1618, 64
  %v1621 = vpop.permute.xlu0 %1620
  %v1623 = vmul.f32 %v1605, %v1621
  %v1624 = vxor.u32 %v1599, 2147483648
  %v1625 = vmul.f32 %v1624, 1.442695
  %v1626 = vpow.pop %v1625
  %v1627 = vadd.f32 %v1626, 1.0
  %v1628 = vrcp.pop %v1627
  %v1629 = vmul.f32 1.0, %v1628
  %v1630 = vtanh.pop %v1599
  %v1631 = vmul.f32 %v1629, %v1534
  %1633 = vrot.lane.b32.xlu0 %v1630, 64
  %v1634 = vpop.permute.xlu0 %1633
  %v1636 = vmul.f32 %v1629, %v1634
  %1638 = vrot.lane.b32.xlu0 %v1636, 32
  %v1639 = vpop.permute.xlu0 %1638
  %v1641 = vadd.f32 %v1631, %v1639
  %v1642 = vtanh.pop %v1641
  %1644 = vrot.lane.b32.xlu0 %v1642, 64
  %v1645 = vpop.permute.xlu0 %1644
  %v1647 = vmul.f32 %v1629, %v1645
  %1649 = vrot.lane.b32.xlu0 %v1623, 32
  %v1650 = vpop.permute.xlu0 %1649
  %1653 = vrot.lane.b32.xlu0 %v1647, 64
  %v1654 = vpop.permute.xlu0 %1653
  %v1656 = vsel %vm121, %v1650, %v1654
  %v1657 = vpack.c.bf16 %v1656, %v1656
  %v1659 = vsel %vm216, %v1657, 0
  %1661 = vmatprep.subr.bf16.mxu0 0
  %1662 = vmatpush1.bf16.msra.mxu0 0
  %1663 = vmatprep.subr.bf16.mxu0 0
  %1664 = vmatpush1.bf16.msra.mxu0 0
  %1665 = vmatprep.subr.bf16.mxu0 0
  %1666 = vmatpush1.bf16.msra.mxu0 0
  %1667 = vmatprep.subr.bf16.mxu0 0
  %1668 = vmatpush1.bf16.msra.mxu0 0
  %1669 = vmatprep.subr.bf16.mxu0 %v1224
  %1670 = vmatpush1.bf16.msra.mxu0 %v1223
  %1671 = vmatprep.subr.bf16.mxu0 %v1222
  %1672 = vmatpush1.bf16.msra.mxu0 %v1221
  %1673 = vmatprep.subr.bf16.mxu0 %v1220
  %1674 = vmatpush1.bf16.msra.mxu0 %v1219
  %1675 = vmatprep.subr.bf16.mxu0 %v1218
  %1676 = vmatpush1.bf16.msra.mxu0 %v1217
  %1677 = vmatprep.subr.bf16.mxu0 0
  %1678 = vmatpush2.bf16.msra.mxu0 0
  %1679 = vmatprep.subr.bf16.mxu0 0
  %1680 = vmatpush2.bf16.msra.mxu0 0
  %1681 = vmatprep.subr.bf16.mxu0 0
  %1682 = vmatpush2.bf16.msra.mxu0 0
  %1683 = vmatprep.subr.bf16.mxu0 0
  %1684 = vmatpush2.bf16.msra.mxu0 0
  %1685 = vmatprep.subr.bf16.mxu0 0
  %1686 = vmatpush2.bf16.msra.mxu0 0
  %1687 = vmatprep.subr.bf16.mxu0 0
  %1688 = vmatpush2.bf16.msra.mxu0 0
  %1689 = vmatprep.subr.bf16.mxu0 0
  %1690 = vmatpush2.bf16.msra.mxu0 0
  %1691 = vmatprep.subr.bf16.mxu0 0
  %1692 = vmatpush2.bf16.msra.mxu0 0
  %1693 = vmatprep.mubr.bf16.mxu0 0
  %1694 = vmatmul.mubr.bf16.gmra.mxu0 %v1659
  %v1695 = vpop.f32.mrf.mxu0
  %v1696 = vadd.f32 0.0, %v1695
  %v1697 = vpop.f32.mrf.mxu0
  %v1698 = vadd.f32 0.0, %v1697
  %v1699 = vpop.f32.mrf.mxu0
  %v1700 = vpop.f32.mrf.mxu0
  %1701 = vdwg.mxu0
  %v1702 = vadd.f32 %v1696, %v1177
  %v1704 = vrot.slane %v1173, 4
  %v1706 = vadd.f32 %v1698, %v1704
  %v1707 = vxor.u32 %v1702, 2147483648
  %v1708 = vmul.f32 %v1707, 1.442695
  %v1709 = vpow.pop %v1708
  %v1710 = vadd.f32 %v1709, 1.0
  %v1711 = vrcp.pop %v1710
  %v1712 = vmul.f32 1.0, %v1711
  %v1713 = vtanh.pop %v1702
  %v1714 = vmul.f32 %v1712, %v1617
  %1716 = vrot.lane.b32.xlu0 %v1713, 64
  %v1717 = vpop.permute.xlu0 %1716
  %v1719 = vmul.f32 %v1712, %v1717
  %1721 = vrot.lane.b32.xlu0 %v1719, 32
  %v1722 = vpop.permute.xlu0 %1721
  %v1724 = vadd.f32 %v1714, %v1722
  %v1725 = vtanh.pop %v1724
  %1727 = vrot.lane.b32.xlu0 %v1725, 64
  %v1728 = vpop.permute.xlu0 %1727
  %v1730 = vmul.f32 %v1712, %v1728
  %v1731 = vxor.u32 %v1706, 2147483648
  %v1732 = vmul.f32 %v1731, 1.442695
  %v1733 = vpow.pop %v1732
  %v1734 = vadd.f32 %v1733, 1.0
  %v1735 = vrcp.pop %v1734
  %v1736 = vmul.f32 1.0, %v1735
  %v1737 = vtanh.pop %v1706
  %v1738 = vmul.f32 %v1736, %v1641
  %1740 = vrot.lane.b32.xlu0 %v1737, 64
  %v1741 = vpop.permute.xlu0 %1740
  %v1743 = vmul.f32 %v1736, %v1741
  %1745 = vrot.lane.b32.xlu0 %v1743, 32
  %v1746 = vpop.permute.xlu0 %1745
  %v1748 = vadd.f32 %v1738, %v1746
  %v1749 = vtanh.pop %v1748
  %1751 = vrot.lane.b32.xlu0 %v1749, 64
  %v1752 = vpop.permute.xlu0 %1751
  %v1754 = vmul.f32 %v1736, %v1752
  %1756 = vrot.lane.b32.xlu0 %v1730, 32
  %v1757 = vpop.permute.xlu0 %1756
  %1760 = vrot.lane.b32.xlu0 %v1754, 64
  %v1761 = vpop.permute.xlu0 %1760
  %v1763 = vsel %vm121, %v1757, %v1761
  %v1764 = vpack.c.bf16 %v1763, %v1763
  %v1766 = vsel %vm216, %v1764, 0
  %1768 = vmatprep.subr.bf16.mxu0 0
  %1769 = vmatpush1.bf16.msra.mxu0 0
  %1770 = vmatprep.subr.bf16.mxu0 0
  %1771 = vmatpush1.bf16.msra.mxu0 0
  %1772 = vmatprep.subr.bf16.mxu0 0
  %1773 = vmatpush1.bf16.msra.mxu0 0
  %1774 = vmatprep.subr.bf16.mxu0 0
  %1775 = vmatpush1.bf16.msra.mxu0 0
  %1776 = vmatprep.subr.bf16.mxu0 %v1224
  %1777 = vmatpush1.bf16.msra.mxu0 %v1223
  %1778 = vmatprep.subr.bf16.mxu0 %v1222
  %1779 = vmatpush1.bf16.msra.mxu0 %v1221
  %1780 = vmatprep.subr.bf16.mxu0 %v1220
  %1781 = vmatpush1.bf16.msra.mxu0 %v1219
  %1782 = vmatprep.subr.bf16.mxu0 %v1218
  %1783 = vmatpush1.bf16.msra.mxu0 %v1217
  %1784 = vmatprep.subr.bf16.mxu0 0
  %1785 = vmatpush2.bf16.msra.mxu0 0
  %1786 = vmatprep.subr.bf16.mxu0 0
  %1787 = vmatpush2.bf16.msra.mxu0 0
  %1788 = vmatprep.subr.bf16.mxu0 0
  %1789 = vmatpush2.bf16.msra.mxu0 0
  %1790 = vmatprep.subr.bf16.mxu0 0
  %1791 = vmatpush2.bf16.msra.mxu0 0
  %1792 = vmatprep.subr.bf16.mxu0 0
  %1793 = vmatpush2.bf16.msra.mxu0 0
  %1794 = vmatprep.subr.bf16.mxu0 0
  %1795 = vmatpush2.bf16.msra.mxu0 0
  %1796 = vmatprep.subr.bf16.mxu0 0
  %1797 = vmatpush2.bf16.msra.mxu0 0
  %1798 = vmatprep.subr.bf16.mxu0 0
  %1799 = vmatpush2.bf16.msra.mxu0 0
  %1800 = vmatprep.mubr.bf16.mxu0 0
  %1801 = vmatmul.mubr.bf16.gmra.mxu0 %v1766
  %v1802 = vpop.f32.mrf.mxu0
  %v1803 = vadd.f32 0.0, %v1802
  %v1804 = vpop.f32.mrf.mxu0
  %v1805 = vadd.f32 0.0, %v1804
  %v1806 = vpop.f32.mrf.mxu0
  %v1807 = vpop.f32.mrf.mxu0
  %1808 = vdwg.mxu0
  %v1810 = vrot.slane %v1177, 4
  %v1812 = vadd.f32 %v1803, %v1810
  %v1813 = vadd.f32 %v1805, %v1173
  %v1814 = vxor.u32 %v1812, 2147483648
  %v1815 = vmul.f32 %v1814, 1.442695
  %v1816 = vpow.pop %v1815
  %v1817 = vadd.f32 %v1816, 1.0
  %v1818 = vrcp.pop %v1817
  %v1819 = vmul.f32 1.0, %v1818
  %v1820 = vtanh.pop %v1812
  %v1821 = vmul.f32 %v1819, %v1724
  %1823 = vrot.lane.b32.xlu0 %v1820, 64
  %v1824 = vpop.permute.xlu0 %1823
  %v1826 = vmul.f32 %v1819, %v1824
  %1828 = vrot.lane.b32.xlu0 %v1826, 32
  %v1829 = vpop.permute.xlu0 %1828
  %v1831 = vadd.f32 %v1821, %v1829
  %v1832 = vtanh.pop %v1831
  %1834 = vrot.lane.b32.xlu0 %v1832, 64
  %v1835 = vpop.permute.xlu0 %1834
  %v1837 = vmul.f32 %v1819, %v1835
  %v1838 = vxor.u32 %v1813, 2147483648
  %v1839 = vmul.f32 %v1838, 1.442695
  %v1840 = vpow.pop %v1839
  %v1841 = vadd.f32 %v1840, 1.0
  %v1842 = vrcp.pop %v1841
  %v1843 = vmul.f32 1.0, %v1842
  %v1844 = vtanh.pop %v1813
  %v1845 = vmul.f32 %v1843, %v1748
  %1847 = vrot.lane.b32.xlu0 %v1844, 64
  %v1848 = vpop.permute.xlu0 %1847
  %v1850 = vmul.f32 %v1843, %v1848
  %1852 = vrot.lane.b32.xlu0 %v1850, 32
  %v1853 = vpop.permute.xlu0 %1852
  %v1855 = vadd.f32 %v1845, %v1853
  %v1856 = vtanh.pop %v1855
  %1858 = vrot.lane.b32.xlu0 %v1856, 64
  %v1859 = vpop.permute.xlu0 %1858
  %v1861 = vmul.f32 %v1843, %v1859
  %1863 = vrot.lane.b32.xlu0 %v1837, 32
  %v1864 = vpop.permute.xlu0 %1863
  %1867 = vrot.lane.b32.xlu0 %v1861, 64
  %v1868 = vpop.permute.xlu0 %1867
  %v1870 = vsel %vm121, %v1864, %v1868
  %v1871 = vpack.c.bf16 %v1870, %v1870
  %v1873 = vsel %vm216, %v1871, 0
  %1875 = vmatprep.subr.bf16.mxu0 0
  %1876 = vmatpush1.bf16.msra.mxu0 0
  %1877 = vmatprep.subr.bf16.mxu0 0
  %1878 = vmatpush1.bf16.msra.mxu0 0
  %1879 = vmatprep.subr.bf16.mxu0 0
  %1880 = vmatpush1.bf16.msra.mxu0 0
  %1881 = vmatprep.subr.bf16.mxu0 0
  %1882 = vmatpush1.bf16.msra.mxu0 0
  %1883 = vmatprep.subr.bf16.mxu0 %v1224
  %1884 = vmatpush1.bf16.msra.mxu0 %v1223
  %1885 = vmatprep.subr.bf16.mxu0 %v1222
  %1886 = vmatpush1.bf16.msra.mxu0 %v1221
  %1887 = vmatprep.subr.bf16.mxu0 %v1220
  %1888 = vmatpush1.bf16.msra.mxu0 %v1219
  %1889 = vmatprep.subr.bf16.mxu0 %v1218
  %1890 = vmatpush1.bf16.msra.mxu0 %v1217
  %1891 = vmatprep.subr.bf16.mxu0 0
  %1892 = vmatpush2.bf16.msra.mxu0 0
  %1893 = vmatprep.subr.bf16.mxu0 0
  %1894 = vmatpush2.bf16.msra.mxu0 0
  %1895 = vmatprep.subr.bf16.mxu0 0
  %1896 = vmatpush2.bf16.msra.mxu0 0
  %1897 = vmatprep.subr.bf16.mxu0 0
  %1898 = vmatpush2.bf16.msra.mxu0 0
  %1899 = vmatprep.subr.bf16.mxu0 0
  %1900 = vmatpush2.bf16.msra.mxu0 0
  %1901 = vmatprep.subr.bf16.mxu0 0
  %1902 = vmatpush2.bf16.msra.mxu0 0
  %1903 = vmatprep.subr.bf16.mxu0 0
  %1904 = vmatpush2.bf16.msra.mxu0 0
  %1905 = vmatprep.subr.bf16.mxu0 0
  %1906 = vmatpush2.bf16.msra.mxu0 0
  %1907 = vmatprep.mubr.bf16.mxu0 0
  %1908 = vmatmul.mubr.bf16.gmra.mxu0 %v1873
  %v1909 = vpop.f32.mrf.mxu0
  %v1910 = vadd.f32 0.0, %v1909
  %v1911 = vpop.f32.mrf.mxu0
  %v1912 = vadd.f32 0.0, %v1911
  %v1913 = vpop.f32.mrf.mxu0
  %v1914 = vpop.f32.mrf.mxu0
  %1915 = vdwg.mxu0
  %v1916 = vadd.f32 %v1910, %v1181
  %v1918 = vrot.slane %v1169, 4
  %v1920 = vadd.f32 %v1912, %v1918
  %v1921 = vxor.u32 %v1916, 2147483648
  %v1922 = vmul.f32 %v1921, 1.442695
  %v1923 = vpow.pop %v1922
  %v1924 = vadd.f32 %v1923, 1.0
  %v1925 = vrcp.pop %v1924
  %v1926 = vmul.f32 1.0, %v1925
  %v1927 = vtanh.pop %v1916
  %v1928 = vmul.f32 %v1926, %v1831
  %1930 = vrot.lane.b32.xlu0 %v1927, 64
  %v1931 = vpop.permute.xlu0 %1930
  %v1933 = vmul.f32 %v1926, %v1931
  %1935 = vrot.lane.b32.xlu0 %v1933, 32
  %v1936 = vpop.permute.xlu0 %1935
  %v1938 = vadd.f32 %v1928, %v1936
  %v1939 = vtanh.pop %v1938
  %1941 = vrot.lane.b32.xlu0 %v1939, 64
  %v1942 = vpop.permute.xlu0 %1941
  %v1944 = vmul.f32 %v1926, %v1942
  %v1945 = vxor.u32 %v1920, 2147483648
  %v1946 = vmul.f32 %v1945, 1.442695
  %v1947 = vpow.pop %v1946
  %v1948 = vadd.f32 %v1947, 1.0
  %v1949 = vrcp.pop %v1948
  %v1950 = vmul.f32 1.0, %v1949
  %v1951 = vtanh.pop %v1920
  %v1952 = vmul.f32 %v1950, %v1855
  %1954 = vrot.lane.b32.xlu0 %v1951, 64
  %v1955 = vpop.permute.xlu0 %1954
  %v1957 = vmul.f32 %v1950, %v1955
  %1959 = vrot.lane.b32.xlu0 %v1957, 32
  %v1960 = vpop.permute.xlu0 %1959
  %v1962 = vadd.f32 %v1952, %v1960
  %v1963 = vtanh.pop %v1962
  %1965 = vrot.lane.b32.xlu0 %v1963, 64
  %v1966 = vpop.permute.xlu0 %1965
  %v1968 = vmul.f32 %v1950, %v1966
  %1970 = vrot.lane.b32.xlu0 %v1944, 32
  %v1971 = vpop.permute.xlu0 %1970
  %1974 = vrot.lane.b32.xlu0 %v1968, 64
  %v1975 = vpop.permute.xlu0 %1974
  %v1977 = vsel %vm121, %v1971, %v1975
  %v1978 = vpack.c.bf16 %v1977, %v1977
  %v1980 = vsel %vm216, %v1978, 0
  %1982 = vmatprep.subr.bf16.mxu0 0
  %1983 = vmatpush1.bf16.msra.mxu0 0
  %1984 = vmatprep.subr.bf16.mxu0 0
  %1985 = vmatpush1.bf16.msra.mxu0 0
  %1986 = vmatprep.subr.bf16.mxu0 0
  %1987 = vmatpush1.bf16.msra.mxu0 0
  %1988 = vmatprep.subr.bf16.mxu0 0
  %1989 = vmatpush1.bf16.msra.mxu0 0
  %1990 = vmatprep.subr.bf16.mxu0 %v1224
  %1991 = vmatpush1.bf16.msra.mxu0 %v1223
  %1992 = vmatprep.subr.bf16.mxu0 %v1222
  %1993 = vmatpush1.bf16.msra.mxu0 %v1221
  %1994 = vmatprep.subr.bf16.mxu0 %v1220
  %1995 = vmatpush1.bf16.msra.mxu0 %v1219
  %1996 = vmatprep.subr.bf16.mxu0 %v1218
  %1997 = vmatpush1.bf16.msra.mxu0 %v1217
  %1998 = vmatprep.subr.bf16.mxu0 0
  %1999 = vmatpush2.bf16.msra.mxu0 0
  %2000 = vmatprep.subr.bf16.mxu0 0
  %2001 = vmatpush2.bf16.msra.mxu0 0
  %2002 = vmatprep.subr.bf16.mxu0 0
  %2003 = vmatpush2.bf16.msra.mxu0 0
  %2004 = vmatprep.subr.bf16.mxu0 0
  %2005 = vmatpush2.bf16.msra.mxu0 0
  %2006 = vmatprep.subr.bf16.mxu0 0
  %2007 = vmatpush2.bf16.msra.mxu0 0
  %2008 = vmatprep.subr.bf16.mxu0 0
  %2009 = vmatpush2.bf16.msra.mxu0 0
  %2010 = vmatprep.subr.bf16.mxu0 0
  %2011 = vmatpush2.bf16.msra.mxu0 0
  %2012 = vmatprep.subr.bf16.mxu0 0
  %2013 = vmatpush2.bf16.msra.mxu0 0
  %2014 = vmatprep.mubr.bf16.mxu0 0
  %2015 = vmatmul.mubr.bf16.gmra.mxu0 %v1980
  %v2016 = vpop.f32.mrf.mxu0
  %v2017 = vadd.f32 0.0, %v2016
  %v2018 = vpop.f32.mrf.mxu0
  %v2019 = vadd.f32 0.0, %v2018
  %v2020 = vpop.f32.mrf.mxu0
  %v2021 = vpop.f32.mrf.mxu0
  %2022 = vdwg.mxu0
  %v2024 = vrot.slane %v1181, 4
  %v2026 = vadd.f32 %v2017, %v2024
  %v2027 = vadd.f32 %v2019, %v1169
  %v2028 = vxor.u32 %v2026, 2147483648
  %v2029 = vmul.f32 %v2028, 1.442695
  %v2030 = vpow.pop %v2029
  %v2031 = vadd.f32 %v2030, 1.0
  %v2032 = vrcp.pop %v2031
  %v2033 = vmul.f32 1.0, %v2032
  %v2034 = vtanh.pop %v2026
  %v2035 = vmul.f32 %v2033, %v1938
  %2037 = vrot.lane.b32.xlu0 %v2034, 64
  %v2038 = vpop.permute.xlu0 %2037
  %v2040 = vmul.f32 %v2033, %v2038
  %2042 = vrot.lane.b32.xlu0 %v2040, 32
  %v2043 = vpop.permute.xlu0 %2042
  %v2045 = vadd.f32 %v2035, %v2043
  %v2046 = vtanh.pop %v2045
  %2048 = vrot.lane.b32.xlu0 %v2046, 64
  %v2049 = vpop.permute.xlu0 %2048
  %v2051 = vmul.f32 %v2033, %v2049
  %v2052 = vxor.u32 %v2027, 2147483648
  %v2053 = vmul.f32 %v2052, 1.442695
  %v2054 = vpow.pop %v2053
  %v2055 = vadd.f32 %v2054, 1.0
  %v2056 = vrcp.pop %v2055
  %v2057 = vmul.f32 1.0, %v2056
  %v2058 = vtanh.pop %v2027
  %v2059 = vmul.f32 %v2057, %v1962
  %2061 = vrot.lane.b32.xlu0 %v2058, 64
  %v2062 = vpop.permute.xlu0 %2061
  %v2064 = vmul.f32 %v2057, %v2062
  %2066 = vrot.lane.b32.xlu0 %v2064, 32
  %v2067 = vpop.permute.xlu0 %2066
  %v2069 = vadd.f32 %v2059, %v2067
  %v2070 = vtanh.pop %v2069
  %2072 = vrot.lane.b32.xlu0 %v2070, 64
  %v2073 = vpop.permute.xlu0 %2072
  %v2075 = vmul.f32 %v2057, %v2073
  %2077 = vrot.lane.b32.xlu0 %v2051, 32
  %v2078 = vpop.permute.xlu0 %2077
  %2081 = vrot.lane.b32.xlu0 %v2075, 64
  %v2082 = vpop.permute.xlu0 %2081
  %v2084 = vsel %vm121, %v2078, %v2082
  %v2085 = vpack.c.bf16 %v1075, %v1075
  %v2086 = vld [vmem:[%s10] sm:$0xf]
  %v2087 = vld [vmem:[%s10 + $0x4] sm:$0xf]
  %v2088 = vld [vmem:[%s10 + $0x8] sm:$0xf]
  %v2089 = vld [vmem:[%s10 + $0xc] sm:$0xf]
  %v2090 = vld [vmem:[%s10 + $0x10] sm:$0xf]
  %v2091 = vld [vmem:[%s10 + $0x14] sm:$0xf]
  %v2092 = vld [vmem:[%s10 + $0x18] sm:$0xf]
  %v2093 = vld [vmem:[%s10 + $0x1c] sm:$0xf]
  %v2094 = vld [vmem:[%s11] sm:$0x1]
  %v2096 = vlaneseq
  %v2097 = vshrl.u32 %v2096, 7
  %v2098 = vsub.s32 0, %v2097
  %v2099 = vrot.slane %v2094, %v2098
  %v2109 = vunpack.c.l.b16 %v2086
  %v2110 = vunpack.c.l.b16 %v2087
  %v2111 = vunpack.c.l.b16 %v2088
  %v2112 = vunpack.c.l.b16 %v2089
  %v2113 = vunpack.c.l.b16 %v2090
  %v2114 = vunpack.c.l.b16 %v2091
  %v2115 = vunpack.c.l.b16 %v2092
  %v2116 = vunpack.c.l.b16 %v2093
  %v2117 = vpack.c.b16 %v2110, %v2109
  %v2118 = vpack.c.b16 %v2112, %v2111
  %v2119 = vpack.c.b16 %v2114, %v2113
  %v2120 = vpack.c.b16 %v2116, %v2115
  %v2126 = vsel %vm216, %v2085, 0
  %2128 = vmatprep.subr.bf16.mxu0 0
  %2129 = vmatpush1.bf16.msra.mxu0 0
  %2130 = vmatprep.subr.bf16.mxu0 0
  %2131 = vmatpush1.bf16.msra.mxu0 0
  %2132 = vmatprep.subr.bf16.mxu0 0
  %2133 = vmatpush1.bf16.msra.mxu0 0
  %2134 = vmatprep.subr.bf16.mxu0 0
  %2135 = vmatpush1.bf16.msra.mxu0 0
  %2136 = vmatprep.subr.bf16.mxu0 0
  %2137 = vmatpush1.bf16.msra.mxu0 %v2120
  %2138 = vmatprep.subr.bf16.mxu0 0
  %2139 = vmatpush1.bf16.msra.mxu0 %v2119
  %2140 = vmatprep.subr.bf16.mxu0 0
  %2141 = vmatpush1.bf16.msra.mxu0 %v2118
  %2142 = vmatprep.subr.bf16.mxu0 0
  %2143 = vmatpush1.bf16.msra.mxu0 %v2117
  %2144 = vmatprep.subr.bf16.mxu0 0
  %2145 = vmatpush2.bf16.msra.mxu0 0
  %2146 = vmatprep.subr.bf16.mxu0 0
  %2147 = vmatpush2.bf16.msra.mxu0 0
  %2148 = vmatprep.subr.bf16.mxu0 0
  %2149 = vmatpush2.bf16.msra.mxu0 0
  %2150 = vmatprep.subr.bf16.mxu0 0
  %2151 = vmatpush2.bf16.msra.mxu0 0
  %2152 = vmatprep.subr.bf16.mxu0 0
  %2153 = vmatpush2.bf16.msra.mxu0 0
  %2154 = vmatprep.subr.bf16.mxu0 0
  %2155 = vmatpush2.bf16.msra.mxu0 0
  %2156 = vmatprep.subr.bf16.mxu0 0
  %2157 = vmatpush2.bf16.msra.mxu0 0
  %2158 = vmatprep.subr.bf16.mxu0 0
  %2159 = vmatpush2.bf16.msra.mxu0 0
  %2160 = vmatprep.mubr.bf16.mxu0 0
  %2161 = vmatmul.mubr.bf16.gmra.mxu0 %v2126
  %v2162 = vpop.f32.mrf.mxu0
  %v2163 = vadd.f32 %v2099, %v2162
  %v2164 = vpop.f32.mrf.mxu0
  %v2165 = vpop.f32.mrf.mxu0
  %v2166 = vpop.f32.mrf.mxu0
  %2167 = vdwg.mxu0
  %v2168 = vld [vmem:[%s14] sm:$0x3]
  %v2169 = vmul.f32 %v2163, 0.5
  %v2170 = vmul.f32 %v2169, 1.442695
  %v2171 = vpow.pop %v2170
  %2173 = vrot.lane.b32.xlu0 %v2171, 64
  %v2174 = vpop.permute.xlu0 %2173
  %v2176 = vmul.f32 %v2168, %v2174
  %v2177 = vadd.f32 %v2176, %v2163
  %v2178 = vpack.c.bf16 %v2084, %v2084
  %v2179 = vld [vmem:[%s12] sm:$0xf]
  %v2180 = vld [vmem:[%s12 + $0x4] sm:$0xf]
  %v2181 = vld [vmem:[%s12 + $0x8] sm:$0xf]
  %v2182 = vld [vmem:[%s12 + $0xc] sm:$0xf]
  %v2183 = vld [vmem:[%s12 + $0x10] sm:$0xf]
  %v2184 = vld [vmem:[%s12 + $0x14] sm:$0xf]
  %v2185 = vld [vmem:[%s12 + $0x18] sm:$0xf]
  %v2186 = vld [vmem:[%s12 + $0x1c] sm:$0xf]
  %v2187 = vld [vmem:[%s13] sm:$0x1]
  %v2189 = vlaneseq
  %v2190 = vshrl.u32 %v2189, 7
  %v2191 = vsub.s32 0, %v2190
  %v2192 = vrot.slane %v2187, %v2191
  %v2202 = vunpack.c.l.b16 %v2179
  %v2203 = vunpack.c.l.b16 %v2180
  %v2204 = vunpack.c.l.b16 %v2181
  %v2205 = vunpack.c.l.b16 %v2182
  %v2206 = vunpack.c.l.b16 %v2183
  %v2207 = vunpack.c.l.b16 %v2184
  %v2208 = vunpack.c.l.b16 %v2185
  %v2209 = vunpack.c.l.b16 %v2186
  %v2210 = vpack.c.b16 %v2203, %v2202
  %v2211 = vpack.c.b16 %v2205, %v2204
  %v2212 = vpack.c.b16 %v2207, %v2206
  %v2213 = vpack.c.b16 %v2209, %v2208
  %v2219 = vsel %vm216, %v2178, 0
  %2221 = vmatprep.subr.bf16.mxu0 0
  %2222 = vmatpush1.bf16.msra.mxu0 0
  %2223 = vmatprep.subr.bf16.mxu0 0
  %2224 = vmatpush1.bf16.msra.mxu0 0
  %2225 = vmatprep.subr.bf16.mxu0 0
  %2226 = vmatpush1.bf16.msra.mxu0 0
  %2227 = vmatprep.subr.bf16.mxu0 0
  %2228 = vmatpush1.bf16.msra.mxu0 0
  %2229 = vmatprep.subr.bf16.mxu0 0
  %2230 = vmatpush1.bf16.msra.mxu0 %v2213
  %2231 = vmatprep.subr.bf16.mxu0 0
  %2232 = vmatpush1.bf16.msra.mxu0 %v2212
  %2233 = vmatprep.subr.bf16.mxu0 0
  %2234 = vmatpush1.bf16.msra.mxu0 %v2211
  %2235 = vmatprep.subr.bf16.mxu0 0
  %2236 = vmatpush1.bf16.msra.mxu0 %v2210
  %2237 = vmatprep.subr.bf16.mxu0 0
  %2238 = vmatpush2.bf16.msra.mxu0 0
  %2239 = vmatprep.subr.bf16.mxu0 0
  %2240 = vmatpush2.bf16.msra.mxu0 0
  %2241 = vmatprep.subr.bf16.mxu0 0
  %2242 = vmatpush2.bf16.msra.mxu0 0
  %2243 = vmatprep.subr.bf16.mxu0 0
  %2244 = vmatpush2.bf16.msra.mxu0 0
  %2245 = vmatprep.subr.bf16.mxu0 0
  %2246 = vmatpush2.bf16.msra.mxu0 0
  %2247 = vmatprep.subr.bf16.mxu0 0
  %2248 = vmatpush2.bf16.msra.mxu0 0
  %2249 = vmatprep.subr.bf16.mxu0 0
  %2250 = vmatpush2.bf16.msra.mxu0 0
  %2251 = vmatprep.subr.bf16.mxu0 0
  %2252 = vmatpush2.bf16.msra.mxu0 0
  %2253 = vmatprep.mubr.bf16.mxu0 0
  %2254 = vmatmul.mubr.bf16.gmra.mxu0 %v2219
  %v2255 = vpop.f32.mrf.mxu0
  %v2256 = vadd.f32 %v2192, %v2255
  %v2257 = vpop.f32.mrf.mxu0
  %v2258 = vpop.f32.mrf.mxu0
  %v2259 = vpop.f32.mrf.mxu0
  %2260 = vdwg.mxu0
  %v2261 = vld [vmem:[%s15] sm:$0xf]
  %v2262 = vmul.f32 %v2256, 0.5
  %v2263 = vmul.f32 %v2262, 1.442695
  %v2264 = vpow.pop %v2263
  %2266 = vrot.lane.b32.xlu0 %v2264, 64
  %v2267 = vpop.permute.xlu0 %2266
  %v2269 = vmul.f32 %v2261, %v2267
  %v2270 = vadd.f32 %v2269, %v2256
  %v2271 = vmul.f32 %v2177, %v2270
  %vm2272 = vcmask 517120
  %v2273 = vsel %vm2272, %v2271, 0.0
  %2274 = vadd.xlane.f32.xlu0 %v2273
  %v2275 = vpop.xlane.xlu0 %2274
  %v2276 = vmul.f32 %v2177, %v2177
  %v2277 = vsel %vm2272, %v2276, 0.0
  %2278 = vadd.xlane.f32.xlu0 %v2277
  %v2279 = vpop.xlane.xlu0 %2278
  %v2280 = vmax.f32 %v2279, 1e-16
  %v2281 = vmul.f32 %v2270, %v2270
  %v2282 = vsel %vm2272, %v2281, 0.0
  %2283 = vadd.xlane.f32.xlu0 %v2282
  %v2284 = vpop.xlane.xlu0 %2283
  %v2285 = vmax.f32 %v2284, 1e-16
  %v2286 = vmul.f32 %v2280, %v2285
  %v2287 = vrsqrt.pop %v2286
  %v2288 = vmul.f32 %v2275, %v2287
  %v2290 = vrot.slane %v2270, 2
  %v2292 = vmul.f32 %v2177, %v2290
  %v2293 = vsel %vm2272, %v2292, 0.0
  %2294 = vadd.xlane.f32.xlu0 %v2293
  %v2295 = vpop.xlane.xlu0 %2294
  %vm2296 = vcmask 519170
  %v2297 = vsel %vm2296, %v2281, 0.0
  %2298 = vadd.xlane.f32.xlu0 %v2297
  %v2299 = vpop.xlane.xlu0 %2298
  %v2300 = vmax.f32 %v2299, 1e-16
  %v2302 = vrot.slane %v2300, 2
  %v2304 = vmul.f32 %v2280, %v2302
  %v2305 = vrsqrt.pop %v2304
  %v2306 = vmul.f32 %v2295, %v2305
  %v2307 = vsub.f32 %v2306, %v2288
  %v2308 = vadd.f32 %v2307, 0.5
  %v2309 = vmax.f32 %v2308, 0.0
  %vm2310 = vcmask 1024
  %v2311 = vsel %vm2310, %v2309, 0.0
  %2312 = vadd.xlane.f32.xlu0 %v2311
  %v2313 = vpop.xlane.xlu0 %2312
  %v2314 = vrot.slane %v2313, 4
  %v2315 = vadd.f32 %v2313, %v2314
  %v2316 = vrot.slane %v2315, 2
  %v2317 = vadd.f32 %v2315, %v2316
  %v2318 = vrot.slane %v2317, 1
  %v2319 = vadd.f32 %v2317, %v2318
  %s2320 = vtos %v2319
  %v2321 = vrcp.pop 2.0
  %s2322 = vtos %v2321
  %s2323 = smul.f32 %s2320, %s2322
  %v2324 = vadd.f32 %v2256, -1.0
  %v2325 = vsub.f32 %v2324, %v2163
  %v2326 = vmul.f32 %v2163, 1.442695
  %v2327 = vpow.pop %v2326
  %v2328 = vsub.f32 %v2163, %v2256
  %v2329 = vmul.f32 %v2328, %v2328
  %2331 = vrot.lane.b32.xlu0 %v2329, 64
  %v2332 = vpop.permute.xlu0 %2331
  %v2334 = vadd.f32 %v2327, %v2332
  %v2335 = vsub.f32 0.0, %v2256
  %v2336 = vmul.f32 %v2335, 1.442695
  %v2337 = vpow.pop %v2336
  %v2338 = vmul.f32 %v2334, %v2337
  %v2339 = vadd.f32 %v2325, %v2338
  %2341 = vrot.lane.b32.xlu0 %v2339, 64
  %v2342 = vpop.permute.xlu0 %2341
  %v2344 = vsel %vm2272, %v2342, 0.0
  %2345 = vadd.xlane.f32.xlu0 %v2344
  %v2346 = vpop.xlane.xlu0 %2345
  %v2347 = vrot.slane %v2346, 4
  %v2348 = vadd.f32 %v2346, %v2347
  %v2349 = vrot.slane %v2348, 2
  %v2350 = vadd.f32 %v2348, %v2349
  %v2351 = vrot.slane %v2350, 1
  %v2352 = vadd.f32 %v2350, %v2351
  %s2353 = vtos %v2352
  %s2354 = smul.f32 %s2353, 0.5
  %v2355 = vrcp.pop 2.0
  %s2356 = vtos %v2355
  %s2357 = smul.f32 %s2354, %s2356
  %v2358 = vpack.c.bf16 %v2177, %v2177
  %v2359 = vld [vmem:[%s16] sm:$0xf]
  %v2360 = vld [vmem:[%s16 + $0x4] sm:$0xf]
  %v2361 = vld [vmem:[%s16 + $0x8] sm:$0xf]
  %v2362 = vld [vmem:[%s16 + $0xc] sm:$0xf]
  %v2363 = vld [vmem:[%s16 + $0x10] sm:$0xf]
  %v2364 = vld [vmem:[%s16 + $0x14] sm:$0xf]
  %v2365 = vld [vmem:[%s16 + $0x18] sm:$0xf]
  %v2366 = vld [vmem:[%s16 + $0x1c] sm:$0xf]
  %v2367 = vld [vmem:[%s17] sm:$0x1]
  %v2369 = vlaneseq
  %v2370 = vshrl.u32 %v2369, 7
  %v2371 = vsub.s32 0, %v2370
  %v2372 = vrot.slane %v2367, %v2371
  %v2382 = vunpack.c.l.b16 %v2359
  %v2383 = vunpack.c.l.b16 %v2360
  %v2384 = vunpack.c.l.b16 %v2361
  %v2385 = vunpack.c.l.b16 %v2362
  %v2386 = vunpack.c.l.b16 %v2363
  %v2387 = vunpack.c.l.b16 %v2364
  %v2388 = vunpack.c.l.b16 %v2365
  %v2389 = vunpack.c.l.b16 %v2366
  %v2390 = vpack.c.b16 %v2383, %v2382
  %v2391 = vpack.c.b16 %v2385, %v2384
  %v2392 = vpack.c.b16 %v2387, %v2386
  %v2393 = vpack.c.b16 %v2389, %v2388
  %v2399 = vsel %vm216, %v2358, 0
  %2401 = vmatprep.subr.bf16.mxu0 0
  %2402 = vmatpush1.bf16.msra.mxu0 0
  %2403 = vmatprep.subr.bf16.mxu0 0
  %2404 = vmatpush1.bf16.msra.mxu0 0
  %2405 = vmatprep.subr.bf16.mxu0 0
  %2406 = vmatpush1.bf16.msra.mxu0 0
  %2407 = vmatprep.subr.bf16.mxu0 0
  %2408 = vmatpush1.bf16.msra.mxu0 0
  %2409 = vmatprep.subr.bf16.mxu0 0
  %2410 = vmatpush1.bf16.msra.mxu0 %v2393
  %2411 = vmatprep.subr.bf16.mxu0 0
  %2412 = vmatpush1.bf16.msra.mxu0 %v2392
  %2413 = vmatprep.subr.bf16.mxu0 0
  %2414 = vmatpush1.bf16.msra.mxu0 %v2391
  %2415 = vmatprep.subr.bf16.mxu0 0
  %2416 = vmatpush1.bf16.msra.mxu0 %v2390
  %2417 = vmatprep.subr.bf16.mxu0 0
  %2418 = vmatpush2.bf16.msra.mxu0 0
  %2419 = vmatprep.subr.bf16.mxu0 0
  %2420 = vmatpush2.bf16.msra.mxu0 0
  %2421 = vmatprep.subr.bf16.mxu0 0
  %2422 = vmatpush2.bf16.msra.mxu0 0
  %2423 = vmatprep.subr.bf16.mxu0 0
  %2424 = vmatpush2.bf16.msra.mxu0 0
  %2425 = vmatprep.subr.bf16.mxu0 0
  %2426 = vmatpush2.bf16.msra.mxu0 0
  %2427 = vmatprep.subr.bf16.mxu0 0
  %2428 = vmatpush2.bf16.msra.mxu0 0
  %2429 = vmatprep.subr.bf16.mxu0 0
  %2430 = vmatpush2.bf16.msra.mxu0 0
  %2431 = vmatprep.subr.bf16.mxu0 0
  %2432 = vmatpush2.bf16.msra.mxu0 0
  %2433 = vmatprep.mubr.bf16.mxu0 0
  %2434 = vmatmul.mubr.bf16.gmra.mxu0 %v2399
  %v2435 = vpop.f32.mrf.mxu0
  %v2436 = vadd.f32 %v2372, %v2435
  %v2437 = vpop.f32.mrf.mxu0
  %v2438 = vpop.f32.mrf.mxu0
  %v2439 = vpop.f32.mrf.mxu0
  %2440 = vdwg.mxu0
  %v2441 = vld [vmem:[%s2] sm:$0xf]
  %v2442 = vld [vmem:[%s2 + $0x4] sm:$0x7]
  %v2443 = vld [vmem:[%s18] sm:$0xff]
  %v2444 = vld [vmem:[%s18 + $0x8] sm:$0xff]
  %v2445 = vld [vmem:[%s18 + $0x10] sm:$0xff]
  %v2446 = vld [vmem:[%s18 + $0x18] sm:$0xff]
  %v2447 = vld [vmem:[%s20] sm:$0x3]
  %v2449 = vlaneseq
  %v2450 = vshrl.u32 %v2449, 7
  %v2451 = vsub.s32 0, %v2450
  %v2452 = vrot.slane %v2447, %v2451
  %v2453 = vlaneseq
  %v2454 = vshrl.u32 %v2453, 7
  %v2455 = vsub.s32 1, %v2454
  %v2456 = vrot.slane %v2447, %v2455
  %v2461 = vunpack.c.l.b16 %v2441
  %v2462 = vunpack.c.l.b16 %v2442
  %v2463 = vpack.c.b16 %v2462, %v2461
  %v2468 = vunpack.c.l.b16 %v2443
  %v2469 = vunpack.c.h.b16 %v2443
  %v2470 = vunpack.c.l.b16 %v2444
  %v2471 = vunpack.c.h.b16 %v2444
  %v2472 = vunpack.c.l.b16 %v2445
  %v2473 = vunpack.c.h.b16 %v2445
  %v2474 = vunpack.c.l.b16 %v2446
  %v2475 = vunpack.c.h.b16 %v2446
  %v2476 = vpack.c.b16 %v2470, %v2468
  %v2477 = vpack.c.b16 %v2471, %v2469
  %v2478 = vpack.c.b16 %v2474, %v2472
  %v2479 = vpack.c.b16 %v2475, %v2473
  %v2485 = vsel %vm121, %v2463, 0
  %2487 = vmatprep.subr.bf16.mxu0 0
  %2488 = vmatpush1.bf16.msra.mxu0 0
  %2489 = vmatprep.subr.bf16.mxu0 0
  %2490 = vmatpush1.bf16.msra.mxu0 0
  %2491 = vmatprep.subr.bf16.mxu0 0
  %2492 = vmatpush1.bf16.msra.mxu0 0
  %2493 = vmatprep.subr.bf16.mxu0 0
  %2494 = vmatpush1.bf16.msra.mxu0 0
  %2495 = vmatprep.subr.bf16.mxu0 0
  %2496 = vmatpush1.bf16.msra.mxu0 0
  %2497 = vmatprep.subr.bf16.mxu0 0
  %2498 = vmatpush1.bf16.msra.mxu0 0
  %2499 = vmatprep.subr.bf16.mxu0 %v2479
  %2500 = vmatpush1.bf16.msra.mxu0 %v2478
  %2501 = vmatprep.subr.bf16.mxu0 %v2477
  %2502 = vmatpush1.bf16.msra.mxu0 %v2476
  %2503 = vmatprep.subr.bf16.mxu0 0
  %2504 = vmatpush2.bf16.msra.mxu0 0
  %2505 = vmatprep.subr.bf16.mxu0 0
  %2506 = vmatpush2.bf16.msra.mxu0 0
  %2507 = vmatprep.subr.bf16.mxu0 0
  %2508 = vmatpush2.bf16.msra.mxu0 0
  %2509 = vmatprep.subr.bf16.mxu0 0
  %2510 = vmatpush2.bf16.msra.mxu0 0
  %2511 = vmatprep.subr.bf16.mxu0 0
  %2512 = vmatpush2.bf16.msra.mxu0 0
  %2513 = vmatprep.subr.bf16.mxu0 0
  %2514 = vmatpush2.bf16.msra.mxu0 0
  %2515 = vmatprep.subr.bf16.mxu0 0
  %2516 = vmatpush2.bf16.msra.mxu0 0
  %2517 = vmatprep.subr.bf16.mxu0 0
  %2518 = vmatpush2.bf16.msra.mxu0 0
  %2519 = vmatprep.mubr.bf16.mxu0 0
  %2520 = vmatmul.mubr.bf16.gmra.mxu0 %v2485
  %v2521 = vpop.f32.mrf.mxu0
  %v2522 = vadd.f32 %v2452, %v2521
  %v2523 = vpop.f32.mrf.mxu0
  %v2524 = vadd.f32 %v2456, %v2523
  %v2525 = vpop.f32.mrf.mxu0
  %v2526 = vadd.f32 %v2452, %v2525
  %v2527 = vpop.f32.mrf.mxu0
  %v2528 = vadd.f32 %v2456, %v2527
  %2529 = vdwg.mxu0
  %v2530 = vld [vmem:[%s19] sm:$0xff]
  %v2531 = vld [vmem:[%s19 + $0x8] sm:$0xff]
  %v2532 = vld [vmem:[%s19 + $0x10] sm:$0xff]
  %v2533 = vld [vmem:[%s19 + $0x18] sm:$0xff]
  %v2534 = vld [vmem:[%s19 + $0x20] sm:$0xff]
  %v2535 = vld [vmem:[%s19 + $0x28] sm:$0xff]
  %v2536 = vld [vmem:[%s19 + $0x30] sm:$0xff]
  %v2537 = vld [vmem:[%s19 + $0x38] sm:$0xff]
  %v2538 = vld [vmem:[%s21] sm:$0x3]
  %v2539 = vpack.c.bf16 %v2436, %v2436
  %v2541 = vlaneseq
  %v2542 = vshrl.u32 %v2541, 7
  %v2543 = vsub.s32 0, %v2542
  %v2544 = vrot.slane %v2538, %v2543
  %v2545 = vlaneseq
  %v2546 = vshrl.u32 %v2545, 7
  %v2547 = vsub.s32 1, %v2546
  %v2548 = vrot.slane %v2538, %v2547
  %v2559 = vunpack.c.l.b16 %v2530
  %v2560 = vunpack.c.h.b16 %v2530
  %v2561 = vunpack.c.l.b16 %v2531
  %v2562 = vunpack.c.h.b16 %v2531
  %v2563 = vunpack.c.l.b16 %v2532
  %v2564 = vunpack.c.h.b16 %v2532
  %v2565 = vunpack.c.l.b16 %v2533
  %v2566 = vunpack.c.h.b16 %v2533
  %v2567 = vunpack.c.l.b16 %v2534
  %v2568 = vunpack.c.h.b16 %v2534
  %v2569 = vunpack.c.l.b16 %v2535
  %v2570 = vunpack.c.h.b16 %v2535
  %v2571 = vunpack.c.l.b16 %v2536
  %v2572 = vunpack.c.h.b16 %v2536
  %v2573 = vunpack.c.l.b16 %v2537
  %v2574 = vunpack.c.h.b16 %v2537
  %v2575 = vpack.c.b16 %v2561, %v2559
  %v2576 = vpack.c.b16 %v2562, %v2560
  %v2577 = vpack.c.b16 %v2565, %v2563
  %v2578 = vpack.c.b16 %v2566, %v2564
  %v2579 = vpack.c.b16 %v2569, %v2567
  %v2580 = vpack.c.b16 %v2570, %v2568
  %v2581 = vpack.c.b16 %v2573, %v2571
  %v2582 = vpack.c.b16 %v2574, %v2572
  %v2592 = vsel %vm216, %v2539, 0
  %2594 = vmatprep.subr.bf16.mxu0 0
  %2595 = vmatpush1.bf16.msra.mxu0 0
  %2596 = vmatprep.subr.bf16.mxu0 0
  %2597 = vmatpush1.bf16.msra.mxu0 0
  %2598 = vmatprep.subr.bf16.mxu0 0
  %2599 = vmatpush1.bf16.msra.mxu0 0
  %2600 = vmatprep.subr.bf16.mxu0 0
  %2601 = vmatpush1.bf16.msra.mxu0 0
  %2602 = vmatprep.subr.bf16.mxu0 %v2582
  %2603 = vmatpush1.bf16.msra.mxu0 %v2581
  %2604 = vmatprep.subr.bf16.mxu0 %v2580
  %2605 = vmatpush1.bf16.msra.mxu0 %v2579
  %2606 = vmatprep.subr.bf16.mxu0 %v2578
  %2607 = vmatpush1.bf16.msra.mxu0 %v2577
  %2608 = vmatprep.subr.bf16.mxu0 %v2576
  %2609 = vmatpush1.bf16.msra.mxu0 %v2575
  %2610 = vmatprep.subr.bf16.mxu0 0
  %2611 = vmatpush2.bf16.msra.mxu0 0
  %2612 = vmatprep.subr.bf16.mxu0 0
  %2613 = vmatpush2.bf16.msra.mxu0 0
  %2614 = vmatprep.subr.bf16.mxu0 0
  %2615 = vmatpush2.bf16.msra.mxu0 0
  %2616 = vmatprep.subr.bf16.mxu0 0
  %2617 = vmatpush2.bf16.msra.mxu0 0
  %2618 = vmatprep.subr.bf16.mxu0 0
  %2619 = vmatpush2.bf16.msra.mxu0 0
  %2620 = vmatprep.subr.bf16.mxu0 0
  %2621 = vmatpush2.bf16.msra.mxu0 0
  %2622 = vmatprep.subr.bf16.mxu0 0
  %2623 = vmatpush2.bf16.msra.mxu0 0
  %2624 = vmatprep.subr.bf16.mxu0 0
  %2625 = vmatpush2.bf16.msra.mxu0 0
  %2626 = vmatprep.mubr.bf16.mxu0 0
  %2627 = vmatmul.mubr.bf16.gmra.mxu0 %v2592
  %v2628 = vpop.f32.mrf.mxu0
  %v2629 = vadd.f32 %v2544, %v2628
  %v2630 = vpop.f32.mrf.mxu0
  %v2631 = vadd.f32 %v2548, %v2630
  %v2632 = vpop.f32.mrf.mxu0
  %v2633 = vpop.f32.mrf.mxu0
  %2634 = vdwg.mxu0
  %v2635 = vadd.f32 %v2522, %v2629
  %v2636 = vxor.u32 %v2635, 2147483648
  %v2637 = vmul.f32 %v2636, 1.442695
  %v2638 = vpow.pop %v2637
  %v2639 = vadd.f32 %v2638, 1.0
  %v2640 = vrcp.pop %v2639
  %v2641 = vmul.f32 1.0, %v2640
  %2643 = vrot.lane.b32.xlu0 %v2629, 64
  %v2644 = vpop.permute.xlu0 %2643
  %v2646 = vmul.f32 %v2641, %v2644
  %2648 = vrot.lane.b32.xlu0 %v2646, 64
  %v2649 = vpop.permute.xlu0 %2648
  %v2651 = vadd.f32 %v2522, %v2649
  %v2652 = vtanh.pop %v2651
  %v2653 = vsub.f32 1.0, %v2641
  %2655 = vrot.lane.b32.xlu0 %v2652, 96
  %v2656 = vpop.permute.xlu0 %2655
  %v2658 = vmul.f32 %v2653, %v2656
  %2660 = vrot.lane.b32.xlu0 %v2436, 32
  %v2661 = vpop.permute.xlu0 %2660
  %v2663 = vmul.f32 %v2641, %v2661
  %v2664 = vadd.f32 %v2658, %v2663
  %v2665 = vadd.f32 %v2524, %v2631
  %v2666 = vxor.u32 %v2665, 2147483648
  %v2667 = vmul.f32 %v2666, 1.442695
  %v2668 = vpow.pop %v2667
  %v2669 = vadd.f32 %v2668, 1.0
  %v2670 = vrcp.pop %v2669
  %v2671 = vmul.f32 1.0, %v2670
  %2673 = vrot.lane.b32.xlu0 %v2631, 64
  %v2674 = vpop.permute.xlu0 %2673
  %v2676 = vmul.f32 %v2671, %v2674
  %2678 = vrot.lane.b32.xlu0 %v2676, 64
  %v2679 = vpop.permute.xlu0 %2678
  %v2681 = vadd.f32 %v2524, %v2679
  %v2682 = vtanh.pop %v2681
  %v2683 = vsub.f32 1.0, %v2671
  %2685 = vrot.lane.b32.xlu0 %v2682, 96
  %v2686 = vpop.permute.xlu0 %2685
  %v2688 = vmul.f32 %v2683, %v2686
  %v2689 = vmul.f32 %v2671, %v2436
  %v2690 = vadd.f32 %v2688, %v2689
  %2692 = vrot.lane.b32.xlu0 %v2664, 96
  %v2693 = vpop.permute.xlu0 %2692
  %v2695 = vsel %vm121, %v2693, %v2690
  %v2696 = vpack.c.bf16 %v2695, %v2695
  %v2698 = vsel %vm216, %v2696, 0
  %2700 = vmatprep.subr.bf16.mxu0 0
  %2701 = vmatpush1.bf16.msra.mxu0 0
  %2702 = vmatprep.subr.bf16.mxu0 0
  %2703 = vmatpush1.bf16.msra.mxu0 0
  %2704 = vmatprep.subr.bf16.mxu0 0
  %2705 = vmatpush1.bf16.msra.mxu0 0
  %2706 = vmatprep.subr.bf16.mxu0 0
  %2707 = vmatpush1.bf16.msra.mxu0 0
  %2708 = vmatprep.subr.bf16.mxu0 %v2582
  %2709 = vmatpush1.bf16.msra.mxu0 %v2581
  %2710 = vmatprep.subr.bf16.mxu0 %v2580
  %2711 = vmatpush1.bf16.msra.mxu0 %v2579
  %2712 = vmatprep.subr.bf16.mxu0 %v2578
  %2713 = vmatpush1.bf16.msra.mxu0 %v2577
  %2714 = vmatprep.subr.bf16.mxu0 %v2576
  %2715 = vmatpush1.bf16.msra.mxu0 %v2575
  %2716 = vmatprep.subr.bf16.mxu0 0
  %2717 = vmatpush2.bf16.msra.mxu0 0
  %2718 = vmatprep.subr.bf16.mxu0 0
  %2719 = vmatpush2.bf16.msra.mxu0 0
  %2720 = vmatprep.subr.bf16.mxu0 0
  %2721 = vmatpush2.bf16.msra.mxu0 0
  %2722 = vmatprep.subr.bf16.mxu0 0
  %2723 = vmatpush2.bf16.msra.mxu0 0
  %2724 = vmatprep.subr.bf16.mxu0 0
  %2725 = vmatpush2.bf16.msra.mxu0 0
  %2726 = vmatprep.subr.bf16.mxu0 0
  %2727 = vmatpush2.bf16.msra.mxu0 0
  %2728 = vmatprep.subr.bf16.mxu0 0
  %2729 = vmatpush2.bf16.msra.mxu0 0
  %2730 = vmatprep.subr.bf16.mxu0 0
  %2731 = vmatpush2.bf16.msra.mxu0 0
  %2732 = vmatprep.mubr.bf16.mxu0 0
  %2733 = vmatmul.mubr.bf16.gmra.mxu0 %v2698
  %v2734 = vpop.f32.mrf.mxu0
  %v2735 = vadd.f32 %v2544, %v2734
  %v2736 = vpop.f32.mrf.mxu0
  %v2737 = vadd.f32 %v2548, %v2736
  %v2738 = vpop.f32.mrf.mxu0
  %v2739 = vpop.f32.mrf.mxu0
  %2740 = vdwg.mxu0
  %v2742 = vrot.slane %v2735, 6
  %v2744 = vadd.f32 %v2522, %v2742
  %v2745 = vxor.u32 %v2744, 2147483648
  %v2746 = vmul.f32 %v2745, 1.442695
  %v2747 = vpow.pop %v2746
  %v2748 = vadd.f32 %v2747, 1.0
  %v2749 = vrcp.pop %v2748
  %v2750 = vmul.f32 1.0, %v2749
  %2751 = vrot.lane.b32.xlu0 %v2742, 64
  %v2752 = vpop.permute.xlu0 %2751
  %v2754 = vmul.f32 %v2750, %v2752
  %2756 = vrot.lane.b32.xlu0 %v2754, 64
  %v2757 = vpop.permute.xlu0 %2756
  %v2759 = vadd.f32 %v2522, %v2757
  %v2760 = vtanh.pop %v2759
  %v2761 = vsub.f32 1.0, %v2750
  %2763 = vrot.lane.b32.xlu0 %v2760, 96
  %v2764 = vpop.permute.xlu0 %2763
  %v2766 = vmul.f32 %v2761, %v2764
  %v2768 = vrot.slane %v2695, 6
  %2769 = vrot.lane.b32.xlu0 %v2768, 32
  %v2770 = vpop.permute.xlu0 %2769
  %v2772 = vmul.f32 %v2750, %v2770
  %v2773 = vadd.f32 %v2766, %v2772
  %v2775 = vrot.slane %v2737, 6
  %v2777 = vadd.f32 %v2524, %v2775
  %v2778 = vxor.u32 %v2777, 2147483648
  %v2779 = vmul.f32 %v2778, 1.442695
  %v2780 = vpow.pop %v2779
  %v2781 = vadd.f32 %v2780, 1.0
  %v2782 = vrcp.pop %v2781
  %v2783 = vmul.f32 1.0, %v2782
  %2784 = vrot.lane.b32.xlu0 %v2775, 64
  %v2785 = vpop.permute.xlu0 %2784
  %v2787 = vmul.f32 %v2783, %v2785
  %2789 = vrot.lane.b32.xlu0 %v2787, 64
  %v2790 = vpop.permute.xlu0 %2789
  %v2792 = vadd.f32 %v2524, %v2790
  %v2793 = vtanh.pop %v2792
  %v2794 = vsub.f32 1.0, %v2783
  %2796 = vrot.lane.b32.xlu0 %v2793, 96
  %v2797 = vpop.permute.xlu0 %2796
  %v2799 = vmul.f32 %v2794, %v2797
  %v2801 = vmul.f32 %v2783, %v2768
  %v2802 = vadd.f32 %v2799, %v2801
  %2804 = vrot.lane.b32.xlu0 %v2773, 96
  %v2805 = vpop.permute.xlu0 %2804
  %v2807 = vsel %vm121, %v2805, %v2802
  %v2808 = vpack.c.bf16 %v2807, %v2807
  %v2810 = vrot.slane %v2808, 1
  %v2812 = vsel %vm216, %v2810, 0
  %2814 = vmatprep.subr.bf16.mxu0 0
  %2815 = vmatpush1.bf16.msra.mxu0 0
  %2816 = vmatprep.subr.bf16.mxu0 0
  %2817 = vmatpush1.bf16.msra.mxu0 0
  %2818 = vmatprep.subr.bf16.mxu0 0
  %2819 = vmatpush1.bf16.msra.mxu0 0
  %2820 = vmatprep.subr.bf16.mxu0 0
  %2821 = vmatpush1.bf16.msra.mxu0 0
  %2822 = vmatprep.subr.bf16.mxu0 %v2582
  %2823 = vmatpush1.bf16.msra.mxu0 %v2581
  %2824 = vmatprep.subr.bf16.mxu0 %v2580
  %2825 = vmatpush1.bf16.msra.mxu0 %v2579
  %2826 = vmatprep.subr.bf16.mxu0 %v2578
  %2827 = vmatpush1.bf16.msra.mxu0 %v2577
  %2828 = vmatprep.subr.bf16.mxu0 %v2576
  %2829 = vmatpush1.bf16.msra.mxu0 %v2575
  %2830 = vmatprep.subr.bf16.mxu0 0
  %2831 = vmatpush2.bf16.msra.mxu0 0
  %2832 = vmatprep.subr.bf16.mxu0 0
  %2833 = vmatpush2.bf16.msra.mxu0 0
  %2834 = vmatprep.subr.bf16.mxu0 0
  %2835 = vmatpush2.bf16.msra.mxu0 0
  %2836 = vmatprep.subr.bf16.mxu0 0
  %2837 = vmatpush2.bf16.msra.mxu0 0
  %2838 = vmatprep.subr.bf16.mxu0 0
  %2839 = vmatpush2.bf16.msra.mxu0 0
  %2840 = vmatprep.subr.bf16.mxu0 0
  %2841 = vmatpush2.bf16.msra.mxu0 0
  %2842 = vmatprep.subr.bf16.mxu0 0
  %2843 = vmatpush2.bf16.msra.mxu0 0
  %2844 = vmatprep.subr.bf16.mxu0 0
  %2845 = vmatpush2.bf16.msra.mxu0 0
  %2846 = vmatprep.mubr.bf16.mxu0 0
  %2847 = vmatmul.mubr.bf16.gmra.mxu0 %v2812
  %v2848 = vpop.f32.mrf.mxu0
  %v2849 = vadd.f32 %v2544, %v2848
  %v2850 = vpop.f32.mrf.mxu0
  %v2851 = vadd.f32 %v2548, %v2850
  %v2852 = vpop.f32.mrf.mxu0
  %v2853 = vpop.f32.mrf.mxu0
  %2854 = vdwg.mxu0
  %v2856 = vrot.slane %v2849, 4
  %v2858 = vadd.f32 %v2522, %v2856
  %v2859 = vxor.u32 %v2858, 2147483648
  %v2860 = vmul.f32 %v2859, 1.442695
  %v2861 = vpow.pop %v2860
  %v2862 = vadd.f32 %v2861, 1.0
  %v2863 = vrcp.pop %v2862
  %v2864 = vmul.f32 1.0, %v2863
  %2865 = vrot.lane.b32.xlu0 %v2856, 64
  %v2866 = vpop.permute.xlu0 %2865
  %v2868 = vmul.f32 %v2864, %v2866
  %2870 = vrot.lane.b32.xlu0 %v2868, 64
  %v2871 = vpop.permute.xlu0 %2870
  %v2873 = vadd.f32 %v2522, %v2871
  %v2874 = vtanh.pop %v2873
  %v2875 = vsub.f32 1.0, %v2864
  %2877 = vrot.lane.b32.xlu0 %v2874, 96
  %v2878 = vpop.permute.xlu0 %2877
  %v2880 = vmul.f32 %v2875, %v2878
  %v2882 = vrot.slane %v2807, 6
  %2883 = vrot.lane.b32.xlu0 %v2882, 32
  %v2884 = vpop.permute.xlu0 %2883
  %v2886 = vmul.f32 %v2864, %v2884
  %v2887 = vadd.f32 %v2880, %v2886
  %v2889 = vrot.slane %v2851, 4
  %v2891 = vadd.f32 %v2524, %v2889
  %v2892 = vxor.u32 %v2891, 2147483648
  %v2893 = vmul.f32 %v2892, 1.442695
  %v2894 = vpow.pop %v2893
  %v2895 = vadd.f32 %v2894, 1.0
  %v2896 = vrcp.pop %v2895
  %v2897 = vmul.f32 1.0, %v2896
  %2898 = vrot.lane.b32.xlu0 %v2889, 64
  %v2899 = vpop.permute.xlu0 %2898
  %v2901 = vmul.f32 %v2897, %v2899
  %2903 = vrot.lane.b32.xlu0 %v2901, 64
  %v2904 = vpop.permute.xlu0 %2903
  %v2906 = vadd.f32 %v2524, %v2904
  %v2907 = vtanh.pop %v2906
  %v2908 = vsub.f32 1.0, %v2897
  %2910 = vrot.lane.b32.xlu0 %v2907, 96
  %v2911 = vpop.permute.xlu0 %2910
  %v2913 = vmul.f32 %v2908, %v2911
  %v2915 = vmul.f32 %v2897, %v2882
  %v2916 = vadd.f32 %v2913, %v2915
  %2918 = vrot.lane.b32.xlu0 %v2887, 96
  %v2919 = vpop.permute.xlu0 %2918
  %v2921 = vsel %vm121, %v2919, %v2916
  %v2922 = vpack.c.bf16 %v2921, %v2921
  %v2924 = vrot.slane %v2922, 2
  %v2926 = vsel %vm216, %v2924, 0
  %2928 = vmatprep.subr.bf16.mxu0 0
  %2929 = vmatpush1.bf16.msra.mxu0 0
  %2930 = vmatprep.subr.bf16.mxu0 0
  %2931 = vmatpush1.bf16.msra.mxu0 0
  %2932 = vmatprep.subr.bf16.mxu0 0
  %2933 = vmatpush1.bf16.msra.mxu0 0
  %2934 = vmatprep.subr.bf16.mxu0 0
  %2935 = vmatpush1.bf16.msra.mxu0 0
  %2936 = vmatprep.subr.bf16.mxu0 %v2582
  %2937 = vmatpush1.bf16.msra.mxu0 %v2581
  %2938 = vmatprep.subr.bf16.mxu0 %v2580
  %2939 = vmatpush1.bf16.msra.mxu0 %v2579
  %2940 = vmatprep.subr.bf16.mxu0 %v2578
  %2941 = vmatpush1.bf16.msra.mxu0 %v2577
  %2942 = vmatprep.subr.bf16.mxu0 %v2576
  %2943 = vmatpush1.bf16.msra.mxu0 %v2575
  %2944 = vmatprep.subr.bf16.mxu0 0
  %2945 = vmatpush2.bf16.msra.mxu0 0
  %2946 = vmatprep.subr.bf16.mxu0 0
  %2947 = vmatpush2.bf16.msra.mxu0 0
  %2948 = vmatprep.subr.bf16.mxu0 0
  %2949 = vmatpush2.bf16.msra.mxu0 0
  %2950 = vmatprep.subr.bf16.mxu0 0
  %2951 = vmatpush2.bf16.msra.mxu0 0
  %2952 = vmatprep.subr.bf16.mxu0 0
  %2953 = vmatpush2.bf16.msra.mxu0 0
  %2954 = vmatprep.subr.bf16.mxu0 0
  %2955 = vmatpush2.bf16.msra.mxu0 0
  %2956 = vmatprep.subr.bf16.mxu0 0
  %2957 = vmatpush2.bf16.msra.mxu0 0
  %2958 = vmatprep.subr.bf16.mxu0 0
  %2959 = vmatpush2.bf16.msra.mxu0 0
  %2960 = vmatprep.mubr.bf16.mxu0 0
  %2961 = vmatmul.mubr.bf16.gmra.mxu0 %v2926
  %v2962 = vpop.f32.mrf.mxu0
  %v2963 = vadd.f32 %v2544, %v2962
  %v2964 = vpop.f32.mrf.mxu0
  %v2965 = vadd.f32 %v2548, %v2964
  %v2966 = vpop.f32.mrf.mxu0
  %v2967 = vpop.f32.mrf.mxu0
  %2968 = vdwg.mxu0
  %v2970 = vrot.slane %v2963, 2
  %v2972 = vadd.f32 %v2522, %v2970
  %v2973 = vxor.u32 %v2972, 2147483648
  %v2974 = vmul.f32 %v2973, 1.442695
  %v2975 = vpow.pop %v2974
  %v2976 = vadd.f32 %v2975, 1.0
  %v2977 = vrcp.pop %v2976
  %v2978 = vmul.f32 1.0, %v2977
  %2979 = vrot.lane.b32.xlu0 %v2970, 64
  %v2980 = vpop.permute.xlu0 %2979
  %v2982 = vmul.f32 %v2978, %v2980
  %2984 = vrot.lane.b32.xlu0 %v2982, 64
  %v2985 = vpop.permute.xlu0 %2984
  %v2987 = vadd.f32 %v2522, %v2985
  %v2988 = vtanh.pop %v2987
  %v2989 = vsub.f32 1.0, %v2978
  %2991 = vrot.lane.b32.xlu0 %v2988, 96
  %v2992 = vpop.permute.xlu0 %2991
  %v2994 = vmul.f32 %v2989, %v2992
  %v2996 = vrot.slane %v2921, 6
  %2997 = vrot.lane.b32.xlu0 %v2996, 32
  %v2998 = vpop.permute.xlu0 %2997
  %v3000 = vmul.f32 %v2978, %v2998
  %v3001 = vadd.f32 %v2994, %v3000
  %v3003 = vrot.slane %v2965, 2
  %v3005 = vadd.f32 %v2524, %v3003
  %v3006 = vxor.u32 %v3005, 2147483648
  %v3007 = vmul.f32 %v3006, 1.442695
  %v3008 = vpow.pop %v3007
  %v3009 = vadd.f32 %v3008, 1.0
  %v3010 = vrcp.pop %v3009
  %v3011 = vmul.f32 1.0, %v3010
  %3012 = vrot.lane.b32.xlu0 %v3003, 64
  %v3013 = vpop.permute.xlu0 %3012
  %v3015 = vmul.f32 %v3011, %v3013
  %3017 = vrot.lane.b32.xlu0 %v3015, 64
  %v3018 = vpop.permute.xlu0 %3017
  %v3020 = vadd.f32 %v2524, %v3018
  %v3021 = vtanh.pop %v3020
  %v3022 = vsub.f32 1.0, %v3011
  %3024 = vrot.lane.b32.xlu0 %v3021, 96
  %v3025 = vpop.permute.xlu0 %3024
  %v3027 = vmul.f32 %v3022, %v3025
  %v3029 = vmul.f32 %v3011, %v2996
  %v3030 = vadd.f32 %v3027, %v3029
  %3032 = vrot.lane.b32.xlu0 %v3001, 96
  %v3033 = vpop.permute.xlu0 %3032
  %v3035 = vsel %vm121, %v3033, %v3030
  %v3036 = vpack.c.bf16 %v3035, %v3035
  %v3038 = vrot.slane %v3036, 3
  %v3040 = vsel %vm216, %v3038, 0
  %3042 = vmatprep.subr.bf16.mxu0 0
  %3043 = vmatpush1.bf16.msra.mxu0 0
  %3044 = vmatprep.subr.bf16.mxu0 0
  %3045 = vmatpush1.bf16.msra.mxu0 0
  %3046 = vmatprep.subr.bf16.mxu0 0
  %3047 = vmatpush1.bf16.msra.mxu0 0
  %3048 = vmatprep.subr.bf16.mxu0 0
  %3049 = vmatpush1.bf16.msra.mxu0 0
  %3050 = vmatprep.subr.bf16.mxu0 %v2582
  %3051 = vmatpush1.bf16.msra.mxu0 %v2581
  %3052 = vmatprep.subr.bf16.mxu0 %v2580
  %3053 = vmatpush1.bf16.msra.mxu0 %v2579
  %3054 = vmatprep.subr.bf16.mxu0 %v2578
  %3055 = vmatpush1.bf16.msra.mxu0 %v2577
  %3056 = vmatprep.subr.bf16.mxu0 %v2576
  %3057 = vmatpush1.bf16.msra.mxu0 %v2575
  %3058 = vmatprep.subr.bf16.mxu0 0
  %3059 = vmatpush2.bf16.msra.mxu0 0
  %3060 = vmatprep.subr.bf16.mxu0 0
  %3061 = vmatpush2.bf16.msra.mxu0 0
  %3062 = vmatprep.subr.bf16.mxu0 0
  %3063 = vmatpush2.bf16.msra.mxu0 0
  %3064 = vmatprep.subr.bf16.mxu0 0
  %3065 = vmatpush2.bf16.msra.mxu0 0
  %3066 = vmatprep.subr.bf16.mxu0 0
  %3067 = vmatpush2.bf16.msra.mxu0 0
  %3068 = vmatprep.subr.bf16.mxu0 0
  %3069 = vmatpush2.bf16.msra.mxu0 0
  %3070 = vmatprep.subr.bf16.mxu0 0
  %3071 = vmatpush2.bf16.msra.mxu0 0
  %3072 = vmatprep.subr.bf16.mxu0 0
  %3073 = vmatpush2.bf16.msra.mxu0 0
  %3074 = vmatprep.mubr.bf16.mxu0 0
  %3075 = vmatmul.mubr.bf16.gmra.mxu0 %v3040
  %v3076 = vpop.f32.mrf.mxu0
  %v3077 = vadd.f32 %v2544, %v3076
  %v3078 = vpop.f32.mrf.mxu0
  %v3079 = vadd.f32 %v2548, %v3078
  %v3080 = vpop.f32.mrf.mxu0
  %v3081 = vpop.f32.mrf.mxu0
  %3082 = vdwg.mxu0
  %v3083 = vadd.f32 %v2526, %v3077
  %v3084 = vxor.u32 %v3083, 2147483648
  %v3085 = vmul.f32 %v3084, 1.442695
  %v3086 = vpow.pop %v3085
  %v3087 = vadd.f32 %v3086, 1.0
  %v3088 = vrcp.pop %v3087
  %v3089 = vmul.f32 1.0, %v3088
  %3091 = vrot.lane.b32.xlu0 %v3077, 64
  %v3092 = vpop.permute.xlu0 %3091
  %v3094 = vmul.f32 %v3089, %v3092
  %3096 = vrot.lane.b32.xlu0 %v3094, 64
  %v3097 = vpop.permute.xlu0 %3096
  %v3099 = vadd.f32 %v2526, %v3097
  %v3100 = vtanh.pop %v3099
  %v3101 = vsub.f32 1.0, %v3089
  %3103 = vrot.lane.b32.xlu0 %v3100, 96
  %v3104 = vpop.permute.xlu0 %3103
  %v3106 = vmul.f32 %v3101, %v3104
  %v3108 = vrot.slane %v3035, 6
  %3109 = vrot.lane.b32.xlu0 %v3108, 32
  %v3110 = vpop.permute.xlu0 %3109
  %v3112 = vmul.f32 %v3089, %v3110
  %v3113 = vadd.f32 %v3106, %v3112
  %v3114 = vadd.f32 %v2528, %v3079
  %v3115 = vxor.u32 %v3114, 2147483648
  %v3116 = vmul.f32 %v3115, 1.442695
  %v3117 = vpow.pop %v3116
  %v3118 = vadd.f32 %v3117, 1.0
  %v3119 = vrcp.pop %v3118
  %v3120 = vmul.f32 1.0, %v3119
  %3122 = vrot.lane.b32.xlu0 %v3079, 64
  %v3123 = vpop.permute.xlu0 %3122
  %v3125 = vmul.f32 %v3120, %v3123
  %3127 = vrot.lane.b32.xlu0 %v3125, 64
  %v3128 = vpop.permute.xlu0 %3127
  %v3130 = vadd.f32 %v2528, %v3128
  %v3131 = vtanh.pop %v3130
  %v3132 = vsub.f32 1.0, %v3120
  %3134 = vrot.lane.b32.xlu0 %v3131, 96
  %v3135 = vpop.permute.xlu0 %3134
  %v3137 = vmul.f32 %v3132, %v3135
  %v3139 = vmul.f32 %v3120, %v3108
  %v3140 = vadd.f32 %v3137, %v3139
  %3142 = vrot.lane.b32.xlu0 %v3113, 96
  %v3143 = vpop.permute.xlu0 %3142
  %v3145 = vsel %vm121, %v3143, %v3140
  %v3146 = vpack.c.bf16 %v3145, %v3145
  %v3148 = vsel %vm216, %v3146, 0
  %3150 = vmatprep.subr.bf16.mxu0 0
  %3151 = vmatpush1.bf16.msra.mxu0 0
  %3152 = vmatprep.subr.bf16.mxu0 0
  %3153 = vmatpush1.bf16.msra.mxu0 0
  %3154 = vmatprep.subr.bf16.mxu0 0
  %3155 = vmatpush1.bf16.msra.mxu0 0
  %3156 = vmatprep.subr.bf16.mxu0 0
  %3157 = vmatpush1.bf16.msra.mxu0 0
  %3158 = vmatprep.subr.bf16.mxu0 %v2582
  %3159 = vmatpush1.bf16.msra.mxu0 %v2581
  %3160 = vmatprep.subr.bf16.mxu0 %v2580
  %3161 = vmatpush1.bf16.msra.mxu0 %v2579
  %3162 = vmatprep.subr.bf16.mxu0 %v2578
  %3163 = vmatpush1.bf16.msra.mxu0 %v2577
  %3164 = vmatprep.subr.bf16.mxu0 %v2576
  %3165 = vmatpush1.bf16.msra.mxu0 %v2575
  %3166 = vmatprep.subr.bf16.mxu0 0
  %3167 = vmatpush2.bf16.msra.mxu0 0
  %3168 = vmatprep.subr.bf16.mxu0 0
  %3169 = vmatpush2.bf16.msra.mxu0 0
  %3170 = vmatprep.subr.bf16.mxu0 0
  %3171 = vmatpush2.bf16.msra.mxu0 0
  %3172 = vmatprep.subr.bf16.mxu0 0
  %3173 = vmatpush2.bf16.msra.mxu0 0
  %3174 = vmatprep.subr.bf16.mxu0 0
  %3175 = vmatpush2.bf16.msra.mxu0 0
  %3176 = vmatprep.subr.bf16.mxu0 0
  %3177 = vmatpush2.bf16.msra.mxu0 0
  %3178 = vmatprep.subr.bf16.mxu0 0
  %3179 = vmatpush2.bf16.msra.mxu0 0
  %3180 = vmatprep.subr.bf16.mxu0 0
  %3181 = vmatpush2.bf16.msra.mxu0 0
  %3182 = vmatprep.mubr.bf16.mxu0 0
  %3183 = vmatmul.mubr.bf16.gmra.mxu0 %v3148
  %v3184 = vpop.f32.mrf.mxu0
  %v3185 = vadd.f32 %v2544, %v3184
  %v3186 = vpop.f32.mrf.mxu0
  %v3187 = vadd.f32 %v2548, %v3186
  %v3188 = vpop.f32.mrf.mxu0
  %v3189 = vpop.f32.mrf.mxu0
  %3190 = vdwg.mxu0
  %v3192 = vrot.slane %v3185, 6
  %v3194 = vadd.f32 %v2526, %v3192
  %v3195 = vxor.u32 %v3194, 2147483648
  %v3196 = vmul.f32 %v3195, 1.442695
  %v3197 = vpow.pop %v3196
  %v3198 = vadd.f32 %v3197, 1.0
  %v3199 = vrcp.pop %v3198
  %v3200 = vmul.f32 1.0, %v3199
  %3201 = vrot.lane.b32.xlu0 %v3192, 64
  %v3202 = vpop.permute.xlu0 %3201
  %v3204 = vmul.f32 %v3200, %v3202
  %3206 = vrot.lane.b32.xlu0 %v3204, 64
  %v3207 = vpop.permute.xlu0 %3206
  %v3209 = vadd.f32 %v2526, %v3207
  %v3210 = vtanh.pop %v3209
  %v3211 = vsub.f32 1.0, %v3200
  %3213 = vrot.lane.b32.xlu0 %v3210, 96
  %v3214 = vpop.permute.xlu0 %3213
  %v3216 = vmul.f32 %v3211, %v3214
  %v3218 = vrot.slane %v3145, 6
  %3219 = vrot.lane.b32.xlu0 %v3218, 32
  %v3220 = vpop.permute.xlu0 %3219
  %v3222 = vmul.f32 %v3200, %v3220
  %v3223 = vadd.f32 %v3216, %v3222
  %v3225 = vrot.slane %v3187, 6
  %v3227 = vadd.f32 %v2528, %v3225
  %v3228 = vxor.u32 %v3227, 2147483648
  %v3229 = vmul.f32 %v3228, 1.442695
  %v3230 = vpow.pop %v3229
  %v3231 = vadd.f32 %v3230, 1.0
  %v3232 = vrcp.pop %v3231
  %v3233 = vmul.f32 1.0, %v3232
  %3234 = vrot.lane.b32.xlu0 %v3225, 64
  %v3235 = vpop.permute.xlu0 %3234
  %v3237 = vmul.f32 %v3233, %v3235
  %3239 = vrot.lane.b32.xlu0 %v3237, 64
  %v3240 = vpop.permute.xlu0 %3239
  %v3242 = vadd.f32 %v2528, %v3240
  %v3243 = vtanh.pop %v3242
  %v3244 = vsub.f32 1.0, %v3233
  %3246 = vrot.lane.b32.xlu0 %v3243, 96
  %v3247 = vpop.permute.xlu0 %3246
  %v3249 = vmul.f32 %v3244, %v3247
  %v3251 = vmul.f32 %v3233, %v3218
  %v3252 = vadd.f32 %v3249, %v3251
  %3254 = vrot.lane.b32.xlu0 %v3223, 96
  %v3255 = vpop.permute.xlu0 %3254
  %v3257 = vsel %vm121, %v3255, %v3252
  %v3258 = vpack.c.bf16 %v3257, %v3257
  %v3260 = vrot.slane %v3258, 1
  %v3262 = vsel %vm216, %v3260, 0
  %3264 = vmatprep.subr.bf16.mxu0 0
  %3265 = vmatpush1.bf16.msra.mxu0 0
  %3266 = vmatprep.subr.bf16.mxu0 0
  %3267 = vmatpush1.bf16.msra.mxu0 0
  %3268 = vmatprep.subr.bf16.mxu0 0
  %3269 = vmatpush1.bf16.msra.mxu0 0
  %3270 = vmatprep.subr.bf16.mxu0 0
  %3271 = vmatpush1.bf16.msra.mxu0 0
  %3272 = vmatprep.subr.bf16.mxu0 %v2582
  %3273 = vmatpush1.bf16.msra.mxu0 %v2581
  %3274 = vmatprep.subr.bf16.mxu0 %v2580
  %3275 = vmatpush1.bf16.msra.mxu0 %v2579
  %3276 = vmatprep.subr.bf16.mxu0 %v2578
  %3277 = vmatpush1.bf16.msra.mxu0 %v2577
  %3278 = vmatprep.subr.bf16.mxu0 %v2576
  %3279 = vmatpush1.bf16.msra.mxu0 %v2575
  %3280 = vmatprep.subr.bf16.mxu0 0
  %3281 = vmatpush2.bf16.msra.mxu0 0
  %3282 = vmatprep.subr.bf16.mxu0 0
  %3283 = vmatpush2.bf16.msra.mxu0 0
  %3284 = vmatprep.subr.bf16.mxu0 0
  %3285 = vmatpush2.bf16.msra.mxu0 0
  %3286 = vmatprep.subr.bf16.mxu0 0
  %3287 = vmatpush2.bf16.msra.mxu0 0
  %3288 = vmatprep.subr.bf16.mxu0 0
  %3289 = vmatpush2.bf16.msra.mxu0 0
  %3290 = vmatprep.subr.bf16.mxu0 0
  %3291 = vmatpush2.bf16.msra.mxu0 0
  %3292 = vmatprep.subr.bf16.mxu0 0
  %3293 = vmatpush2.bf16.msra.mxu0 0
  %3294 = vmatprep.subr.bf16.mxu0 0
  %3295 = vmatpush2.bf16.msra.mxu0 0
  %3296 = vmatprep.mubr.bf16.mxu0 0
  %3297 = vmatmul.mubr.bf16.gmra.mxu0 %v3262
  %v3298 = vpop.f32.mrf.mxu0
  %v3299 = vadd.f32 %v2544, %v3298
  %v3300 = vpop.f32.mrf.mxu0
  %v3301 = vadd.f32 %v2548, %v3300
  %v3302 = vpop.f32.mrf.mxu0
  %v3303 = vpop.f32.mrf.mxu0
  %3304 = vdwg.mxu0
  %v3306 = vrot.slane %v3299, 4
  %v3308 = vadd.f32 %v2526, %v3306
  %v3309 = vxor.u32 %v3308, 2147483648
  %v3310 = vmul.f32 %v3309, 1.442695
  %v3311 = vpow.pop %v3310
  %v3312 = vadd.f32 %v3311, 1.0
  %v3313 = vrcp.pop %v3312
  %v3314 = vmul.f32 1.0, %v3313
  %3315 = vrot.lane.b32.xlu0 %v3306, 64
  %v3316 = vpop.permute.xlu0 %3315
  %v3318 = vmul.f32 %v3314, %v3316
  %3320 = vrot.lane.b32.xlu0 %v3318, 64
  %v3321 = vpop.permute.xlu0 %3320
  %v3323 = vadd.f32 %v2526, %v3321
  %v3324 = vtanh.pop %v3323
  %v3325 = vsub.f32 1.0, %v3314
  %3327 = vrot.lane.b32.xlu0 %v3324, 96
  %v3328 = vpop.permute.xlu0 %3327
  %v3330 = vmul.f32 %v3325, %v3328
  %v3332 = vrot.slane %v3257, 6
  %3333 = vrot.lane.b32.xlu0 %v3332, 32
  %v3334 = vpop.permute.xlu0 %3333
  %v3336 = vmul.f32 %v3314, %v3334
  %v3337 = vadd.f32 %v3330, %v3336
  %v3339 = vrot.slane %v3301, 4
  %v3341 = vadd.f32 %v2528, %v3339
  %v3342 = vxor.u32 %v3341, 2147483648
  %v3343 = vmul.f32 %v3342, 1.442695
  %v3344 = vpow.pop %v3343
  %v3345 = vadd.f32 %v3344, 1.0
  %v3346 = vrcp.pop %v3345
  %v3347 = vmul.f32 1.0, %v3346
  %3348 = vrot.lane.b32.xlu0 %v3339, 64
  %v3349 = vpop.permute.xlu0 %3348
  %v3351 = vmul.f32 %v3347, %v3349
  %3353 = vrot.lane.b32.xlu0 %v3351, 64
  %v3354 = vpop.permute.xlu0 %3353
  %v3356 = vadd.f32 %v2528, %v3354
  %v3357 = vtanh.pop %v3356
  %v3358 = vsub.f32 1.0, %v3347
  %3360 = vrot.lane.b32.xlu0 %v3357, 96
  %v3361 = vpop.permute.xlu0 %3360
  %v3363 = vmul.f32 %v3358, %v3361
  %v3365 = vmul.f32 %v3347, %v3332
  %v3366 = vadd.f32 %v3363, %v3365
  %3368 = vrot.lane.b32.xlu0 %v3337, 96
  %v3369 = vpop.permute.xlu0 %3368
  %v3371 = vsel %vm121, %v3369, %v3366
  %vm3372 = vcmask 1041408
  %v3373 = vsel %vm3372, %v2695, %v2807
  %vm3374 = vcmask 1043456
  %v3375 = vsel %vm3374, %v3373, %v2921
  %vm3376 = vcmask 1045504
  %v3377 = vsel %vm3376, %v3375, %v3035
  %v3378 = vsel %vm3372, %v3145, %v3257
  %v3379 = vsel %vm3374, %v3378, %v3371
  %v3380 = vpack.c.bf16 %v3379, %v3377
  %v3381 = vld [vmem:[%s22] sm:$0xf]
  %v3382 = vld [vmem:[%s22 + $0x4] sm:$0xf]
  %v3383 = vld [vmem:[%s22 + $0x8] sm:$0xf]
  %v3384 = vld [vmem:[%s22 + $0xc] sm:$0xf]
  %v3385 = vld [vmem:[%s22 + $0x10] sm:$0xf]
  %v3386 = vld [vmem:[%s22 + $0x14] sm:$0xf]
  %v3387 = vld [vmem:[%s22 + $0x18] sm:$0xf]
  %v3388 = vld [vmem:[%s22 + $0x1c] sm:$0xf]
  %v3389 = vld [vmem:[%s23] sm:$0x1]
  %v3391 = vlaneseq
  %v3392 = vshrl.u32 %v3391, 7
  %v3393 = vsub.s32 0, %v3392
  %v3394 = vrot.slane %v3389, %v3393
  %v3404 = vunpack.c.l.b16 %v3381
  %v3405 = vunpack.c.l.b16 %v3382
  %v3406 = vunpack.c.l.b16 %v3383
  %v3407 = vunpack.c.l.b16 %v3384
  %v3408 = vunpack.c.l.b16 %v3385
  %v3409 = vunpack.c.l.b16 %v3386
  %v3410 = vunpack.c.l.b16 %v3387
  %v3411 = vunpack.c.l.b16 %v3388
  %v3412 = vpack.c.b16 %v3405, %v3404
  %v3413 = vpack.c.b16 %v3407, %v3406
  %v3414 = vpack.c.b16 %v3409, %v3408
  %v3415 = vpack.c.b16 %v3411, %v3410
  %v3421 = vsel %vm216, %v3380, 0
  %3423 = vmatprep.subr.bf16.mxu0 0
  %3424 = vmatpush1.bf16.msra.mxu0 0
  %3425 = vmatprep.subr.bf16.mxu0 0
  %3426 = vmatpush1.bf16.msra.mxu0 0
  %3427 = vmatprep.subr.bf16.mxu0 0
  %3428 = vmatpush1.bf16.msra.mxu0 0
  %3429 = vmatprep.subr.bf16.mxu0 0
  %3430 = vmatpush1.bf16.msra.mxu0 0
  %3431 = vmatprep.subr.bf16.mxu0 0
  %3432 = vmatpush1.bf16.msra.mxu0 %v3415
  %3433 = vmatprep.subr.bf16.mxu0 0
  %3434 = vmatpush1.bf16.msra.mxu0 %v3414
  %3435 = vmatprep.subr.bf16.mxu0 0
  %3436 = vmatpush1.bf16.msra.mxu0 %v3413
  %3437 = vmatprep.subr.bf16.mxu0 0
  %3438 = vmatpush1.bf16.msra.mxu0 %v3412
  %3439 = vmatprep.subr.bf16.mxu0 0
  %3440 = vmatpush2.bf16.msra.mxu0 0
  %3441 = vmatprep.subr.bf16.mxu0 0
  %3442 = vmatpush2.bf16.msra.mxu0 0
  %3443 = vmatprep.subr.bf16.mxu0 0
  %3444 = vmatpush2.bf16.msra.mxu0 0
  %3445 = vmatprep.subr.bf16.mxu0 0
  %3446 = vmatpush2.bf16.msra.mxu0 0
  %3447 = vmatprep.subr.bf16.mxu0 0
  %3448 = vmatpush2.bf16.msra.mxu0 0
  %3449 = vmatprep.subr.bf16.mxu0 0
  %3450 = vmatpush2.bf16.msra.mxu0 0
  %3451 = vmatprep.subr.bf16.mxu0 0
  %3452 = vmatpush2.bf16.msra.mxu0 0
  %3453 = vmatprep.subr.bf16.mxu0 0
  %3454 = vmatpush2.bf16.msra.mxu0 0
  %3455 = vmatprep.mubr.bf16.mxu0 0
  %3456 = vmatmul.mubr.bf16.gmra.mxu0 %v3421
  %v3457 = vpop.f32.mrf.mxu0
  %v3458 = vadd.f32 %v3394, %v3457
  %v3459 = vpop.f32.mrf.mxu0
  %v3460 = vpop.f32.mrf.mxu0
  %v3461 = vadd.f32 %v3394, %v3460
  %v3462 = vpop.f32.mrf.mxu0
  %3463 = vdwg.mxu0
  %v3464 = vsel %vm216, %v3458, -inf
  %3465 = vmax.xlane.f32.xlu0 %v3464
  %v3466 = vpop.xlane.xlu0 %3465
  %vm3467 = vcmask 521216
  %v3468 = vsel %vm3467, %v3461, -inf
  %3469 = vmax.xlane.f32.xlu0 %v3468
  %v3470 = vpop.xlane.xlu0 %3469
  %v3471 = vsub.f32 %v3458, %v3466
  %v3472 = vsub.f32 %v3461, %v3470
  %v3473 = vmul.f32 %v3471, 1.442695
  %v3474 = vpow.pop %v3473
  %v3475 = vmul.f32 %v3472, 1.442695
  %v3476 = vpow.pop %v3475
  %v3477 = vsel %vm216, %v3474, 0.0
  %3478 = vadd.xlane.f32.xlu0 %v3477
  %v3479 = vpop.xlane.xlu0 %3478
  %v3480 = vsel %vm3467, %v3476, 0.0
  %3481 = vadd.xlane.f32.xlu0 %v3480
  %v3482 = vpop.xlane.xlu0 %3481
  %v3483 = vlog2.pop %v3479
  %v3484 = vmul.f32 %v3483, 0.6931472
  %v3485 = vlog2.pop %v3482
  %v3486 = vmul.f32 %v3485, 0.6931472
  %v3487 = vsub.f32 %v3471, %v3484
  %v3488 = vsub.f32 %v3472, %v3486
  %v3489 = vld [vmem:[%s3] sm:$0xff]
  %v3490 = vld [vmem:[%s3 + $0x8] sm:$0x3f]
  %v3491 = vmul.f32 %v3487, %v3489
  %v3492 = vmul.f32 %v3488, %v3490
  %v3493 = vsel %vm216, %v3491, 0.0
  %v3494 = vsel %vm3467, %v3492, 0.0
  %v3495 = vadd.f32 %v3493, %v3494
  %3496 = vadd.xlane.f32.xlu0 %v3495
  %v3497 = vpop.xlane.xlu0 %3496
  %v3498 = vrot.slane %v3497, 4
  %v3499 = vadd.f32 %v3497, %v3498
  %v3500 = vrot.slane %v3499, 2
  %v3501 = vadd.f32 %v3499, %v3500
  %v3502 = vrot.slane %v3501, 1
  %v3503 = vadd.f32 %v3501, %v3502
  %s3504 = vtos %v3503
  %v3505 = vsel %vm216, %v3489, 0.0
  %v3506 = vsel %vm3467, %v3490, 0.0
  %v3507 = vadd.f32 %v3505, %v3506
  %3508 = vadd.xlane.f32.xlu0 %v3507
  %v3509 = vpop.xlane.xlu0 %3508
  %v3510 = vrot.slane %v3509, 4
  %v3511 = vadd.f32 %v3509, %v3510
  %v3512 = vrot.slane %v3511, 2
  %v3513 = vadd.f32 %v3511, %v3512
  %v3514 = vrot.slane %v3513, 1
  %v3515 = vadd.f32 %v3513, %v3514
  %s3516 = vtos %v3515
  %s3517 = ssub.f32 0.0, %s3504
  %s3518 = smax.f32 %s3516, 1.0
  %v3519 = vstv %s3518
  %v3520 = vrcp.pop %v3519
  %s3521 = vtos %v3520
  %s3522 = smul.f32 %s3517, %s3521
  %v3523 = vstv %s2323
  %v3524 = vstv %s3522
  %v3525 = vstv %s2357
  %3527 = vrot.lane.b32.xlu0 %v2306, 1
  %v3528 = vpop.permute.xlu0 %3527
  %vm3530 = vcmask 7168
  %v3531 = vsel %vm3530, %v2288, %v3528
  %vm3532 = vcmask 15360
  %v3533 = vsel %vm3532, %v3531, %v3523
  %vm3534 = vcmask 23552
  %v3535 = vsel %vm3534, %v3533, %v3524
  %vm3536 = vcmask 31744
  %v3537 = vsel %vm3536, %v3535, %v3525
  %vm3538 = vcmask 39936
  %v3539 = vsel %vm3538, %v3537, 0.0
  %v3540 = vsel %vm3372, %v3539, 0.0
  %3541 = vst [vmem:[%s24] sm:$0xff] %v3540
  // Predicated region
  $region98: #{vae_forward.1} parent=0 // pred_check
    _
  $region99: #{vae_forward.1} parent=0 // pred_check_branch
    %3543 = sbr.rel (0) target = $region101
  $region100: #{vae_forward.1} parent=0 // pred_region
    _
  $region101: #{vae_forward.1} parent=0 // pred_fallthru
    _
  // Predicated region
  $region102: #{vae_forward.1} parent=0 // pred_check
    _
  $region103: #{vae_forward.1} parent=0 // pred_check_branch
    %3545 = sbr.rel (0) target = $region105
  $region104: #{vae_forward.1} parent=0 // pred_region
    _
  $region105: #{vae_forward.1} parent=0 // pred_fallthru
    _

</llo_original>
